<compile_context>
chip_gen: v7x
topology: tpu7x:2x2x1
jax: 0.10.0
libtpu: 0.0.40
codegen_flags: <defaults>
</compile_context>

<pallas_src>
import math
import functools

import jax
import jax.numpy as jnp
from jax import lax
from jax.experimental import pallas as pl
from jax.experimental.pallas import tpu as pltpu


_VMEM_CEILING = 48 * 1024 * 1024  # conservative across v5e/v6e (128 MiB) and v7x (64 MiB)


def _make_sa_kernel(hid_dim: int, n_heads: int, head_size: int, eps: float = 1e-5):
    """Returns the Pallas kernel body with static head config baked in."""
    scale = 1.0 / math.sqrt(head_size)

    def sa_kernel(x_ref,                 # (Bt, L, H)
                  wqkvT_ref, bqkv_ref,   # (H, 3H) compute dtype, (1, 3H) f32
                  wmT_ref, bm_ref,       # (H, H)  compute dtype, (1, H)  f32
                  gamma_ref, beta_ref,   # (1, H) f32
                  out_ref,               # (Bt, L, H)
                  qkv_scr,               # VMEM (Bt*L, 3H) compute dtype
                  acc_scr):              # VMEM (Bt*L, H)  f32 (merge accumulator)
        Bt, L, H = x_ref.shape
        N = Bt * L
        cdtype = wqkvT_ref.dtype          # compute / MXU-operand dtype

        xf = x_ref[...].reshape(N, H)

        # Fused Q|K|V projection: one wide MXU matmul, operands in compute dtype,
        # f32 accumulation.  Restage the result in compute dtype so downstream
        # attention matmuls feed the (bf16-capable) MXU and the f32 qkv value's
        # live range ends here.
        qkv = jnp.dot(xf.astype(cdtype), wqkvT_ref[...],
                      preferred_element_type=jnp.float32) + bqkv_ref[...]   # (N, 3H)
        qkv_scr[...] = qkv.astype(cdtype)

        # TODO(synk): attention mask (masked_fill -1e9) not plumbed; SA default is mask=None.
        # TODO(synk): for long sequences add a query-tile grid axis with a flash-style
        # online-softmax K/V inner loop (bounds VMEM on v7x's 64 MiB, feeds both TCs).
        for h in range(n_heads):          # static unroll over heads (n_heads small, static)
            lo = h * head_size
            qh = qkv_scr[:, lo:lo + head_size].reshape(Bt, L, head_size)
            kh = qkv_scr[:, hid_dim + lo:hid_dim + lo + head_size].reshape(Bt, L, head_size)
            vh = qkv_scr[:, 2 * hid_dim + lo:2 * hid_dim + lo + head_size].reshape(Bt, L, head_size)

            # Q K^T with the transpose folded into the contraction; f32 accumulation.
            s = jnp.einsum("bqd,bkd->bqk", qh, kh,
                           preferred_element_type=jnp.float32) * scale       # (Bt, L, L)
            s = s - jnp.max(s, axis=-1, keepdims=True)
            p = jnp.exp(s)                                                   # single exp pass
            p = p * pl.reciprocal(jnp.sum(p, axis=-1, keepdims=True), approx=True)

            pv = jnp.einsum("bqk,bkd->bqd", p.astype(cdtype), vh,
                            preferred_element_type=jnp.float32)              # (Bt, L, hd)

            # Merge projection folded per head: acc += PV_h @ WmT[h rows].
            # Full-lane-width (N, H) accumulate -> no masked partial-lane stores.
            contrib = jnp.dot(pv.reshape(N, head_size).astype(cdtype),
                              wmT_ref[lo:lo + head_size, :],
                              preferred_element_type=jnp.float32)            # (N, H)
            if h == 0:
                acc_scr[...] = contrib
            else:
                acc_scr[...] += contrib

        # Residual + LayerNorm over the hidden dim (f32).
        y = xf.astype(jnp.float32) + acc_scr[...] + bm_ref[...]
        mu = jnp.mean(y, axis=-1, keepdims=True)
        var = jnp.mean((y - mu) * (y - mu), axis=-1, keepdims=True)
        y_norm = (y - mu) * lax.rsqrt(var + eps)
        out = y_norm * gamma_ref[...] + beta_ref[...]
        out_ref[...] = out.reshape(Bt, L, H).astype(out_ref.dtype)

    return sa_kernel


def prepare_sa_params(params, compute_dtype=None):
    """One-time host-side weight packing (kept OUT of the jitted forward path).

    compute_dtype: dtype of the packed matmul weights (MXU operand dtype).
    Use jnp.bfloat16 in production for the native bf16 MXU path; biases and
    LayerNorm params stay f32.
    """
    H = params["wq"].shape[0]
    cdtype = compute_dtype if compute_dtype is not None else params["wq"].dtype
    wqkvT = jnp.concatenate(
        [params["wq"].T, params["wk"].T, params["wv"].T], axis=1).astype(cdtype)   # (H, 3H)
    bqkv = jnp.concatenate(
        [params["bq"], params["bk"], params["bv"]]).reshape(1, 3 * H).astype(jnp.float32)
    return {
        "wqkvT": wqkvT,
        "bqkv": bqkv,
        "wmT": params["wm"].T.astype(cdtype),
        "bm": params["bm"].reshape(1, H).astype(jnp.float32),
        "gamma": params["gamma"].reshape(1, H).astype(jnp.float32),
        "beta": params["beta"].reshape(1, H).astype(jnp.float32),
    }


def _vmem_estimate_bytes(bt, L, H, x_itemsize, w_itemsize):
    """Rough VMEM footprint for one grid step (used to pick tiles / vmem limit)."""
    N = bt * L
    weights = (3 * H * H + H * H) * w_itemsize + 6 * H * 4          # resident weights + bias/LN vectors
    act_io = 2 * 2 * bt * L * H * x_itemsize                        # double-buffered x + out blocks
    scratch = N * 3 * H * w_itemsize + N * H * 4                    # qkv restage + merge accumulator
    live = N * 3 * H * 4 + 2 * bt * L * L * 4 + 2 * N * H * 4       # f32 qkv / scores / LN temporaries
    return weights + act_io + scratch + live


def _pick_batch_tile(B, L, H, x_itemsize, w_itemsize, budget_bytes):
    for bt in range(B, 0, -1):
        if B % bt == 0 and _vmem_estimate_bytes(bt, L, H, x_itemsize, w_itemsize) <= budget_bytes:
            return bt
    return 1


@functools.partial(jax.jit, static_argnames=("n_heads", "single_buffer_weights"))
def sa_forward(x, packed, n_heads, single_buffer_weights=True):
    """x: (B, L, H).  packed: output of prepare_sa_params."""
    B, L, H = x.shape
    head_size = H // n_heads
    w_itemsize = jnp.dtype(packed["wqkvT"].dtype).itemsize
    x_itemsize = jnp.dtype(x.dtype).itemsize

    # Fold as many batch rows per grid step as the VMEM budget allows (amortizes
    # the ~0.35us/step pipeline overhead and feeds the MXU more rows at small L).
    Bt = _pick_batch_tile(B, L, H, x_itemsize, w_itemsize, _VMEM_CEILING // 2)
    est = _vmem_estimate_bytes(Bt, L, H, x_itemsize, w_itemsize)
    vmem_limit = int(min(_VMEM_CEILING, max(16 * 1024 * 1024, 2 * est)))

    kernel = _make_sa_kernel(H, n_heads, head_size)

    def wspec(shape):
        # Constant index_map -> weight block stays resident across grid steps;
        # Buffered(1) drops the pointless second buffer (VMEM headroom).
        if single_buffer_weights:
            return pl.BlockSpec(shape, lambda b: (0, 0), pipeline_mode=pl.Buffered(1))
        return pl.BlockSpec(shape, lambda b: (0, 0))

    return pl.pallas_call(
        kernel,
        out_shape=jax.ShapeDtypeStruct((B, L, H), x.dtype),
        grid_spec=pltpu.PrefetchScalarGridSpec(
            num_scalar_prefetch=0,
            grid=(B // Bt,),
            in_specs=[
                pl.BlockSpec((Bt, L, H), lambda b: (b, 0, 0)),  # x: one batch tile per step
                wspec((H, 3 * H)),   # packed Wqkv^T
                wspec((1, 3 * H)),   # packed b_qkv
                wspec((H, H)),       # Wmerge^T
                wspec((1, H)),       # b_merge
                wspec((1, H)),       # gamma
                wspec((1, H)),       # beta
            ],
            out_specs=pl.BlockSpec((Bt, L, H), lambda b: (b, 0, 0)),
            scratch_shapes=[
                pltpu.VMEM((Bt * L, 3 * H), packed["wqkvT"].dtype),  # qkv restage (compute dtype)
                pltpu.VMEM((Bt * L, H), jnp.float32),                # merge accumulator
            ],
        ),
        compiler_params=pltpu.CompilerParams(
            dimension_semantics=("parallel",),
            vmem_limit_bytes=vmem_limit),
    )(x, packed["wqkvT"], packed["bqkv"], packed["wmT"], packed["bm"],
      packed["gamma"], packed["beta"])


def _reference_sa(x, params, n_heads):
    """Pure-JAX reference mirroring the PyTorch forward (eval mode, mask=None)."""
    B, L, H = x.shape
    hd = H // n_heads

    def lin(a, w, b):
        return a @ w.T + b

    q = lin(x, params["wq"], params["bq"]).reshape(B, L, n_heads, hd).transpose(0, 2, 1, 3)
    k = lin(x, params["wk"], params["bk"]).reshape(B, L, n_heads, hd).transpose(0, 2, 1, 3)
    v = lin(x, params["wv"], params["bv"]).reshape(B, L, n_heads, hd).transpose(0, 2, 1, 3)
    scores = jnp.einsum("bhqd,bhkd->bhqk", q, k) / math.sqrt(hd)
    att = jax.nn.softmax(scores, axis=-1)
    out = jnp.einsum("bhqk,bhkd->bhqd", att, v).transpose(0, 2, 1, 3).reshape(B, L, H)
    out = lin(out, params["wm"], params["bm"])
    y = x + out
    mu = jnp.mean(y, axis=-1, keepdims=True)
    var = jnp.mean((y - mu) ** 2, axis=-1, keepdims=True)
    return (y - mu) / jnp.sqrt(var + 1e-5) * params["gamma"] + params["beta"]


if __name__ == "__main__":
    B, L, H, NH = 2, 8, 32, 4
    key = jax.random.PRNGKey(0)
    keys = jax.random.split(key, 10)

    init_scale = 1.0 / math.sqrt(H)
    params = {
        "wq": jax.random.uniform(keys[0], (H, H), jnp.float32, -init_scale, init_scale),
        "bq": jax.random.uniform(keys[1], (H,), jnp.float32, -init_scale, init_scale),
        "wk": jax.random.uniform(keys[2], (H, H), jnp.float32, -init_scale, init_scale),
        "bk": jax.random.uniform(keys[3], (H,), jnp.float32, -init_scale, init_scale),
        "wv": jax.random.uniform(keys[4], (H, H), jnp.float32, -init_scale, init_scale),
        "bv": jax.random.uniform(keys[5], (H,), jnp.float32, -init_scale, init_scale),
        "wm": jax.random.uniform(keys[6], (H, H), jnp.float32, -init_scale, init_scale),
        "bm": jax.random.uniform(keys[7], (H,), jnp.float32, -init_scale, init_scale),
        "gamma": jnp.ones((H,), jnp.float32),
        "beta": jnp.zeros((H,), jnp.float32),
    }
    x = jax.random.normal(keys[8], (B, L, H), jnp.float32)

    # Host-side, one-time weight packing.  f32 here to match the f32 reference;
    # pass compute_dtype=jnp.bfloat16 for the native bf16 MXU path in production.
    packed = jax.tree_util.tree_map(jax.block_until_ready, prepare_sa_params(params))

    try:
        out = jax.block_until_ready(sa_forward(x, packed, n_heads=NH))
    except Exception:
        # Fallback: identical kernel without the single-buffered-weights pipeline hint.
        out = jax.block_until_ready(
            sa_forward(x, packed, n_heads=NH, single_buffer_weights=False))

    ref = _reference_sa(x, params, NH)
    assert out.shape == (B, L, H)
    # Tolerance covers the approx (EUP) reciprocal in the softmax denominator.
    assert jnp.allclose(out, ref, atol=2e-3, rtol=2e-3), "mismatch vs reference"
    print("KERNEL_OK")
</pallas_src>

<mosaic_0001>
module attributes {stable_mosaic.version = 11 : i64} {
  func.func @sa_kernel(%arg0: i32, %arg1: memref<2x8x32xf32, #tpu.memory_space<vmem>>, %arg2: memref<32x96xf32, #tpu.memory_space<vmem>>, %arg3: memref<1x96xf32, #tpu.memory_space<vmem>>, %arg4: memref<32x32xf32, #tpu.memory_space<vmem>>, %arg5: memref<1x32xf32, #tpu.memory_space<vmem>>, %arg6: memref<1x32xf32, #tpu.memory_space<vmem>>, %arg7: memref<1x32xf32, #tpu.memory_space<vmem>>, %arg8: memref<2x8x32xf32, #tpu.memory_space<vmem>>, %arg9: memref<16x96xf32, #tpu.memory_space<vmem>>, %arg10: memref<16x32xf32, #tpu.memory_space<vmem>>) attributes {dimension_semantics = [#tpu.dimension_semantics<parallel>], iteration_bounds = array<i64: 1>, scalar_prefetch = 0 : i64, scratch_operands = 2 : i64, tpu.core_type = #tpu.core_type<tc>, window_params = [{transform_indices = @transform_0, window_bounds = array<i64: 2, 8, 32>}, {pipeline_mode = #tpu.pipeline_mode<synchronous>, transform_indices = @transform_1, window_bounds = array<i64: 32, 96>}, {pipeline_mode = #tpu.pipeline_mode<synchronous>, transform_indices = @transform_2, window_bounds = array<i64: 1, 96>}, {pipeline_mode = #tpu.pipeline_mode<synchronous>, transform_indices = @transform_3, window_bounds = array<i64: 32, 32>}, {pipeline_mode = #tpu.pipeline_mode<synchronous>, transform_indices = @transform_4, window_bounds = array<i64: 1, 32>}, {pipeline_mode = #tpu.pipeline_mode<synchronous>, transform_indices = @transform_5, window_bounds = array<i64: 1, 32>}, {pipeline_mode = #tpu.pipeline_mode<synchronous>, transform_indices = @transform_6, window_bounds = array<i64: 1, 32>}, {transform_indices = @transform_7, window_bounds = array<i64: 2, 8, 32>}]} {
    %c0 = arith.constant 0 : index
    %c0_0 = arith.constant 0 : index
    %c0_1 = arith.constant 0 : index
    %0 = vector.load %arg1[%c0, %c0_0, %c0_1] : memref<2x8x32xf32, #tpu.memory_space<vmem>>, vector<2x8x32xf32>
    %1 = vector.shape_cast %0 : vector<2x8x32xf32> to vector<16x32xf32>
    %c0_2 = arith.constant 0 : index
    %c0_3 = arith.constant 0 : index
    %2 = vector.load %arg2[%c0_2, %c0_3] : memref<32x96xf32, #tpu.memory_space<vmem>>, vector<32x96xf32>
    %cst = arith.constant dense<0.000000e+00> : vector<16x96xf32>
    %3 = tpu.matmul %1, %2, %cst {dimension_numbers = #tpu.dot_dimension_numbers<[1], [0], [0], [1], [0, 0, 1, 1], [], []>} : vector<16x32xf32>, vector<32x96xf32>, vector<16x96xf32> -> vector<16x96xf32>
    %c0_4 = arith.constant 0 : index
    %c0_5 = arith.constant 0 : index
    %4 = vector.load %arg3[%c0_4, %c0_5] : memref<1x96xf32, #tpu.memory_space<vmem>>, vector<1x96xf32>
    %5 = vector.broadcast %4 : vector<1x96xf32> to vector<16x96xf32>
    %6 = arith.addf %3, %5 : vector<16x96xf32>
    %c0_6 = arith.constant 0 : index
    %c0_7 = arith.constant 0 : index
    %7 = vector.load %arg9[%c0_6, %c0_7] : memref<16x96xf32, #tpu.memory_space<vmem>>, vector<16x96xf32>
    tpu.vector_store %arg9[%c0_6, %c0_7], %6 {strides = array<i32>} : memref<16x96xf32, #tpu.memory_space<vmem>>, vector<16x96xf32>,
    %c0_8 = arith.constant 0 : index
    %c0_9 = arith.constant 0 : index
    %8 = vector.load %arg9[%c0_8, %c0_9] : memref<16x96xf32, #tpu.memory_space<vmem>>, vector<16x8xf32>
    %9 = vector.shape_cast %8 : vector<16x8xf32> to vector<2x8x8xf32>
    %c0_10 = arith.constant 0 : index
    %c32 = arith.constant 32 : index
    %10 = vector.load %arg9[%c0_10, %c32] : memref<16x96xf32, #tpu.memory_space<vmem>>, vector<16x8xf32>
    %11 = vector.shape_cast %10 : vector<16x8xf32> to vector<2x8x8xf32>
    %c0_11 = arith.constant 0 : index
    %c64 = arith.constant 64 : index
    %12 = vector.load %arg9[%c0_11, %c64] : memref<16x96xf32, #tpu.memory_space<vmem>>, vector<16x8xf32>
    %13 = vector.shape_cast %12 : vector<16x8xf32> to vector<2x8x8xf32>
    "tpu.trace_start"() <{level = 10 : i32, message = "bqd,bkd->bqk"}> : () -> ()
    %cst_12 = arith.constant dense<0.000000e+00> : vector<2x8x8xf32>
    %14 = tpu.matmul %9, %11, %cst_12 {dimension_numbers = #tpu.dot_dimension_numbers<[2], [2], [1], [1], [0, 0, 0, 1, 1, 1], [0], [0]>} : vector<2x8x8xf32>, vector<2x8x8xf32>, vector<2x8x8xf32> -> vector<2x8x8xf32>
    "tpu.trace_stop"() : () -> ()
    %cst_13 = arith.constant 0.353553385 : f32
    %15 = vector.broadcast %cst_13 : f32 to vector<2x8x8xf32>
    %16 = arith.mulf %14, %15 : vector<2x8x8xf32>
    %cst_14 = arith.constant dense<0xFF800000> : vector<2x8xf32>
    %17 = vector.multi_reduction <maximumf>, %16, %cst_14 [2] : vector<2x8x8xf32> to vector<2x8xf32>
    %18 = vector.shape_cast %17 : vector<2x8xf32> to vector<2x8x1xf32>
    %19 = vector.broadcast %18 : vector<2x8x1xf32> to vector<2x8x8xf32>
    %20 = arith.subf %16, %19 : vector<2x8x8xf32>
    %21 = math.exp %20 : vector<2x8x8xf32>
    %cst_15 = arith.constant dense<0.000000e+00> : vector<2x8xf32>
    %22 = vector.multi_reduction <add>, %21, %cst_15 [2] : vector<2x8x8xf32> to vector<2x8xf32>
    %23 = vector.shape_cast %22 : vector<2x8xf32> to vector<2x8x1xf32>
    %24 = tpu.reciprocal %23 {approx = true} : vector<2x8x1xf32> -> vector<2x8x1xf32>
    %25 = vector.broadcast %24 : vector<2x8x1xf32> to vector<2x8x8xf32>
    %26 = arith.mulf %21, %25 : vector<2x8x8xf32>
    "tpu.trace_start"() <{level = 10 : i32, message = "bqk,bkd->bqd"}> : () -> ()
    %cst_16 = arith.constant dense<0.000000e+00> : vector<2x8x8xf32>
    %27 = tpu.matmul %26, %13, %cst_16 {dimension_numbers = #tpu.dot_dimension_numbers<[2], [1], [1], [2], [0, 0, 0, 1, 1, 2], [0], [0]>} : vector<2x8x8xf32>, vector<2x8x8xf32>, vector<2x8x8xf32> -> vector<2x8x8xf32>
    "tpu.trace_stop"() : () -> ()
    %28 = vector.shape_cast %27 : vector<2x8x8xf32> to vector<16x8xf32>
    %c0_17 = arith.constant 0 : index
    %c0_18 = arith.constant 0 : index
    %29 = vector.load %arg4[%c0_17, %c0_18] : memref<32x32xf32, #tpu.memory_space<vmem>>, vector<8x32xf32>
    %cst_19 = arith.constant dense<0.000000e+00> : vector<16x32xf32>
    %30 = tpu.matmul %28, %29, %cst_19 {dimension_numbers = #tpu.dot_dimension_numbers<[1], [0], [0], [1], [0, 0, 1, 1], [], []>} : vector<16x8xf32>, vector<8x32xf32>, vector<16x32xf32> -> vector<16x32xf32>
    %c0_20 = arith.constant 0 : index
    %c0_21 = arith.constant 0 : index
    %31 = vector.load %arg10[%c0_20, %c0_21] : memref<16x32xf32, #tpu.memory_space<vmem>>, vector<16x32xf32>
    tpu.vector_store %arg10[%c0_20, %c0_21], %30 {strides = array<i32>} : memref<16x32xf32, #tpu.memory_space<vmem>>, vector<16x32xf32>,
    %c0_22 = arith.constant 0 : index
    %c8 = arith.constant 8 : index
    %32 = vector.load %arg9[%c0_22, %c8] : memref<16x96xf32, #tpu.memory_space<vmem>>, vector<16x8xf32>
    %33 = vector.shape_cast %32 : vector<16x8xf32> to vector<2x8x8xf32>
    %c0_23 = arith.constant 0 : index
    %c40 = arith.constant 40 : index
    %34 = vector.load %arg9[%c0_23, %c40] : memref<16x96xf32, #tpu.memory_space<vmem>>, vector<16x8xf32>
    %35 = vector.shape_cast %34 : vector<16x8xf32> to vector<2x8x8xf32>
    %c0_24 = arith.constant 0 : index
    %c72 = arith.constant 72 : index
    %36 = vector.load %arg9[%c0_24, %c72] : memref<16x96xf32, #tpu.memory_space<vmem>>, vector<16x8xf32>
    %37 = vector.shape_cast %36 : vector<16x8xf32> to vector<2x8x8xf32>
    "tpu.trace_start"() <{level = 10 : i32, message = "bqd,bkd->bqk"}> : () -> ()
    %cst_25 = arith.constant dense<0.000000e+00> : vector<2x8x8xf32>
    %38 = tpu.matmul %33, %35, %cst_25 {dimension_numbers = #tpu.dot_dimension_numbers<[2], [2], [1], [1], [0, 0, 0, 1, 1, 1], [0], [0]>} : vector<2x8x8xf32>, vector<2x8x8xf32>, vector<2x8x8xf32> -> vector<2x8x8xf32>
    "tpu.trace_stop"() : () -> ()
    %cst_26 = arith.constant 0.353553385 : f32
    %39 = vector.broadcast %cst_26 : f32 to vector<2x8x8xf32>
    %40 = arith.mulf %38, %39 : vector<2x8x8xf32>
    %cst_27 = arith.constant dense<0xFF800000> : vector<2x8xf32>
    %41 = vector.multi_reduction <maximumf>, %40, %cst_27 [2] : vector<2x8x8xf32> to vector<2x8xf32>
    %42 = vector.shape_cast %41 : vector<2x8xf32> to vector<2x8x1xf32>
    %43 = vector.broadcast %42 : vector<2x8x1xf32> to vector<2x8x8xf32>
    %44 = arith.subf %40, %43 : vector<2x8x8xf32>
    %45 = math.exp %44 : vector<2x8x8xf32>
    %cst_28 = arith.constant dense<0.000000e+00> : vector<2x8xf32>
    %46 = vector.multi_reduction <add>, %45, %cst_28 [2] : vector<2x8x8xf32> to vector<2x8xf32>
    %47 = vector.shape_cast %46 : vector<2x8xf32> to vector<2x8x1xf32>
    %48 = tpu.reciprocal %47 {approx = true} : vector<2x8x1xf32> -> vector<2x8x1xf32>
    %49 = vector.broadcast %48 : vector<2x8x1xf32> to vector<2x8x8xf32>
    %50 = arith.mulf %45, %49 : vector<2x8x8xf32>
    "tpu.trace_start"() <{level = 10 : i32, message = "bqk,bkd->bqd"}> : () -> ()
    %cst_29 = arith.constant dense<0.000000e+00> : vector<2x8x8xf32>
    %51 = tpu.matmul %50, %37, %cst_29 {dimension_numbers = #tpu.dot_dimension_numbers<[2], [1], [1], [2], [0, 0, 0, 1, 1, 2], [0], [0]>} : vector<2x8x8xf32>, vector<2x8x8xf32>, vector<2x8x8xf32> -> vector<2x8x8xf32>
    "tpu.trace_stop"() : () -> ()
    %52 = vector.shape_cast %51 : vector<2x8x8xf32> to vector<16x8xf32>
    %c8_30 = arith.constant 8 : index
    %c0_31 = arith.constant 0 : index
    %53 = vector.load %arg4[%c8_30, %c0_31] : memref<32x32xf32, #tpu.memory_space<vmem>>, vector<8x32xf32>
    %cst_32 = arith.constant dense<0.000000e+00> : vector<16x32xf32>
    %54 = tpu.matmul %52, %53, %cst_32 {dimension_numbers = #tpu.dot_dimension_numbers<[1], [0], [0], [1], [0, 0, 1, 1], [], []>} : vector<16x8xf32>, vector<8x32xf32>, vector<16x32xf32> -> vector<16x32xf32>
    %c0_33 = arith.constant 0 : index
    %c0_34 = arith.constant 0 : index
    %55 = vector.load %arg10[%c0_33, %c0_34] : memref<16x32xf32, #tpu.memory_space<vmem>>, vector<16x32xf32>
    %56 = arith.addf %55, %54 : vector<16x32xf32>
    %c0_35 = arith.constant 0 : index
    %c0_36 = arith.constant 0 : index
    %57 = vector.load %arg10[%c0_35, %c0_36] : memref<16x32xf32, #tpu.memory_space<vmem>>, vector<16x32xf32>
    tpu.vector_store %arg10[%c0_35, %c0_36], %56 {strides = array<i32>} : memref<16x32xf32, #tpu.memory_space<vmem>>, vector<16x32xf32>,
    %c0_37 = arith.constant 0 : index
    %c16 = arith.constant 16 : index
    %58 = vector.load %arg9[%c0_37, %c16] : memref<16x96xf32, #tpu.memory_space<vmem>>, vector<16x8xf32>
    %59 = vector.shape_cast %58 : vector<16x8xf32> to vector<2x8x8xf32>
    %c0_38 = arith.constant 0 : index
    %c48 = arith.constant 48 : index
    %60 = vector.load %arg9[%c0_38, %c48] : memref<16x96xf32, #tpu.memory_space<vmem>>, vector<16x8xf32>
    %61 = vector.shape_cast %60 : vector<16x8xf32> to vector<2x8x8xf32>
    %c0_39 = arith.constant 0 : index
    %c80 = arith.constant 80 : index
    %62 = vector.load %arg9[%c0_39, %c80] : memref<16x96xf32, #tpu.memory_space<vmem>>, vector<16x8xf32>
    %63 = vector.shape_cast %62 : vector<16x8xf32> to vector<2x8x8xf32>
    "tpu.trace_start"() <{level = 10 : i32, message = "bqd,bkd->bqk"}> : () -> ()
    %cst_40 = arith.constant dense<0.000000e+00> : vector<2x8x8xf32>
    %64 = tpu.matmul %59, %61, %cst_40 {dimension_numbers = #tpu.dot_dimension_numbers<[2], [2], [1], [1], [0, 0, 0, 1, 1, 1], [0], [0]>} : vector<2x8x8xf32>, vector<2x8x8xf32>, vector<2x8x8xf32> -> vector<2x8x8xf32>
    "tpu.trace_stop"() : () -> ()
    %cst_41 = arith.constant 0.353553385 : f32
    %65 = vector.broadcast %cst_41 : f32 to vector<2x8x8xf32>
    %66 = arith.mulf %64, %65 : vector<2x8x8xf32>
    %cst_42 = arith.constant dense<0xFF800000> : vector<2x8xf32>
    %67 = vector.multi_reduction <maximumf>, %66, %cst_42 [2] : vector<2x8x8xf32> to vector<2x8xf32>
    %68 = vector.shape_cast %67 : vector<2x8xf32> to vector<2x8x1xf32>
    %69 = vector.broadcast %68 : vector<2x8x1xf32> to vector<2x8x8xf32>
    %70 = arith.subf %66, %69 : vector<2x8x8xf32>
    %71 = math.exp %70 : vector<2x8x8xf32>
    %cst_43 = arith.constant dense<0.000000e+00> : vector<2x8xf32>
    %72 = vector.multi_reduction <add>, %71, %cst_43 [2] : vector<2x8x8xf32> to vector<2x8xf32>
    %73 = vector.shape_cast %72 : vector<2x8xf32> to vector<2x8x1xf32>
    %74 = tpu.reciprocal %73 {approx = true} : vector<2x8x1xf32> -> vector<2x8x1xf32>
    %75 = vector.broadcast %74 : vector<2x8x1xf32> to vector<2x8x8xf32>
    %76 = arith.mulf %71, %75 : vector<2x8x8xf32>
    "tpu.trace_start"() <{level = 10 : i32, message = "bqk,bkd->bqd"}> : () -> ()
    %cst_44 = arith.constant dense<0.000000e+00> : vector<2x8x8xf32>
    %77 = tpu.matmul %76, %63, %cst_44 {dimension_numbers = #tpu.dot_dimension_numbers<[2], [1], [1], [2], [0, 0, 0, 1, 1, 2], [0], [0]>} : vector<2x8x8xf32>, vector<2x8x8xf32>, vector<2x8x8xf32> -> vector<2x8x8xf32>
    "tpu.trace_stop"() : () -> ()
    %78 = vector.shape_cast %77 : vector<2x8x8xf32> to vector<16x8xf32>
    %c16_45 = arith.constant 16 : index
    %c0_46 = arith.constant 0 : index
    %79 = vector.load %arg4[%c16_45, %c0_46] : memref<32x32xf32, #tpu.memory_space<vmem>>, vector<8x32xf32>
    %cst_47 = arith.constant dense<0.000000e+00> : vector<16x32xf32>
    %80 = tpu.matmul %78, %79, %cst_47 {dimension_numbers = #tpu.dot_dimension_numbers<[1], [0], [0], [1], [0, 0, 1, 1], [], []>} : vector<16x8xf32>, vector<8x32xf32>, vector<16x32xf32> -> vector<16x32xf32>
    %c0_48 = arith.constant 0 : index
    %c0_49 = arith.constant 0 : index
    %81 = vector.load %arg10[%c0_48, %c0_49] : memref<16x32xf32, #tpu.memory_space<vmem>>, vector<16x32xf32>
    %82 = arith.addf %81, %80 : vector<16x32xf32>
    %c0_50 = arith.constant 0 : index
    %c0_51 = arith.constant 0 : index
    %83 = vector.load %arg10[%c0_50, %c0_51] : memref<16x32xf32, #tpu.memory_space<vmem>>, vector<16x32xf32>
    tpu.vector_store %arg10[%c0_50, %c0_51], %82 {strides = array<i32>} : memref<16x32xf32, #tpu.memory_space<vmem>>, vector<16x32xf32>,
    %c0_52 = arith.constant 0 : index
    %c24 = arith.constant 24 : index
    %84 = vector.load %arg9[%c0_52, %c24] : memref<16x96xf32, #tpu.memory_space<vmem>>, vector<16x8xf32>
    %85 = vector.shape_cast %84 : vector<16x8xf32> to vector<2x8x8xf32>
    %c0_53 = arith.constant 0 : index
    %c56 = arith.constant 56 : index
    %86 = vector.load %arg9[%c0_53, %c56] : memref<16x96xf32, #tpu.memory_space<vmem>>, vector<16x8xf32>
    %87 = vector.shape_cast %86 : vector<16x8xf32> to vector<2x8x8xf32>
    %c0_54 = arith.constant 0 : index
    %c88 = arith.constant 88 : index
    %88 = vector.load %arg9[%c0_54, %c88] : memref<16x96xf32, #tpu.memory_space<vmem>>, vector<16x8xf32>
    %89 = vector.shape_cast %88 : vector<16x8xf32> to vector<2x8x8xf32>
    "tpu.trace_start"() <{level = 10 : i32, message = "bqd,bkd->bqk"}> : () -> ()
    %cst_55 = arith.constant dense<0.000000e+00> : vector<2x8x8xf32>
    %90 = tpu.matmul %85, %87, %cst_55 {dimension_numbers = #tpu.dot_dimension_numbers<[2], [2], [1], [1], [0, 0, 0, 1, 1, 1], [0], [0]>} : vector<2x8x8xf32>, vector<2x8x8xf32>, vector<2x8x8xf32> -> vector<2x8x8xf32>
    "tpu.trace_stop"() : () -> ()
    %cst_56 = arith.constant 0.353553385 : f32
    %91 = vector.broadcast %cst_56 : f32 to vector<2x8x8xf32>
    %92 = arith.mulf %90, %91 : vector<2x8x8xf32>
    %cst_57 = arith.constant dense<0xFF800000> : vector<2x8xf32>
    %93 = vector.multi_reduction <maximumf>, %92, %cst_57 [2] : vector<2x8x8xf32> to vector<2x8xf32>
    %94 = vector.shape_cast %93 : vector<2x8xf32> to vector<2x8x1xf32>
    %95 = vector.broadcast %94 : vector<2x8x1xf32> to vector<2x8x8xf32>
    %96 = arith.subf %92, %95 : vector<2x8x8xf32>
    %97 = math.exp %96 : vector<2x8x8xf32>
    %cst_58 = arith.constant dense<0.000000e+00> : vector<2x8xf32>
    %98 = vector.multi_reduction <add>, %97, %cst_58 [2] : vector<2x8x8xf32> to vector<2x8xf32>
    %99 = vector.shape_cast %98 : vector<2x8xf32> to vector<2x8x1xf32>
    %100 = tpu.reciprocal %99 {approx = true} : vector<2x8x1xf32> -> vector<2x8x1xf32>
    %101 = vector.broadcast %100 : vector<2x8x1xf32> to vector<2x8x8xf32>
    %102 = arith.mulf %97, %101 : vector<2x8x8xf32>
    "tpu.trace_start"() <{level = 10 : i32, message = "bqk,bkd->bqd"}> : () -> ()
    %cst_59 = arith.constant dense<0.000000e+00> : vector<2x8x8xf32>
    %103 = tpu.matmul %102, %89, %cst_59 {dimension_numbers = #tpu.dot_dimension_numbers<[2], [1], [1], [2], [0, 0, 0, 1, 1, 2], [0], [0]>} : vector<2x8x8xf32>, vector<2x8x8xf32>, vector<2x8x8xf32> -> vector<2x8x8xf32>
    "tpu.trace_stop"() : () -> ()
    %104 = vector.shape_cast %103 : vector<2x8x8xf32> to vector<16x8xf32>
    %c24_60 = arith.constant 24 : index
    %c0_61 = arith.constant 0 : index
    %105 = vector.load %arg4[%c24_60, %c0_61] : memref<32x32xf32, #tpu.memory_space<vmem>>, vector<8x32xf32>
    %cst_62 = arith.constant dense<0.000000e+00> : vector<16x32xf32>
    %106 = tpu.matmul %104, %105, %cst_62 {dimension_numbers = #tpu.dot_dimension_numbers<[1], [0], [0], [1], [0, 0, 1, 1], [], []>} : vector<16x8xf32>, vector<8x32xf32>, vector<16x32xf32> -> vector<16x32xf32>
    %c0_63 = arith.constant 0 : index
    %c0_64 = arith.constant 0 : index
    %107 = vector.load %arg10[%c0_63, %c0_64] : memref<16x32xf32, #tpu.memory_space<vmem>>, vector<16x32xf32>
    %108 = arith.addf %107, %106 : vector<16x32xf32>
    %c0_65 = arith.constant 0 : index
    %c0_66 = arith.constant 0 : index
    %109 = vector.load %arg10[%c0_65, %c0_66] : memref<16x32xf32, #tpu.memory_space<vmem>>, vector<16x32xf32>
    tpu.vector_store %arg10[%c0_65, %c0_66], %108 {strides = array<i32>} : memref<16x32xf32, #tpu.memory_space<vmem>>, vector<16x32xf32>,
    %c0_67 = arith.constant 0 : index
    %c0_68 = arith.constant 0 : index
    %110 = vector.load %arg10[%c0_67, %c0_68] : memref<16x32xf32, #tpu.memory_space<vmem>>, vector<16x32xf32>
    %111 = arith.addf %1, %110 : vector<16x32xf32>
    %c0_69 = arith.constant 0 : index
    %c0_70 = arith.constant 0 : index
    %112 = vector.load %arg5[%c0_69, %c0_70] : memref<1x32xf32, #tpu.memory_space<vmem>>, vector<1x32xf32>
    %113 = vector.broadcast %112 : vector<1x32xf32> to vector<16x32xf32>
    %114 = arith.addf %111, %113 : vector<16x32xf32>
    %cst_71 = arith.constant dense<0.000000e+00> : vector<16xf32>
    %115 = vector.multi_reduction <add>, %114, %cst_71 [1] : vector<16x32xf32> to vector<16xf32>
    %116 = vector.shape_cast %115 : vector<16xf32> to vector<16x1xf32>
    %cst_72 = arith.constant 3.200000e+01 : f32
    %117 = vector.broadcast %cst_72 : f32 to vector<16x1xf32>
    %118 = arith.divf %116, %117 : vector<16x1xf32>
    %119 = vector.broadcast %118 : vector<16x1xf32> to vector<16x32xf32>
    %120 = arith.subf %114, %119 : vector<16x32xf32>
    %121 = vector.broadcast %118 : vector<16x1xf32> to vector<16x32xf32>
    %122 = arith.subf %114, %121 : vector<16x32xf32>
    %123 = arith.mulf %120, %122 : vector<16x32xf32>
    %cst_73 = arith.constant dense<0.000000e+00> : vector<16xf32>
    %124 = vector.multi_reduction <add>, %123, %cst_73 [1] : vector<16x32xf32> to vector<16xf32>
    %125 = vector.shape_cast %124 : vector<16xf32> to vector<16x1xf32>
    %cst_74 = arith.constant 3.200000e+01 : f32
    %126 = vector.broadcast %cst_74 : f32 to vector<16x1xf32>
    %127 = arith.divf %125, %126 : vector<16x1xf32>
    %128 = vector.broadcast %118 : vector<16x1xf32> to vector<16x32xf32>
    %129 = arith.subf %114, %128 : vector<16x32xf32>
    %cst_75 = arith.constant 9.99999974E-6 : f32
    %130 = vector.broadcast %cst_75 : f32 to vector<16x1xf32>
    %131 = arith.addf %127, %130 : vector<16x1xf32>
    %132 = math.rsqrt %131 : vector<16x1xf32>
    %133 = vector.broadcast %132 : vector<16x1xf32> to vector<16x32xf32>
    %134 = arith.mulf %129, %133 : vector<16x32xf32>
    %c0_76 = arith.constant 0 : index
    %c0_77 = arith.constant 0 : index
    %135 = vector.load %arg6[%c0_76, %c0_77] : memref<1x32xf32, #tpu.memory_space<vmem>>, vector<1x32xf32>
    %136 = vector.broadcast %135 : vector<1x32xf32> to vector<16x32xf32>
    %137 = arith.mulf %134, %136 : vector<16x32xf32>
    %c0_78 = arith.constant 0 : index
    %c0_79 = arith.constant 0 : index
    %138 = vector.load %arg7[%c0_78, %c0_79] : memref<1x32xf32, #tpu.memory_space<vmem>>, vector<1x32xf32>
    %139 = vector.broadcast %138 : vector<1x32xf32> to vector<16x32xf32>
    %140 = arith.addf %137, %139 : vector<16x32xf32>
    %141 = vector.shape_cast %140 : vector<16x32xf32> to vector<2x8x32xf32>
    %c0_80 = arith.constant 0 : index
    %c0_81 = arith.constant 0 : index
    %c0_82 = arith.constant 0 : index
    %142 = vector.load %arg8[%c0_80, %c0_81, %c0_82] : memref<2x8x32xf32, #tpu.memory_space<vmem>>, vector<2x8x32xf32>
    tpu.vector_store %arg8[%c0_80, %c0_81, %c0_82], %141 {strides = array<i32>} : memref<2x8x32xf32, #tpu.memory_space<vmem>>, vector<2x8x32xf32>,
    return
  }
  func.func @transform_0(%arg0: i32) -> (i32, i32, i32) {
    %c0_i32 = arith.constant 0 : i32
    %c0_i32_0 = arith.constant 0 : i32
    %c0_i32_1 = arith.constant 0 : i32
    return %arg0, %c0_i32, %c0_i32_0 : i32, i32, i32
  }
  func.func @transform_1(%arg0: i32) -> (i32, i32) {
    %c0_i32 = arith.constant 0 : i32
    %c0_i32_0 = arith.constant 0 : i32
    %c0_i32_1 = arith.constant 0 : i32
    return %c0_i32, %c0_i32_0 : i32, i32
  }
  func.func @transform_2(%arg0: i32) -> (i32, i32) {
    %c0_i32 = arith.constant 0 : i32
    %c0_i32_0 = arith.constant 0 : i32
    %c0_i32_1 = arith.constant 0 : i32
    return %c0_i32, %c0_i32_0 : i32, i32
  }
  func.func @transform_3(%arg0: i32) -> (i32, i32) {
    %c0_i32 = arith.constant 0 : i32
    %c0_i32_0 = arith.constant 0 : i32
    %c0_i32_1 = arith.constant 0 : i32
    return %c0_i32, %c0_i32_0 : i32, i32
  }
  func.func @transform_4(%arg0: i32) -> (i32, i32) {
    %c0_i32 = arith.constant 0 : i32
    %c0_i32_0 = arith.constant 0 : i32
    %c0_i32_1 = arith.constant 0 : i32
    return %c0_i32, %c0_i32_0 : i32, i32
  }
  func.func @transform_5(%arg0: i32) -> (i32, i32) {
    %c0_i32 = arith.constant 0 : i32
    %c0_i32_0 = arith.constant 0 : i32
    %c0_i32_1 = arith.constant 0 : i32
    return %c0_i32, %c0_i32_0 : i32, i32
  }
  func.func @transform_6(%arg0: i32) -> (i32, i32) {
    %c0_i32 = arith.constant 0 : i32
    %c0_i32_0 = arith.constant 0 : i32
    %c0_i32_1 = arith.constant 0 : i32
    return %c0_i32, %c0_i32_0 : i32, i32
  }
  func.func @transform_7(%arg0: i32) -> (i32, i32, i32) {
    %c0_i32 = arith.constant 0 : i32
    %c0_i32_0 = arith.constant 0 : i32
    %c0_i32_1 = arith.constant 0 : i32
    return %arg0, %c0_i32, %c0_i32_0 : i32, i32, i32
  }
}

module attributes {stable_mosaic.version = 11 : i64} {
  func.func @sa_kernel(%arg0: i32, %arg1: memref<2x8x32xf32, #tpu.memory_space<vmem>>, %arg2: memref<32x96xf32, #tpu.memory_space<vmem>>, %arg3: memref<1x96xf32, #tpu.memory_space<vmem>>, %arg4: memref<32x32xf32, #tpu.memory_space<vmem>>, %arg5: memref<1x32xf32, #tpu.memory_space<vmem>>, %arg6: memref<1x32xf32, #tpu.memory_space<vmem>>, %arg7: memref<1x32xf32, #tpu.memory_space<vmem>>, %arg8: memref<2x8x32xf32, #tpu.memory_space<vmem>>, %arg9: memref<16x96xf32, #tpu.memory_space<vmem>>, %arg10: memref<16x32xf32, #tpu.memory_space<vmem>>) attributes {dimension_semantics = [#tpu.dimension_semantics<parallel>], iteration_bounds = array<i64: 1>, scalar_prefetch = 0 : i64, scratch_operands = 2 : i64, tpu.core_type = #tpu.core_type<tc>, window_params = [{transform_indices = @transform_0, window_bounds = array<i64: 2, 8, 32>}, {pipeline_mode = #tpu.pipeline_mode<synchronous>, transform_indices = @transform_1, window_bounds = array<i64: 32, 96>}, {pipeline_mode = #tpu.pipeline_mode<synchronous>, transform_indices = @transform_2, window_bounds = array<i64: 1, 96>}, {pipeline_mode = #tpu.pipeline_mode<synchronous>, transform_indices = @transform_3, window_bounds = array<i64: 32, 32>}, {pipeline_mode = #tpu.pipeline_mode<synchronous>, transform_indices = @transform_4, window_bounds = array<i64: 1, 32>}, {pipeline_mode = #tpu.pipeline_mode<synchronous>, transform_indices = @transform_5, window_bounds = array<i64: 1, 32>}, {pipeline_mode = #tpu.pipeline_mode<synchronous>, transform_indices = @transform_6, window_bounds = array<i64: 1, 32>}, {transform_indices = @transform_7, window_bounds = array<i64: 2, 8, 32>}]} {
    %c0 = arith.constant 0 : index
    %c0_0 = arith.constant 0 : index
    %c0_1 = arith.constant 0 : index
    %0 = vector.load %arg1[%c0, %c0_0, %c0_1] : memref<2x8x32xf32, #tpu.memory_space<vmem>>, vector<2x8x32xf32>
    %1 = vector.shape_cast %0 : vector<2x8x32xf32> to vector<16x32xf32>
    %c0_2 = arith.constant 0 : index
    %c0_3 = arith.constant 0 : index
    %2 = vector.load %arg2[%c0_2, %c0_3] : memref<32x96xf32, #tpu.memory_space<vmem>>, vector<32x96xf32>
    %cst = arith.constant dense<0.000000e+00> : vector<16x96xf32>
    %3 = tpu.matmul %1, %2, %cst {dimension_numbers = #tpu.dot_dimension_numbers<[1], [0], [0], [1], [0, 0, 1, 1], [], []>} : vector<16x32xf32>, vector<32x96xf32>, vector<16x96xf32> -> vector<16x96xf32>
    %c0_4 = arith.constant 0 : index
    %c0_5 = arith.constant 0 : index
    %4 = vector.load %arg3[%c0_4, %c0_5] : memref<1x96xf32, #tpu.memory_space<vmem>>, vector<1x96xf32>
    %5 = vector.broadcast %4 : vector<1x96xf32> to vector<16x96xf32>
    %6 = arith.addf %3, %5 : vector<16x96xf32>
    %c0_6 = arith.constant 0 : index
    %c0_7 = arith.constant 0 : index
    %7 = vector.load %arg9[%c0_6, %c0_7] : memref<16x96xf32, #tpu.memory_space<vmem>>, vector<16x96xf32>
    tpu.vector_store %arg9[%c0_6, %c0_7], %6 {strides = array<i32>} : memref<16x96xf32, #tpu.memory_space<vmem>>, vector<16x96xf32>,
    %c0_8 = arith.constant 0 : index
    %c0_9 = arith.constant 0 : index
    %8 = vector.load %arg9[%c0_8, %c0_9] : memref<16x96xf32, #tpu.memory_space<vmem>>, vector<16x8xf32>
    %9 = vector.shape_cast %8 : vector<16x8xf32> to vector<2x8x8xf32>
    %c0_10 = arith.constant 0 : index
    %c32 = arith.constant 32 : index
    %10 = vector.load %arg9[%c0_10, %c32] : memref<16x96xf32, #tpu.memory_space<vmem>>, vector<16x8xf32>
    %11 = vector.shape_cast %10 : vector<16x8xf32> to vector<2x8x8xf32>
    %c0_11 = arith.constant 0 : index
    %c64 = arith.constant 64 : index
    %12 = vector.load %arg9[%c0_11, %c64] : memref<16x96xf32, #tpu.memory_space<vmem>>, vector<16x8xf32>
    %13 = vector.shape_cast %12 : vector<16x8xf32> to vector<2x8x8xf32>
    "tpu.trace_start"() <{level = 10 : i32, message = "bqd,bkd->bqk"}> : () -> ()
    %cst_12 = arith.constant dense<0.000000e+00> : vector<2x8x8xf32>
    %14 = tpu.matmul %9, %11, %cst_12 {dimension_numbers = #tpu.dot_dimension_numbers<[2], [2], [1], [1], [0, 0, 0, 1, 1, 1], [0], [0]>} : vector<2x8x8xf32>, vector<2x8x8xf32>, vector<2x8x8xf32> -> vector<2x8x8xf32>
    "tpu.trace_stop"() : () -> ()
    %cst_13 = arith.constant 0.353553385 : f32
    %15 = vector.broadcast %cst_13 : f32 to vector<2x8x8xf32>
    %16 = arith.mulf %14, %15 : vector<2x8x8xf32>
    %cst_14 = arith.constant dense<0xFF800000> : vector<2x8xf32>
    %17 = vector.multi_reduction <maximumf>, %16, %cst_14 [2] : vector<2x8x8xf32> to vector<2x8xf32>
    %18 = vector.shape_cast %17 : vector<2x8xf32> to vector<2x8x1xf32>
    %19 = vector.broadcast %18 : vector<2x8x1xf32> to vector<2x8x8xf32>
    %20 = arith.subf %16, %19 : vector<2x8x8xf32>
    %21 = math.exp %20 : vector<2x8x8xf32>
    %cst_15 = arith.constant dense<0.000000e+00> : vector<2x8xf32>
    %22 = vector.multi_reduction <add>, %21, %cst_15 [2] : vector<2x8x8xf32> to vector<2x8xf32>
    %23 = vector.shape_cast %22 : vector<2x8xf32> to vector<2x8x1xf32>
    %24 = tpu.reciprocal %23 {approx = true} : vector<2x8x1xf32> -> vector<2x8x1xf32>
    %25 = vector.broadcast %24 : vector<2x8x1xf32> to vector<2x8x8xf32>
    %26 = arith.mulf %21, %25 : vector<2x8x8xf32>
    "tpu.trace_start"() <{level = 10 : i32, message = "bqk,bkd->bqd"}> : () -> ()
    %cst_16 = arith.constant dense<0.000000e+00> : vector<2x8x8xf32>
    %27 = tpu.matmul %26, %13, %cst_16 {dimension_numbers = #tpu.dot_dimension_numbers<[2], [1], [1], [2], [0, 0, 0, 1, 1, 2], [0], [0]>} : vector<2x8x8xf32>, vector<2x8x8xf32>, vector<2x8x8xf32> -> vector<2x8x8xf32>
    "tpu.trace_stop"() : () -> ()
    %28 = vector.shape_cast %27 : vector<2x8x8xf32> to vector<16x8xf32>
    %c0_17 = arith.constant 0 : index
    %c0_18 = arith.constant 0 : index
    %29 = vector.load %arg4[%c0_17, %c0_18] : memref<32x32xf32, #tpu.memory_space<vmem>>, vector<8x32xf32>
    %cst_19 = arith.constant dense<0.000000e+00> : vector<16x32xf32>
    %30 = tpu.matmul %28, %29, %cst_19 {dimension_numbers = #tpu.dot_dimension_numbers<[1], [0], [0], [1], [0, 0, 1, 1], [], []>} : vector<16x8xf32>, vector<8x32xf32>, vector<16x32xf32> -> vector<16x32xf32>
    %c0_20 = arith.constant 0 : index
    %c0_21 = arith.constant 0 : index
    %31 = vector.load %arg10[%c0_20, %c0_21] : memref<16x32xf32, #tpu.memory_space<vmem>>, vector<16x32xf32>
    tpu.vector_store %arg10[%c0_20, %c0_21], %30 {strides = array<i32>} : memref<16x32xf32, #tpu.memory_space<vmem>>, vector<16x32xf32>,
    %c0_22 = arith.constant 0 : index
    %c8 = arith.constant 8 : index
    %32 = vector.load %arg9[%c0_22, %c8] : memref<16x96xf32, #tpu.memory_space<vmem>>, vector<16x8xf32>
    %33 = vector.shape_cast %32 : vector<16x8xf32> to vector<2x8x8xf32>
    %c0_23 = arith.constant 0 : index
    %c40 = arith.constant 40 : index
    %34 = vector.load %arg9[%c0_23, %c40] : memref<16x96xf32, #tpu.memory_space<vmem>>, vector<16x8xf32>
    %35 = vector.shape_cast %34 : vector<16x8xf32> to vector<2x8x8xf32>
    %c0_24 = arith.constant 0 : index
    %c72 = arith.constant 72 : index
    %36 = vector.load %arg9[%c0_24, %c72] : memref<16x96xf32, #tpu.memory_space<vmem>>, vector<16x8xf32>
    %37 = vector.shape_cast %36 : vector<16x8xf32> to vector<2x8x8xf32>
    "tpu.trace_start"() <{level = 10 : i32, message = "bqd,bkd->bqk"}> : () -> ()
    %cst_25 = arith.constant dense<0.000000e+00> : vector<2x8x8xf32>
    %38 = tpu.matmul %33, %35, %cst_25 {dimension_numbers = #tpu.dot_dimension_numbers<[2], [2], [1], [1], [0, 0, 0, 1, 1, 1], [0], [0]>} : vector<2x8x8xf32>, vector<2x8x8xf32>, vector<2x8x8xf32> -> vector<2x8x8xf32>
    "tpu.trace_stop"() : () -> ()
    %cst_26 = arith.constant 0.353553385 : f32
    %39 = vector.broadcast %cst_26 : f32 to vector<2x8x8xf32>
    %40 = arith.mulf %38, %39 : vector<2x8x8xf32>
    %cst_27 = arith.constant dense<0xFF800000> : vector<2x8xf32>
    %41 = vector.multi_reduction <maximumf>, %40, %cst_27 [2] : vector<2x8x8xf32> to vector<2x8xf32>
    %42 = vector.shape_cast %41 : vector<2x8xf32> to vector<2x8x1xf32>
    %43 = vector.broadcast %42 : vector<2x8x1xf32> to vector<2x8x8xf32>
    %44 = arith.subf %40, %43 : vector<2x8x8xf32>
    %45 = math.exp %44 : vector<2x8x8xf32>
    %cst_28 = arith.constant dense<0.000000e+00> : vector<2x8xf32>
    %46 = vector.multi_reduction <add>, %45, %cst_28 [2] : vector<2x8x8xf32> to vector<2x8xf32>
    %47 = vector.shape_cast %46 : vector<2x8xf32> to vector<2x8x1xf32>
    %48 = tpu.reciprocal %47 {approx = true} : vector<2x8x1xf32> -> vector<2x8x1xf32>
    %49 = vector.broadcast %48 : vector<2x8x1xf32> to vector<2x8x8xf32>
    %50 = arith.mulf %45, %49 : vector<2x8x8xf32>
    "tpu.trace_start"() <{level = 10 : i32, message = "bqk,bkd->bqd"}> : () -> ()
    %cst_29 = arith.constant dense<0.000000e+00> : vector<2x8x8xf32>
    %51 = tpu.matmul %50, %37, %cst_29 {dimension_numbers = #tpu.dot_dimension_numbers<[2], [1], [1], [2], [0, 0, 0, 1, 1, 2], [0], [0]>} : vector<2x8x8xf32>, vector<2x8x8xf32>, vector<2x8x8xf32> -> vector<2x8x8xf32>
    "tpu.trace_stop"() : () -> ()
    %52 = vector.shape_cast %51 : vector<2x8x8xf32> to vector<16x8xf32>
    %c8_30 = arith.constant 8 : index
    %c0_31 = arith.constant 0 : index
    %53 = vector.load %arg4[%c8_30, %c0_31] : memref<32x32xf32, #tpu.memory_space<vmem>>, vector<8x32xf32>
    %cst_32 = arith.constant dense<0.000000e+00> : vector<16x32xf32>
    %54 = tpu.matmul %52, %53, %cst_32 {dimension_numbers = #tpu.dot_dimension_numbers<[1], [0], [0], [1], [0, 0, 1, 1], [], []>} : vector<16x8xf32>, vector<8x32xf32>, vector<16x32xf32> -> vector<16x32xf32>
    %c0_33 = arith.constant 0 : index
    %c0_34 = arith.constant 0 : index
    %55 = vector.load %arg10[%c0_33, %c0_34] : memref<16x32xf32, #tpu.memory_space<vmem>>, vector<16x32xf32>
    %56 = arith.addf %55, %54 : vector<16x32xf32>
    %c0_35 = arith.constant 0 : index
    %c0_36 = arith.constant 0 : index
    %57 = vector.load %arg10[%c0_35, %c0_36] : memref<16x32xf32, #tpu.memory_space<vmem>>, vector<16x32xf32>
    tpu.vector_store %arg10[%c0_35, %c0_36], %56 {strides = array<i32>} : memref<16x32xf32, #tpu.memory_space<vmem>>, vector<16x32xf32>,
    %c0_37 = arith.constant 0 : index
    %c16 = arith.constant 16 : index
    %58 = vector.load %arg9[%c0_37, %c16] : memref<16x96xf32, #tpu.memory_space<vmem>>, vector<16x8xf32>
    %59 = vector.shape_cast %58 : vector<16x8xf32> to vector<2x8x8xf32>
    %c0_38 = arith.constant 0 : index
    %c48 = arith.constant 48 : index
    %60 = vector.load %arg9[%c0_38, %c48] : memref<16x96xf32, #tpu.memory_space<vmem>>, vector<16x8xf32>
    %61 = vector.shape_cast %60 : vector<16x8xf32> to vector<2x8x8xf32>
    %c0_39 = arith.constant 0 : index
    %c80 = arith.constant 80 : index
    %62 = vector.load %arg9[%c0_39, %c80] : memref<16x96xf32, #tpu.memory_space<vmem>>, vector<16x8xf32>
    %63 = vector.shape_cast %62 : vector<16x8xf32> to vector<2x8x8xf32>
    "tpu.trace_start"() <{level = 10 : i32, message = "bqd,bkd->bqk"}> : () -> ()
    %cst_40 = arith.constant dense<0.000000e+00> : vector<2x8x8xf32>
    %64 = tpu.matmul %59, %61, %cst_40 {dimension_numbers = #tpu.dot_dimension_numbers<[2], [2], [1], [1], [0, 0, 0, 1, 1, 1], [0], [0]>} : vector<2x8x8xf32>, vector<2x8x8xf32>, vector<2x8x8xf32> -> vector<2x8x8xf32>
    "tpu.trace_stop"() : () -> ()
    %cst_41 = arith.constant 0.353553385 : f32
    %65 = vector.broadcast %cst_41 : f32 to vector<2x8x8xf32>
    %66 = arith.mulf %64, %65 : vector<2x8x8xf32>
    %cst_42 = arith.constant dense<0xFF800000> : vector<2x8xf32>
    %67 = vector.multi_reduction <maximumf>, %66, %cst_42 [2] : vector<2x8x8xf32> to vector<2x8xf32>
    %68 = vector.shape_cast %67 : vector<2x8xf32> to vector<2x8x1xf32>
    %69 = vector.broadcast %68 : vector<2x8x1xf32> to vector<2x8x8xf32>
    %70 = arith.subf %66, %69 : vector<2x8x8xf32>
    %71 = math.exp %70 : vector<2x8x8xf32>
    %cst_43 = arith.constant dense<0.000000e+00> : vector<2x8xf32>
    %72 = vector.multi_reduction <add>, %71, %cst_43 [2] : vector<2x8x8xf32> to vector<2x8xf32>
    %73 = vector.shape_cast %72 : vector<2x8xf32> to vector<2x8x1xf32>
    %74 = tpu.reciprocal %73 {approx = true} : vector<2x8x1xf32> -> vector<2x8x1xf32>
    %75 = vector.broadcast %74 : vector<2x8x1xf32> to vector<2x8x8xf32>
    %76 = arith.mulf %71, %75 : vector<2x8x8xf32>
    "tpu.trace_start"() <{level = 10 : i32, message = "bqk,bkd->bqd"}> : () -> ()
    %cst_44 = arith.constant dense<0.000000e+00> : vector<2x8x8xf32>
    %77 = tpu.matmul %76, %63, %cst_44 {dimension_numbers = #tpu.dot_dimension_numbers<[2], [1], [1], [2], [0, 0, 0, 1, 1, 2], [0], [0]>} : vector<2x8x8xf32>, vector<2x8x8xf32>, vector<2x8x8xf32> -> vector<2x8x8xf32>
    "tpu.trace_stop"() : () -> ()
    %78 = vector.shape_cast %77 : vector<2x8x8xf32> to vector<16x8xf32>
    %c16_45 = arith.constant 16 : index
    %c0_46 = arith.constant 0 : index
    %79 = vector.load %arg4[%c16_45, %c0_46] : memref<32x32xf32, #tpu.memory_space<vmem>>, vector<8x32xf32>
    %cst_47 = arith.constant dense<0.000000e+00> : vector<16x32xf32>
    %80 = tpu.matmul %78, %79, %cst_47 {dimension_numbers = #tpu.dot_dimension_numbers<[1], [0], [0], [1], [0, 0, 1, 1], [], []>} : vector<16x8xf32>, vector<8x32xf32>, vector<16x32xf32> -> vector<16x32xf32>
    %c0_48 = arith.constant 0 : index
    %c0_49 = arith.constant 0 : index
    %81 = vector.load %arg10[%c0_48, %c0_49] : memref<16x32xf32, #tpu.memory_space<vmem>>, vector<16x32xf32>
    %82 = arith.addf %81, %80 : vector<16x32xf32>
    %c0_50 = arith.constant 0 : index
    %c0_51 = arith.constant 0 : index
    %83 = vector.load %arg10[%c0_50, %c0_51] : memref<16x32xf32, #tpu.memory_space<vmem>>, vector<16x32xf32>
    tpu.vector_store %arg10[%c0_50, %c0_51], %82 {strides = array<i32>} : memref<16x32xf32, #tpu.memory_space<vmem>>, vector<16x32xf32>,
    %c0_52 = arith.constant 0 : index
    %c24 = arith.constant 24 : index
    %84 = vector.load %arg9[%c0_52, %c24] : memref<16x96xf32, #tpu.memory_space<vmem>>, vector<16x8xf32>
    %85 = vector.shape_cast %84 : vector<16x8xf32> to vector<2x8x8xf32>
    %c0_53 = arith.constant 0 : index
    %c56 = arith.constant 56 : index
    %86 = vector.load %arg9[%c0_53, %c56] : memref<16x96xf32, #tpu.memory_space<vmem>>, vector<16x8xf32>
    %87 = vector.shape_cast %86 : vector<16x8xf32> to vector<2x8x8xf32>
    %c0_54 = arith.constant 0 : index
    %c88 = arith.constant 88 : index
    %88 = vector.load %arg9[%c0_54, %c88] : memref<16x96xf32, #tpu.memory_space<vmem>>, vector<16x8xf32>
    %89 = vector.shape_cast %88 : vector<16x8xf32> to vector<2x8x8xf32>
    "tpu.trace_start"() <{level = 10 : i32, message = "bqd,bkd->bqk"}> : () -> ()
    %cst_55 = arith.constant dense<0.000000e+00> : vector<2x8x8xf32>
    %90 = tpu.matmul %85, %87, %cst_55 {dimension_numbers = #tpu.dot_dimension_numbers<[2], [2], [1], [1], [0, 0, 0, 1, 1, 1], [0], [0]>} : vector<2x8x8xf32>, vector<2x8x8xf32>, vector<2x8x8xf32> -> vector<2x8x8xf32>
    "tpu.trace_stop"() : () -> ()
    %cst_56 = arith.constant 0.353553385 : f32
    %91 = vector.broadcast %cst_56 : f32 to vector<2x8x8xf32>
    %92 = arith.mulf %90, %91 : vector<2x8x8xf32>
    %cst_57 = arith.constant dense<0xFF800000> : vector<2x8xf32>
    %93 = vector.multi_reduction <maximumf>, %92, %cst_57 [2] : vector<2x8x8xf32> to vector<2x8xf32>
    %94 = vector.shape_cast %93 : vector<2x8xf32> to vector<2x8x1xf32>
    %95 = vector.broadcast %94 : vector<2x8x1xf32> to vector<2x8x8xf32>
    %96 = arith.subf %92, %95 : vector<2x8x8xf32>
    %97 = math.exp %96 : vector<2x8x8xf32>
    %cst_58 = arith.constant dense<0.000000e+00> : vector<2x8xf32>
    %98 = vector.multi_reduction <add>, %97, %cst_58 [2] : vector<2x8x8xf32> to vector<2x8xf32>
    %99 = vector.shape_cast %98 : vector<2x8xf32> to vector<2x8x1xf32>
    %100 = tpu.reciprocal %99 {approx = true} : vector<2x8x1xf32> -> vector<2x8x1xf32>
    %101 = vector.broadcast %100 : vector<2x8x1xf32> to vector<2x8x8xf32>
    %102 = arith.mulf %97, %101 : vector<2x8x8xf32>
    "tpu.trace_start"() <{level = 10 : i32, message = "bqk,bkd->bqd"}> : () -> ()
    %cst_59 = arith.constant dense<0.000000e+00> : vector<2x8x8xf32>
    %103 = tpu.matmul %102, %89, %cst_59 {dimension_numbers = #tpu.dot_dimension_numbers<[2], [1], [1], [2], [0, 0, 0, 1, 1, 2], [0], [0]>} : vector<2x8x8xf32>, vector<2x8x8xf32>, vector<2x8x8xf32> -> vector<2x8x8xf32>
    "tpu.trace_stop"() : () -> ()
    %104 = vector.shape_cast %103 : vector<2x8x8xf32> to vector<16x8xf32>
    %c24_60 = arith.constant 24 : index
    %c0_61 = arith.constant 0 : index
    %105 = vector.load %arg4[%c24_60, %c0_61] : memref<32x32xf32, #tpu.memory_space<vmem>>, vector<8x32xf32>
    %cst_62 = arith.constant dense<0.000000e+00> : vector<16x32xf32>
    %106 = tpu.matmul %104, %105, %cst_62 {dimension_numbers = #tpu.dot_dimension_numbers<[1], [0], [0], [1], [0, 0, 1, 1], [], []>} : vector<16x8xf32>, vector<8x32xf32>, vector<16x32xf32> -> vector<16x32xf32>
    %c0_63 = arith.constant 0 : index
    %c0_64 = arith.constant 0 : index
    %107 = vector.load %arg10[%c0_63, %c0_64] : memref<16x32xf32, #tpu.memory_space<vmem>>, vector<16x32xf32>
    %108 = arith.addf %107, %106 : vector<16x32xf32>
    %c0_65 = arith.constant 0 : index
    %c0_66 = arith.constant 0 : index
    %109 = vector.load %arg10[%c0_65, %c0_66] : memref<16x32xf32, #tpu.memory_space<vmem>>, vector<16x32xf32>
    tpu.vector_store %arg10[%c0_65, %c0_66], %108 {strides = array<i32>} : memref<16x32xf32, #tpu.memory_space<vmem>>, vector<16x32xf32>,
    %c0_67 = arith.constant 0 : index
    %c0_68 = arith.constant 0 : index
    %110 = vector.load %arg10[%c0_67, %c0_68] : memref<16x32xf32, #tpu.memory_space<vmem>>, vector<16x32xf32>
    %111 = arith.addf %1, %110 : vector<16x32xf32>
    %c0_69 = arith.constant 0 : index
    %c0_70 = arith.constant 0 : index
    %112 = vector.load %arg5[%c0_69, %c0_70] : memref<1x32xf32, #tpu.memory_space<vmem>>, vector<1x32xf32>
    %113 = vector.broadcast %112 : vector<1x32xf32> to vector<16x32xf32>
    %114 = arith.addf %111, %113 : vector<16x32xf32>
    %cst_71 = arith.constant dense<0.000000e+00> : vector<16xf32>
    %115 = vector.multi_reduction <add>, %114, %cst_71 [1] : vector<16x32xf32> to vector<16xf32>
    %116 = vector.shape_cast %115 : vector<16xf32> to vector<16x1xf32>
    %cst_72 = arith.constant 3.200000e+01 : f32
    %117 = vector.broadcast %cst_72 : f32 to vector<16x1xf32>
    %118 = arith.divf %116, %117 : vector<16x1xf32>
    %119 = vector.broadcast %118 : vector<16x1xf32> to vector<16x32xf32>
    %120 = arith.subf %114, %119 : vector<16x32xf32>
    %121 = vector.broadcast %118 : vector<16x1xf32> to vector<16x32xf32>
    %122 = arith.subf %114, %121 : vector<16x32xf32>
    %123 = arith.mulf %120, %122 : vector<16x32xf32>
    %cst_73 = arith.constant dense<0.000000e+00> : vector<16xf32>
    %124 = vector.multi_reduction <add>, %123, %cst_73 [1] : vector<16x32xf32> to vector<16xf32>
    %125 = vector.shape_cast %124 : vector<16xf32> to vector<16x1xf32>
    %cst_74 = arith.constant 3.200000e+01 : f32
    %126 = vector.broadcast %cst_74 : f32 to vector<16x1xf32>
    %127 = arith.divf %125, %126 : vector<16x1xf32>
    %128 = vector.broadcast %118 : vector<16x1xf32> to vector<16x32xf32>
    %129 = arith.subf %114, %128 : vector<16x32xf32>
    %cst_75 = arith.constant 9.99999974E-6 : f32
    %130 = vector.broadcast %cst_75 : f32 to vector<16x1xf32>
    %131 = arith.addf %127, %130 : vector<16x1xf32>
    %132 = math.rsqrt %131 : vector<16x1xf32>
    %133 = vector.broadcast %132 : vector<16x1xf32> to vector<16x32xf32>
    %134 = arith.mulf %129, %133 : vector<16x32xf32>
    %c0_76 = arith.constant 0 : index
    %c0_77 = arith.constant 0 : index
    %135 = vector.load %arg6[%c0_76, %c0_77] : memref<1x32xf32, #tpu.memory_space<vmem>>, vector<1x32xf32>
    %136 = vector.broadcast %135 : vector<1x32xf32> to vector<16x32xf32>
    %137 = arith.mulf %134, %136 : vector<16x32xf32>
    %c0_78 = arith.constant 0 : index
    %c0_79 = arith.constant 0 : index
    %138 = vector.load %arg7[%c0_78, %c0_79] : memref<1x32xf32, #tpu.memory_space<vmem>>, vector<1x32xf32>
    %139 = vector.broadcast %138 : vector<1x32xf32> to vector<16x32xf32>
    %140 = arith.addf %137, %139 : vector<16x32xf32>
    %141 = vector.shape_cast %140 : vector<16x32xf32> to vector<2x8x32xf32>
    %c0_80 = arith.constant 0 : index
    %c0_81 = arith.constant 0 : index
    %c0_82 = arith.constant 0 : index
    %142 = vector.load %arg8[%c0_80, %c0_81, %c0_82] : memref<2x8x32xf32, #tpu.memory_space<vmem>>, vector<2x8x32xf32>
    tpu.vector_store %arg8[%c0_80, %c0_81, %c0_82], %141 {strides = array<i32>} : memref<2x8x32xf32, #tpu.memory_space<vmem>>, vector<2x8x32xf32>,
    return
  }
  func.func @transform_0(%arg0: i32) -> (i32, i32, i32) {
    %c0_i32 = arith.constant 0 : i32
    %c0_i32_0 = arith.constant 0 : i32
    %c0_i32_1 = arith.constant 0 : i32
    return %arg0, %c0_i32, %c0_i32_0 : i32, i32, i32
  }
  func.func @transform_1(%arg0: i32) -> (i32, i32) {
    %c0_i32 = arith.constant 0 : i32
    %c0_i32_0 = arith.constant 0 : i32
    %c0_i32_1 = arith.constant 0 : i32
    return %c0_i32, %c0_i32_0 : i32, i32
  }
  func.func @transform_2(%arg0: i32) -> (i32, i32) {
    %c0_i32 = arith.constant 0 : i32
    %c0_i32_0 = arith.constant 0 : i32
    %c0_i32_1 = arith.constant 0 : i32
    return %c0_i32, %c0_i32_0 : i32, i32
  }
  func.func @transform_3(%arg0: i32) -> (i32, i32) {
    %c0_i32 = arith.constant 0 : i32
    %c0_i32_0 = arith.constant 0 : i32
    %c0_i32_1 = arith.constant 0 : i32
    return %c0_i32, %c0_i32_0 : i32, i32
  }
  func.func @transform_4(%arg0: i32) -> (i32, i32) {
    %c0_i32 = arith.constant 0 : i32
    %c0_i32_0 = arith.constant 0 : i32
    %c0_i32_1 = arith.constant 0 : i32
    return %c0_i32, %c0_i32_0 : i32, i32
  }
  func.func @transform_5(%arg0: i32) -> (i32, i32) {
    %c0_i32 = arith.constant 0 : i32
    %c0_i32_0 = arith.constant 0 : i32
    %c0_i32_1 = arith.constant 0 : i32
    return %c0_i32, %c0_i32_0 : i32, i32
  }
  func.func @transform_6(%arg0: i32) -> (i32, i32) {
    %c0_i32 = arith.constant 0 : i32
    %c0_i32_0 = arith.constant 0 : i32
    %c0_i32_1 = arith.constant 0 : i32
    return %c0_i32, %c0_i32_0 : i32, i32
  }
  func.func @transform_7(%arg0: i32) -> (i32, i32, i32) {
    %c0_i32 = arith.constant 0 : i32
    %c0_i32_0 = arith.constant 0 : i32
    %c0_i32_1 = arith.constant 0 : i32
    return %arg0, %c0_i32, %c0_i32_0 : i32, i32, i32
  }
}

</mosaic_0001>

<llo_original>
// kernel: sa_forward.1
$region0: #{sa_forward.1}
  #allocation0 [shape = 'u32[]', space=smem, size = 0x4, offset = 0x4, fixed_abs, tag = 'smem constant byte address 0x4 - core index']
  #allocation1 [shape = 'u32[144,128]{1,0:T(1,128)}', space=vmem, size = 0x12000, scoped, tag = 'internal scratch']
  #allocation2 [shape = 'f32[16,96]{1,0:T(8,128)}', space=vmem, size = 0x2000, scoped, tag = 'scratch operand']
  #allocation3 [shape = 'f32[16,32]{1,0:T(8,128)}', space=vmem, size = 0x2000, scoped, tag = 'scratch operand']
  %s0 = inlined_call_operand.hbm [shape: f32[2,8,32], index: 0, kind: input, shape index: {}]
  %s1 = inlined_call_operand.hbm [shape: f32[32,96], index: 1, kind: input, shape index: {}]
  %s2 = inlined_call_operand.vmem [shape: f32[1,96], index: 2, kind: input, shape index: {}]
  %s3 = inlined_call_operand.hbm [shape: f32[32,32], index: 3, kind: input, shape index: {}]
  %s4 = inlined_call_operand.vmem [shape: f32[1,32], index: 4, kind: input, shape index: {}]
  %s5 = inlined_call_operand.vmem [shape: f32[1,32], index: 5, kind: input, shape index: {}]
  %s6 = inlined_call_operand.hbm [shape: f32[1,32], index: 6, kind: input, shape index: {}]
  %s7 = inlined_call_operand.hbm [shape: f32[2,8,32], index: 7, kind: output, shape index: {}]
  %s8 = sld [smem:[#allocation0]]
  $region54: #{sa_forward.1} parent=0
    _
  %s10 = ssub.s32 1, %s8
  %s11 = scalar_select 0, %s10, %s8
  $region1: #{sa_forward.1} parent=0
    #allocation4 [shape = 'u8[8192]{0}', space=vmem, size = 0x2000, scoped, tag = 'input window, operand 0, single buffered']
    #allocation5 [shape = 's32[1]{0}', space=sflag, size = 0x4, scoped, tag = 'scoped memory for sa_forward.1']
    #allocation6 [shape = 's32[1]{0}', space=sflag, size = 0x4, scoped, tag = 'scoped memory for sa_forward.1']
    #allocation7 [shape = 'u8[16384]{0}', space=vmem, size = 0x4000, scoped, tag = 'input window, operand 1, single buffered']
    #allocation8 [shape = 's32[1]{0}', space=sflag, size = 0x4, scoped, tag = 'scoped memory for sa_forward.1']
    #allocation9 [shape = 'u8[16384]{0}', space=vmem, size = 0x4000, scoped, tag = 'input window, operand 3, single buffered']
    #allocation10 [shape = 'u8[512]{0}', space=vmem, size = 0x400, scoped, tag = 'input window, operand 6, single buffered']
    #allocation11 [shape = 's32[1]{0}', space=sflag, size = 0x4, scoped, tag = 'scoped memory for sa_forward.1']
    #allocation12 [shape = 'u8[8192]{0}', space=vmem, size = 0x2000, scoped, tag = 'output window, operand 0, single buffered']
    %12 = vsyncpa [#allocation5], 0
    %13 = vsyncpa [#allocation8], 0
    %14 = vsyncpa [#allocation11], 0
    %15 = vsyncpa [#allocation6], 0
    // Predicated region
    $region2: #{sa_forward.1} parent=1 // pred_check
      _
    $region3: #{sa_forward.1} parent=1 // pred_check_branch
      %17 = sbr.rel (0) target = $region5
    $region4: #{sa_forward.1} parent=1 // pred_region
      %s19 = ssub.s32 256, 256
      %20 = vsyncadd [#allocation5], %s19
      %s21 = sshll.u32 [#allocation4], 4
      %s22 = int_to_ptr.vmem [resolvable:$true] %s21
      %27 = dma.hbm_to_vmem [thread:$0]  %s0, 256, %s22, [#allocation5], 128, 128, 8
    $region5: #{sa_forward.1} parent=1 // pred_fallthru
      _
    // Predicated region
    $region6: #{sa_forward.1} parent=1 // pred_check
      _
    $region7: #{sa_forward.1} parent=1 // pred_check_branch
      %29 = sbr.rel (0) target = $region9
    $region8: #{sa_forward.1} parent=1 // pred_region
      %s31 = ssub.s32 512, 512
      %32 = vsyncadd [#allocation8], %s31
      %s33 = sshll.u32 [#allocation7], 4
      %s34 = int_to_ptr.vmem [resolvable:$true] %s33
      %39 = dma.hbm_to_vmem [thread:$0]  %s1, 512, %s34, [#allocation8], 128, 128, 8
    $region9: #{sa_forward.1} parent=1 // pred_fallthru
      _
    // Predicated region
    $region10: #{sa_forward.1} parent=1 // pred_check
      _
    $region11: #{sa_forward.1} parent=1 // pred_check_branch
      %41 = sbr.rel (0) target = $region13
    $region12: #{sa_forward.1} parent=1 // pred_region
      _
    $region13: #{sa_forward.1} parent=1 // pred_fallthru
      _
    // Predicated region
    $region14: #{sa_forward.1} parent=1 // pred_check
      _
    $region15: #{sa_forward.1} parent=1 // pred_check_branch
      %43 = sbr.rel (0) target = $region17
    $region16: #{sa_forward.1} parent=1 // pred_region
      %s45 = ssub.s32 512, 512
      %46 = vsyncadd [#allocation8], %s45
      %s47 = sshll.u32 [#allocation9], 4
      %s48 = int_to_ptr.vmem [resolvable:$true] %s47
      %53 = dma.hbm_to_vmem [thread:$0]  %s3, 512, %s48, [#allocation8], 128, 128, 8
    $region17: #{sa_forward.1} parent=1 // pred_fallthru
      _
    // Predicated region
    $region18: #{sa_forward.1} parent=1 // pred_check
      _
    $region19: #{sa_forward.1} parent=1 // pred_check_branch
      %55 = sbr.rel (0) target = $region21
    $region20: #{sa_forward.1} parent=1 // pred_region
      _
    $region21: #{sa_forward.1} parent=1 // pred_fallthru
      _
    // Predicated region
    $region22: #{sa_forward.1} parent=1 // pred_check
      _
    $region23: #{sa_forward.1} parent=1 // pred_check_branch
      %57 = sbr.rel (0) target = $region25
    $region24: #{sa_forward.1} parent=1 // pred_region
      _
    $region25: #{sa_forward.1} parent=1 // pred_fallthru
      _
    // Predicated region
    $region26: #{sa_forward.1} parent=1 // pred_check
      _
    $region27: #{sa_forward.1} parent=1 // pred_check_branch
      %59 = sbr.rel (0) target = $region29
    $region28: #{sa_forward.1} parent=1 // pred_region
      %s61 = ssub.s32 16, 16
      %62 = vsyncadd [#allocation11], %s61
      %s64 = sshll.u32 [#allocation10], 4
      %s65 = int_to_ptr.vmem [resolvable:$true] %s64
      %67 = dma.hbm_to_vmem [thread:$0]  %s6, 16, %s65, [#allocation11]
    $region29: #{sa_forward.1} parent=1 // pred_fallthru
      _
    // Predicated region
    $region30: #{sa_forward.1} parent=1 // pred_check
      _
    $region31: #{sa_forward.1} parent=1 // pred_check_branch
      %69 = sbr.rel (0) target = $region33
    $region32: #{sa_forward.1} parent=1 // pred_region
      %70 = dma.done [#allocation5], 256
    $region33: #{sa_forward.1} parent=1 // pred_fallthru
      _
    // Predicated region
    $region34: #{sa_forward.1} parent=1 // pred_check
      _
    $region35: #{sa_forward.1} parent=1 // pred_check_branch
      %72 = sbr.rel (0) target = $region37
    $region36: #{sa_forward.1} parent=1 // pred_region
      %73 = dma.done [#allocation8], 512
    $region37: #{sa_forward.1} parent=1 // pred_fallthru
      _
    // Predicated region
    $region38: #{sa_forward.1} parent=1 // pred_check
      _
    $region39: #{sa_forward.1} parent=1 // pred_check_branch
      %75 = sbr.rel (0) target = $region41
    $region40: #{sa_forward.1} parent=1 // pred_region
      %76 = dma.done [#allocation8], 512
    $region41: #{sa_forward.1} parent=1 // pred_fallthru
      _
    // Predicated region
    $region42: #{sa_forward.1} parent=1 // pred_check
      _
    $region43: #{sa_forward.1} parent=1 // pred_check_branch
      %78 = sbr.rel (0) target = $region45
    $region44: #{sa_forward.1} parent=1 // pred_region
      %79 = dma.done [#allocation11], 16
    $region45: #{sa_forward.1} parent=1 // pred_fallthru
      _
    %v80 = vld [vmem:[#allocation4] sm:$0xff]
    %v81 = vld [vmem:[#allocation4 + $0x8] sm:$0xff]
    %v82 = vld [vmem:[#allocation7] sm:$0xff]
    %v83 = vld [vmem:[#allocation7 + $0x8] sm:$0xff]
    %v84 = vld [vmem:[#allocation7 + $0x10] sm:$0xff]
    %v85 = vld [vmem:[#allocation7 + $0x18] sm:$0xff]
    %v86 = vld [vmem:[%s2] sm:$0x1]
    %v88 = vlaneseq
    %v89 = vshrl.u32 %v88, 7
    %v90 = vsub.s32 0, %v89
    %v91 = vrot.slane %v86, %v90
    %vm93 = vcmask 261120
    %v95 = vsel %vm93, %v80, 0
    %v98 = vsel %vm93, %v81, 0
    %100 = vmatprep.subr.mxu0 0.0
    %101 = vmatpush1.msra.mxu0 %v82
    %102 = vmatprep.subr.mxu0 0.0
    %103 = vmatpush1.msra.mxu0 %v83
    %104 = vmatprep.subr.mxu0 0.0
    %105 = vmatpush1.msra.mxu0 %v84
    %106 = vmatprep.subr.mxu0 0.0
    %107 = vmatpush1.msra.mxu0 %v85
    %108 = vmatprep.subr.mxu0 0.0
    %109 = vmatpush1.msra.mxu0 0.0
    %110 = vmatprep.subr.mxu0 0.0
    %111 = vmatpush1.msra.mxu0 0.0
    %112 = vmatprep.subr.mxu0 0.0
    %113 = vmatpush1.msra.mxu0 0.0
    %114 = vmatprep.subr.mxu0 0.0
    %115 = vmatpush1.msra.mxu0 0.0
    %116 = vmatprep.subr.mxu0 0.0
    %117 = vmatpush1.msra.mxu0 0.0
    %118 = vmatprep.subr.mxu0 0.0
    %119 = vmatpush1.msra.mxu0 0.0
    %120 = vmatprep.subr.mxu0 0.0
    %121 = vmatpush1.msra.mxu0 0.0
    %122 = vmatprep.subr.mxu0 0.0
    %123 = vmatpush1.msra.mxu0 0.0
    %124 = vmatprep.subr.mxu0 0.0
    %125 = vmatpush1.msra.mxu0 0.0
    %126 = vmatprep.subr.mxu0 0.0
    %127 = vmatpush1.msra.mxu0 0.0
    %128 = vmatprep.subr.mxu0 0.0
    %129 = vmatpush1.msra.mxu0 0.0
    %130 = vmatprep.subr.mxu0 0.0
    %131 = vmatpush1.msra.mxu0 0.0
    %132 = vmatprep.subr.mxu0 0.0
    %133 = vmatpush1.msra.mxu0 0.0
    %134 = vmatprep.subr.mxu0 0.0
    %135 = vmatpush1.msra.mxu0 0.0
    %136 = vmatprep.subr.mxu0 0.0
    %137 = vmatpush1.msra.mxu0 0.0
    %138 = vmatprep.subr.mxu0 0.0
    %139 = vmatpush1.msra.mxu0 0.0
    %140 = vmatprep.subr.mxu0 0.0
    %141 = vmatpush1.msra.mxu0 0.0
    %142 = vmatprep.subr.mxu0 0.0
    %143 = vmatpush1.msra.mxu0 0.0
    %144 = vmatprep.subr.mxu0 0.0
    %145 = vmatpush1.msra.mxu0 0.0
    %146 = vmatprep.subr.mxu0 0.0
    %147 = vmatpush1.msra.mxu0 0.0
    %148 = vmatprep.subr.mxu0 0.0
    %149 = vmatpush1.msra.mxu0 0.0
    %150 = vmatprep.subr.mxu0 0.0
    %151 = vmatpush1.msra.mxu0 0.0
    %152 = vmatprep.subr.mxu0 0.0
    %153 = vmatpush1.msra.mxu0 0.0
    %154 = vmatprep.subr.mxu0 0.0
    %155 = vmatpush1.msra.mxu0 0.0
    %156 = vmatprep.subr.mxu0 0.0
    %157 = vmatpush1.msra.mxu0 0.0
    %158 = vmatprep.subr.mxu0 0.0
    %159 = vmatpush1.msra.mxu0 0.0
    %160 = vmatprep.subr.mxu0 0.0
    %161 = vmatpush1.msra.mxu0 0.0
    %162 = vmatprep.subr.mxu0 0.0
    %163 = vmatpush1.msra.mxu0 0.0
    %164 = vmatprep.mubr.f32.mxu0 0.0
    %165 = vmatmul.mubr.f32.gmra.mrb[0].mxu0 %v95
    %v166 = vpop.f32.mrb[0].mxu0
    %v167 = vadd.f32 %v91, %v166
    %v168 = vpop.f32.mrb[0].mxu0
    %169 = vmatprep.mubr.f32.mxu0 0.0
    %170 = vmatmul.mubr.f32.gmra.mrb[0].mxu0 %v98
    %v171 = vpop.f32.mrb[0].mxu0
    %v172 = vadd.f32 %v91, %v171
    %v173 = vpop.f32.mrb[0].mxu0
    %174 = vdwg.mxu0
    %vm175 = vcmask 785408
    %176 = vst.msk [vmem:[#allocation2] sm:$0xff] %vm175, %v167
    %177 = vst.msk [vmem:[#allocation2 + $0x8] sm:$0xff] %vm175, %v172
    %v178 = vld [vmem:[#allocation2] sm:$0xff]
    %v179 = vld [vmem:[#allocation2 + $0x8] sm:$0xff]
    %181 = vrot.lane.b32.xlu0 %v178, 96
    %v182 = vpop.permute.xlu0 %181
    %vm183 = vcmask 64512
    %v184 = vsel %vm183, %v178, 0
    %v186 = vsel %vm183, %v182, 0
    %188 = vmatprep.subr.mxu0 0.0
    %189 = vmatpush1.xpose.msra.mxu0 %v186
    %190 = vmatprep.subr.mxu0 0.0
    %191 = vmatpush1.xpose.msra.mxu0 0.0
    %192 = vmatprep.subr.mxu0 0.0
    %193 = vmatpush1.xpose.msra.mxu0 0.0
    %194 = vmatprep.subr.mxu0 0.0
    %195 = vmatpush1.xpose.msra.mxu0 0.0
    %196 = vmatprep.subr.mxu0 0.0
    %197 = vmatpush1.xpose.msra.mxu0 0.0
    %198 = vmatprep.subr.mxu0 0.0
    %199 = vmatpush1.xpose.msra.mxu0 0.0
    %200 = vmatprep.subr.mxu0 0.0
    %201 = vmatpush1.xpose.msra.mxu0 0.0
    %202 = vmatprep.subr.mxu0 0.0
    %203 = vmatpush1.xpose.msra.mxu0 0.0
    %204 = vmatprep.subr.mxu0 0.0
    %205 = vmatpush1.xpose.msra.mxu0 0.0
    %206 = vmatprep.subr.mxu0 0.0
    %207 = vmatpush1.xpose.msra.mxu0 0.0
    %208 = vmatprep.subr.mxu0 0.0
    %209 = vmatpush1.xpose.msra.mxu0 0.0
    %210 = vmatprep.subr.mxu0 0.0
    %211 = vmatpush1.xpose.msra.mxu0 0.0
    %212 = vmatprep.subr.mxu0 0.0
    %213 = vmatpush1.xpose.msra.mxu0 0.0
    %214 = vmatprep.subr.mxu0 0.0
    %215 = vmatpush1.xpose.msra.mxu0 0.0
    %216 = vmatprep.subr.mxu0 0.0
    %217 = vmatpush1.xpose.msra.mxu0 0.0
    %218 = vmatprep.subr.mxu0 0.0
    %219 = vmatpush1.xpose.msra.mxu0 0.0
    %220 = vmatprep.subr.mxu0 0.0
    %221 = vmatpush1.xpose.msra.mxu0 0.0
    %222 = vmatprep.subr.mxu0 0.0
    %223 = vmatpush1.xpose.msra.mxu0 0.0
    %224 = vmatprep.subr.mxu0 0.0
    %225 = vmatpush1.xpose.msra.mxu0 0.0
    %226 = vmatprep.subr.mxu0 0.0
    %227 = vmatpush1.xpose.msra.mxu0 0.0
    %228 = vmatprep.subr.mxu0 0.0
    %229 = vmatpush1.xpose.msra.mxu0 0.0
    %230 = vmatprep.subr.mxu0 0.0
    %231 = vmatpush1.xpose.msra.mxu0 0.0
    %232 = vmatprep.subr.mxu0 0.0
    %233 = vmatpush1.xpose.msra.mxu0 0.0
    %234 = vmatprep.subr.mxu0 0.0
    %235 = vmatpush1.xpose.msra.mxu0 0.0
    %236 = vmatprep.subr.mxu0 0.0
    %237 = vmatpush1.xpose.msra.mxu0 0.0
    %238 = vmatprep.subr.mxu0 0.0
    %239 = vmatpush1.xpose.msra.mxu0 0.0
    %240 = vmatprep.subr.mxu0 0.0
    %241 = vmatpush1.xpose.msra.mxu0 0.0
    %242 = vmatprep.subr.mxu0 0.0
    %243 = vmatpush1.xpose.msra.mxu0 0.0
    %244 = vmatprep.subr.mxu0 0.0
    %245 = vmatpush1.xpose.msra.mxu0 0.0
    %246 = vmatprep.subr.mxu0 0.0
    %247 = vmatpush1.xpose.msra.mxu0 0.0
    %248 = vmatprep.subr.mxu0 0.0
    %249 = vmatpush1.xpose.msra.mxu0 0.0
    %250 = vmatprep.subr.mxu0 0.0
    %251 = vmatpush1.xpose.msra.mxu0 0.0
    %252 = vmatprep.mubr.f32.mxu0 0.0
    %253 = vmatmul.mubr.f32.gmra.mrb[0].mxu0 %v184
    %v254 = vpop.f32.mrb[0].mxu0
    %v255 = vadd.f32 0.0, %v254
    %v256 = vpop.f32.mrb[0].mxu0
    %257 = vdwg.mxu0
    %259 = vrot.lane.b32.xlu0 %v179, 96
    %v260 = vpop.permute.xlu0 %259
    %v261 = vsel %vm183, %v179, 0
    %v263 = vsel %vm183, %v260, 0
    %265 = vmatprep.subr.mxu0 0.0
    %266 = vmatpush1.xpose.msra.mxu0 %v263
    %267 = vmatprep.subr.mxu0 0.0
    %268 = vmatpush1.xpose.msra.mxu0 0.0
    %269 = vmatprep.subr.mxu0 0.0
    %270 = vmatpush1.xpose.msra.mxu0 0.0
    %271 = vmatprep.subr.mxu0 0.0
    %272 = vmatpush1.xpose.msra.mxu0 0.0
    %273 = vmatprep.subr.mxu0 0.0
    %274 = vmatpush1.xpose.msra.mxu0 0.0
    %275 = vmatprep.subr.mxu0 0.0
    %276 = vmatpush1.xpose.msra.mxu0 0.0
    %277 = vmatprep.subr.mxu0 0.0
    %278 = vmatpush1.xpose.msra.mxu0 0.0
    %279 = vmatprep.subr.mxu0 0.0
    %280 = vmatpush1.xpose.msra.mxu0 0.0
    %281 = vmatprep.subr.mxu0 0.0
    %282 = vmatpush1.xpose.msra.mxu0 0.0
    %283 = vmatprep.subr.mxu0 0.0
    %284 = vmatpush1.xpose.msra.mxu0 0.0
    %285 = vmatprep.subr.mxu0 0.0
    %286 = vmatpush1.xpose.msra.mxu0 0.0
    %287 = vmatprep.subr.mxu0 0.0
    %288 = vmatpush1.xpose.msra.mxu0 0.0
    %289 = vmatprep.subr.mxu0 0.0
    %290 = vmatpush1.xpose.msra.mxu0 0.0
    %291 = vmatprep.subr.mxu0 0.0
    %292 = vmatpush1.xpose.msra.mxu0 0.0
    %293 = vmatprep.subr.mxu0 0.0
    %294 = vmatpush1.xpose.msra.mxu0 0.0
    %295 = vmatprep.subr.mxu0 0.0
    %296 = vmatpush1.xpose.msra.mxu0 0.0
    %297 = vmatprep.subr.mxu0 0.0
    %298 = vmatpush1.xpose.msra.mxu0 0.0
    %299 = vmatprep.subr.mxu0 0.0
    %300 = vmatpush1.xpose.msra.mxu0 0.0
    %301 = vmatprep.subr.mxu0 0.0
    %302 = vmatpush1.xpose.msra.mxu0 0.0
    %303 = vmatprep.subr.mxu0 0.0
    %304 = vmatpush1.xpose.msra.mxu0 0.0
    %305 = vmatprep.subr.mxu0 0.0
    %306 = vmatpush1.xpose.msra.mxu0 0.0
    %307 = vmatprep.subr.mxu0 0.0
    %308 = vmatpush1.xpose.msra.mxu0 0.0
    %309 = vmatprep.subr.mxu0 0.0
    %310 = vmatpush1.xpose.msra.mxu0 0.0
    %311 = vmatprep.subr.mxu0 0.0
    %312 = vmatpush1.xpose.msra.mxu0 0.0
    %313 = vmatprep.subr.mxu0 0.0
    %314 = vmatpush1.xpose.msra.mxu0 0.0
    %315 = vmatprep.subr.mxu0 0.0
    %316 = vmatpush1.xpose.msra.mxu0 0.0
    %317 = vmatprep.subr.mxu0 0.0
    %318 = vmatpush1.xpose.msra.mxu0 0.0
    %319 = vmatprep.subr.mxu0 0.0
    %320 = vmatpush1.xpose.msra.mxu0 0.0
    %321 = vmatprep.subr.mxu0 0.0
    %322 = vmatpush1.xpose.msra.mxu0 0.0
    %323 = vmatprep.subr.mxu0 0.0
    %324 = vmatpush1.xpose.msra.mxu0 0.0
    %325 = vmatprep.subr.mxu0 0.0
    %326 = vmatpush1.xpose.msra.mxu0 0.0
    %327 = vmatprep.subr.mxu0 0.0
    %328 = vmatpush1.xpose.msra.mxu0 0.0
    %329 = vmatprep.mubr.f32.mxu0 0.0
    %330 = vmatmul.mubr.f32.gmra.mrb[0].mxu0 %v261
    %v331 = vpop.f32.mrb[0].mxu0
    %v332 = vadd.f32 0.0, %v331
    %v333 = vpop.f32.mrb[0].mxu0
    %334 = vdwg.mxu0
    %v335 = vmul.f32 %v255, 0.35355338
    %v336 = vmul.f32 %v332, 0.35355338
    %v337 = vsel %vm183, %v335, -inf
    %338 = vmax.xlane.f32.xlu0 %v337
    %v339 = vpop.xlane.xlu0 %338
    %v340 = vsel %vm183, %v336, -inf
    %341 = vmax.xlane.f32.xlu0 %v340
    %v342 = vpop.xlane.xlu0 %341
    %v343 = vsub.f32 %v335, %v339
    %v344 = vsub.f32 %v336, %v342
    %v345 = vmul.f32 %v343, 1.442695
    %v346 = vpow.pop %v345
    %v347 = vmul.f32 %v344, 1.442695
    %v348 = vpow.pop %v347
    %v349 = vsel %vm183, %v346, 0.0
    %350 = vadd.xlane.f32.xlu0 %v349
    %v351 = vpop.xlane.xlu0 %350
    %v352 = vsel %vm183, %v348, 0.0
    %353 = vadd.xlane.f32.xlu0 %v352
    %v354 = vpop.xlane.xlu0 %353
    %v355 = vrcp.pop %v351
    %v356 = vrcp.pop %v354
    %v357 = vmul.f32 %v346, %v355
    %v358 = vmul.f32 %v348, %v356
    %359 = vrot.lane.b32.xlu0 %v178, 64
    %v360 = vpop.permute.xlu0 %359
    %v363 = vsel %vm183, %v357, 0
    %365 = vmatprep.subr.mxu0 0.0
    %366 = vmatpush1.msra.mxu0 %v360
    %367 = vmatprep.subr.mxu0 0.0
    %368 = vmatpush1.msra.mxu0 0.0
    %369 = vmatprep.subr.mxu0 0.0
    %370 = vmatpush1.msra.mxu0 0.0
    %371 = vmatprep.subr.mxu0 0.0
    %372 = vmatpush1.msra.mxu0 0.0
    %373 = vmatprep.subr.mxu0 0.0
    %374 = vmatpush1.msra.mxu0 0.0
    %375 = vmatprep.subr.mxu0 0.0
    %376 = vmatpush1.msra.mxu0 0.0
    %377 = vmatprep.subr.mxu0 0.0
    %378 = vmatpush1.msra.mxu0 0.0
    %379 = vmatprep.subr.mxu0 0.0
    %380 = vmatpush1.msra.mxu0 0.0
    %381 = vmatprep.subr.mxu0 0.0
    %382 = vmatpush1.msra.mxu0 0.0
    %383 = vmatprep.subr.mxu0 0.0
    %384 = vmatpush1.msra.mxu0 0.0
    %385 = vmatprep.subr.mxu0 0.0
    %386 = vmatpush1.msra.mxu0 0.0
    %387 = vmatprep.subr.mxu0 0.0
    %388 = vmatpush1.msra.mxu0 0.0
    %389 = vmatprep.subr.mxu0 0.0
    %390 = vmatpush1.msra.mxu0 0.0
    %391 = vmatprep.subr.mxu0 0.0
    %392 = vmatpush1.msra.mxu0 0.0
    %393 = vmatprep.subr.mxu0 0.0
    %394 = vmatpush1.msra.mxu0 0.0
    %395 = vmatprep.subr.mxu0 0.0
    %396 = vmatpush1.msra.mxu0 0.0
    %397 = vmatprep.subr.mxu0 0.0
    %398 = vmatpush1.msra.mxu0 0.0
    %399 = vmatprep.subr.mxu0 0.0
    %400 = vmatpush1.msra.mxu0 0.0
    %401 = vmatprep.subr.mxu0 0.0
    %402 = vmatpush1.msra.mxu0 0.0
    %403 = vmatprep.subr.mxu0 0.0
    %404 = vmatpush1.msra.mxu0 0.0
    %405 = vmatprep.subr.mxu0 0.0
    %406 = vmatpush1.msra.mxu0 0.0
    %407 = vmatprep.subr.mxu0 0.0
    %408 = vmatpush1.msra.mxu0 0.0
    %409 = vmatprep.subr.mxu0 0.0
    %410 = vmatpush1.msra.mxu0 0.0
    %411 = vmatprep.subr.mxu0 0.0
    %412 = vmatpush1.msra.mxu0 0.0
    %413 = vmatprep.subr.mxu0 0.0
    %414 = vmatpush1.msra.mxu0 0.0
    %415 = vmatprep.subr.mxu0 0.0
    %416 = vmatpush1.msra.mxu0 0.0
    %417 = vmatprep.subr.mxu0 0.0
    %418 = vmatpush1.msra.mxu0 0.0
    %419 = vmatprep.subr.mxu0 0.0
    %420 = vmatpush1.msra.mxu0 0.0
    %421 = vmatprep.subr.mxu0 0.0
    %422 = vmatpush1.msra.mxu0 0.0
    %423 = vmatprep.subr.mxu0 0.0
    %424 = vmatpush1.msra.mxu0 0.0
    %425 = vmatprep.subr.mxu0 0.0
    %426 = vmatpush1.msra.mxu0 0.0
    %427 = vmatprep.subr.mxu0 0.0
    %428 = vmatpush1.msra.mxu0 0.0
    %429 = vmatprep.mubr.f32.mxu0 0.0
    %430 = vmatmul.mubr.f32.gmra.mrb[0].mxu0 %v363
    %v431 = vpop.f32.mrb[0].mxu0
    %v432 = vadd.f32 0.0, %v431
    %v433 = vpop.f32.mrb[0].mxu0
    %434 = vdwg.mxu0
    %435 = vrot.lane.b32.xlu0 %v179, 64
    %v436 = vpop.permute.xlu0 %435
    %v439 = vsel %vm183, %v358, 0
    %441 = vmatprep.subr.mxu0 0.0
    %442 = vmatpush1.msra.mxu0 %v436
    %443 = vmatprep.subr.mxu0 0.0
    %444 = vmatpush1.msra.mxu0 0.0
    %445 = vmatprep.subr.mxu0 0.0
    %446 = vmatpush1.msra.mxu0 0.0
    %447 = vmatprep.subr.mxu0 0.0
    %448 = vmatpush1.msra.mxu0 0.0
    %449 = vmatprep.subr.mxu0 0.0
    %450 = vmatpush1.msra.mxu0 0.0
    %451 = vmatprep.subr.mxu0 0.0
    %452 = vmatpush1.msra.mxu0 0.0
    %453 = vmatprep.subr.mxu0 0.0
    %454 = vmatpush1.msra.mxu0 0.0
    %455 = vmatprep.subr.mxu0 0.0
    %456 = vmatpush1.msra.mxu0 0.0
    %457 = vmatprep.subr.mxu0 0.0
    %458 = vmatpush1.msra.mxu0 0.0
    %459 = vmatprep.subr.mxu0 0.0
    %460 = vmatpush1.msra.mxu0 0.0
    %461 = vmatprep.subr.mxu0 0.0
    %462 = vmatpush1.msra.mxu0 0.0
    %463 = vmatprep.subr.mxu0 0.0
    %464 = vmatpush1.msra.mxu0 0.0
    %465 = vmatprep.subr.mxu0 0.0
    %466 = vmatpush1.msra.mxu0 0.0
    %467 = vmatprep.subr.mxu0 0.0
    %468 = vmatpush1.msra.mxu0 0.0
    %469 = vmatprep.subr.mxu0 0.0
    %470 = vmatpush1.msra.mxu0 0.0
    %471 = vmatprep.subr.mxu0 0.0
    %472 = vmatpush1.msra.mxu0 0.0
    %473 = vmatprep.subr.mxu0 0.0
    %474 = vmatpush1.msra.mxu0 0.0
    %475 = vmatprep.subr.mxu0 0.0
    %476 = vmatpush1.msra.mxu0 0.0
    %477 = vmatprep.subr.mxu0 0.0
    %478 = vmatpush1.msra.mxu0 0.0
    %479 = vmatprep.subr.mxu0 0.0
    %480 = vmatpush1.msra.mxu0 0.0
    %481 = vmatprep.subr.mxu0 0.0
    %482 = vmatpush1.msra.mxu0 0.0
    %483 = vmatprep.subr.mxu0 0.0
    %484 = vmatpush1.msra.mxu0 0.0
    %485 = vmatprep.subr.mxu0 0.0
    %486 = vmatpush1.msra.mxu0 0.0
    %487 = vmatprep.subr.mxu0 0.0
    %488 = vmatpush1.msra.mxu0 0.0
    %489 = vmatprep.subr.mxu0 0.0
    %490 = vmatpush1.msra.mxu0 0.0
    %491 = vmatprep.subr.mxu0 0.0
    %492 = vmatpush1.msra.mxu0 0.0
    %493 = vmatprep.subr.mxu0 0.0
    %494 = vmatpush1.msra.mxu0 0.0
    %495 = vmatprep.subr.mxu0 0.0
    %496 = vmatpush1.msra.mxu0 0.0
    %497 = vmatprep.subr.mxu0 0.0
    %498 = vmatpush1.msra.mxu0 0.0
    %499 = vmatprep.subr.mxu0 0.0
    %500 = vmatpush1.msra.mxu0 0.0
    %501 = vmatprep.subr.mxu0 0.0
    %502 = vmatpush1.msra.mxu0 0.0
    %503 = vmatprep.subr.mxu0 0.0
    %504 = vmatpush1.msra.mxu0 0.0
    %505 = vmatprep.mubr.f32.mxu0 0.0
    %506 = vmatmul.mubr.f32.gmra.mrb[0].mxu0 %v439
    %v507 = vpop.f32.mrb[0].mxu0
    %v508 = vadd.f32 0.0, %v507
    %v509 = vpop.f32.mrb[0].mxu0
    %510 = vdwg.mxu0
    %v511 = vld [vmem:[#allocation9] sm:$0xff]
    %v513 = vsel %vm183, %v432, 0
    %v516 = vsel %vm183, %v508, 0
    %518 = vmatprep.subr.mxu0 0.0
    %519 = vmatpush1.msra.mxu0 %v511
    %520 = vmatprep.subr.mxu0 0.0
    %521 = vmatpush1.msra.mxu0 0.0
    %522 = vmatprep.subr.mxu0 0.0
    %523 = vmatpush1.msra.mxu0 0.0
    %524 = vmatprep.subr.mxu0 0.0
    %525 = vmatpush1.msra.mxu0 0.0
    %526 = vmatprep.subr.mxu0 0.0
    %527 = vmatpush1.msra.mxu0 0.0
    %528 = vmatprep.subr.mxu0 0.0
    %529 = vmatpush1.msra.mxu0 0.0
    %530 = vmatprep.subr.mxu0 0.0
    %531 = vmatpush1.msra.mxu0 0.0
    %532 = vmatprep.subr.mxu0 0.0
    %533 = vmatpush1.msra.mxu0 0.0
    %534 = vmatprep.subr.mxu0 0.0
    %535 = vmatpush1.msra.mxu0 0.0
    %536 = vmatprep.subr.mxu0 0.0
    %537 = vmatpush1.msra.mxu0 0.0
    %538 = vmatprep.subr.mxu0 0.0
    %539 = vmatpush1.msra.mxu0 0.0
    %540 = vmatprep.subr.mxu0 0.0
    %541 = vmatpush1.msra.mxu0 0.0
    %542 = vmatprep.subr.mxu0 0.0
    %543 = vmatpush1.msra.mxu0 0.0
    %544 = vmatprep.subr.mxu0 0.0
    %545 = vmatpush1.msra.mxu0 0.0
    %546 = vmatprep.subr.mxu0 0.0
    %547 = vmatpush1.msra.mxu0 0.0
    %548 = vmatprep.subr.mxu0 0.0
    %549 = vmatpush1.msra.mxu0 0.0
    %550 = vmatprep.subr.mxu0 0.0
    %551 = vmatpush1.msra.mxu0 0.0
    %552 = vmatprep.subr.mxu0 0.0
    %553 = vmatpush1.msra.mxu0 0.0
    %554 = vmatprep.subr.mxu0 0.0
    %555 = vmatpush1.msra.mxu0 0.0
    %556 = vmatprep.subr.mxu0 0.0
    %557 = vmatpush1.msra.mxu0 0.0
    %558 = vmatprep.subr.mxu0 0.0
    %559 = vmatpush1.msra.mxu0 0.0
    %560 = vmatprep.subr.mxu0 0.0
    %561 = vmatpush1.msra.mxu0 0.0
    %562 = vmatprep.subr.mxu0 0.0
    %563 = vmatpush1.msra.mxu0 0.0
    %564 = vmatprep.subr.mxu0 0.0
    %565 = vmatpush1.msra.mxu0 0.0
    %566 = vmatprep.subr.mxu0 0.0
    %567 = vmatpush1.msra.mxu0 0.0
    %568 = vmatprep.subr.mxu0 0.0
    %569 = vmatpush1.msra.mxu0 0.0
    %570 = vmatprep.subr.mxu0 0.0
    %571 = vmatpush1.msra.mxu0 0.0
    %572 = vmatprep.subr.mxu0 0.0
    %573 = vmatpush1.msra.mxu0 0.0
    %574 = vmatprep.subr.mxu0 0.0
    %575 = vmatpush1.msra.mxu0 0.0
    %576 = vmatprep.subr.mxu0 0.0
    %577 = vmatpush1.msra.mxu0 0.0
    %578 = vmatprep.subr.mxu0 0.0
    %579 = vmatpush1.msra.mxu0 0.0
    %580 = vmatprep.subr.mxu0 0.0
    %581 = vmatpush1.msra.mxu0 0.0
    %582 = vmatprep.mubr.f32.mxu0 0.0
    %583 = vmatmul.mubr.f32.gmra.mrb[0].mxu0 %v513
    %v584 = vpop.f32.mrb[0].mxu0
    %v585 = vadd.f32 0.0, %v584
    %v586 = vpop.f32.mrb[0].mxu0
    %587 = vmatprep.mubr.f32.mxu0 0.0
    %588 = vmatmul.mubr.f32.gmra.mrb[0].mxu0 %v516
    %v589 = vpop.f32.mrb[0].mxu0
    %v590 = vadd.f32 0.0, %v589
    %v591 = vpop.f32.mrb[0].mxu0
    %592 = vdwg.mxu0
    %593 = vst.msk [vmem:[#allocation3] sm:$0xff] %vm93, %v585
    %594 = vst.msk [vmem:[#allocation3 + $0x8] sm:$0xff] %vm93, %v590
    %v595 = vld [vmem:[#allocation2] sm:$0xff]
    %v596 = vld [vmem:[#allocation2 + $0x8] sm:$0xff]
    %598 = vrot.lane.b32.xlu0 %v595, 120
    %v599 = vpop.permute.xlu0 %598
    %600 = vrot.lane.b32.xlu0 %v595, 88
    %v601 = vpop.permute.xlu0 %600
    %v602 = vsel %vm183, %v599, 0
    %v604 = vsel %vm183, %v601, 0
    %606 = vmatprep.subr.mxu0 0.0
    %607 = vmatpush1.xpose.msra.mxu0 %v604
    %608 = vmatprep.subr.mxu0 0.0
    %609 = vmatpush1.xpose.msra.mxu0 0.0
    %610 = vmatprep.subr.mxu0 0.0
    %611 = vmatpush1.xpose.msra.mxu0 0.0
    %612 = vmatprep.subr.mxu0 0.0
    %613 = vmatpush1.xpose.msra.mxu0 0.0
    %614 = vmatprep.subr.mxu0 0.0
    %615 = vmatpush1.xpose.msra.mxu0 0.0
    %616 = vmatprep.subr.mxu0 0.0
    %617 = vmatpush1.xpose.msra.mxu0 0.0
    %618 = vmatprep.subr.mxu0 0.0
    %619 = vmatpush1.xpose.msra.mxu0 0.0
    %620 = vmatprep.subr.mxu0 0.0
    %621 = vmatpush1.xpose.msra.mxu0 0.0
    %622 = vmatprep.subr.mxu0 0.0
    %623 = vmatpush1.xpose.msra.mxu0 0.0
    %624 = vmatprep.subr.mxu0 0.0
    %625 = vmatpush1.xpose.msra.mxu0 0.0
    %626 = vmatprep.subr.mxu0 0.0
    %627 = vmatpush1.xpose.msra.mxu0 0.0
    %628 = vmatprep.subr.mxu0 0.0
    %629 = vmatpush1.xpose.msra.mxu0 0.0
    %630 = vmatprep.subr.mxu0 0.0
    %631 = vmatpush1.xpose.msra.mxu0 0.0
    %632 = vmatprep.subr.mxu0 0.0
    %633 = vmatpush1.xpose.msra.mxu0 0.0
    %634 = vmatprep.subr.mxu0 0.0
    %635 = vmatpush1.xpose.msra.mxu0 0.0
    %636 = vmatprep.subr.mxu0 0.0
    %637 = vmatpush1.xpose.msra.mxu0 0.0
    %638 = vmatprep.subr.mxu0 0.0
    %639 = vmatpush1.xpose.msra.mxu0 0.0
    %640 = vmatprep.subr.mxu0 0.0
    %641 = vmatpush1.xpose.msra.mxu0 0.0
    %642 = vmatprep.subr.mxu0 0.0
    %643 = vmatpush1.xpose.msra.mxu0 0.0
    %644 = vmatprep.subr.mxu0 0.0
    %645 = vmatpush1.xpose.msra.mxu0 0.0
    %646 = vmatprep.subr.mxu0 0.0
    %647 = vmatpush1.xpose.msra.mxu0 0.0
    %648 = vmatprep.subr.mxu0 0.0
    %649 = vmatpush1.xpose.msra.mxu0 0.0
    %650 = vmatprep.subr.mxu0 0.0
    %651 = vmatpush1.xpose.msra.mxu0 0.0
    %652 = vmatprep.subr.mxu0 0.0
    %653 = vmatpush1.xpose.msra.mxu0 0.0
    %654 = vmatprep.subr.mxu0 0.0
    %655 = vmatpush1.xpose.msra.mxu0 0.0
    %656 = vmatprep.subr.mxu0 0.0
    %657 = vmatpush1.xpose.msra.mxu0 0.0
    %658 = vmatprep.subr.mxu0 0.0
    %659 = vmatpush1.xpose.msra.mxu0 0.0
    %660 = vmatprep.subr.mxu0 0.0
    %661 = vmatpush1.xpose.msra.mxu0 0.0
    %662 = vmatprep.subr.mxu0 0.0
    %663 = vmatpush1.xpose.msra.mxu0 0.0
    %664 = vmatprep.subr.mxu0 0.0
    %665 = vmatpush1.xpose.msra.mxu0 0.0
    %666 = vmatprep.subr.mxu0 0.0
    %667 = vmatpush1.xpose.msra.mxu0 0.0
    %668 = vmatprep.subr.mxu0 0.0
    %669 = vmatpush1.xpose.msra.mxu0 0.0
    %670 = vmatprep.mubr.f32.mxu0 0.0
    %671 = vmatmul.mubr.f32.gmra.mrb[0].mxu0 %v602
    %v672 = vpop.f32.mrb[0].mxu0
    %v673 = vadd.f32 0.0, %v672
    %v674 = vpop.f32.mrb[0].mxu0
    %675 = vdwg.mxu0
    %677 = vrot.lane.b32.xlu0 %v596, 120
    %v678 = vpop.permute.xlu0 %677
    %679 = vrot.lane.b32.xlu0 %v596, 88
    %v680 = vpop.permute.xlu0 %679
    %v681 = vsel %vm183, %v678, 0
    %v683 = vsel %vm183, %v680, 0
    %685 = vmatprep.subr.mxu0 0.0
    %686 = vmatpush1.xpose.msra.mxu0 %v683
    %687 = vmatprep.subr.mxu0 0.0
    %688 = vmatpush1.xpose.msra.mxu0 0.0
    %689 = vmatprep.subr.mxu0 0.0
    %690 = vmatpush1.xpose.msra.mxu0 0.0
    %691 = vmatprep.subr.mxu0 0.0
    %692 = vmatpush1.xpose.msra.mxu0 0.0
    %693 = vmatprep.subr.mxu0 0.0
    %694 = vmatpush1.xpose.msra.mxu0 0.0
    %695 = vmatprep.subr.mxu0 0.0
    %696 = vmatpush1.xpose.msra.mxu0 0.0
    %697 = vmatprep.subr.mxu0 0.0
    %698 = vmatpush1.xpose.msra.mxu0 0.0
    %699 = vmatprep.subr.mxu0 0.0
    %700 = vmatpush1.xpose.msra.mxu0 0.0
    %701 = vmatprep.subr.mxu0 0.0
    %702 = vmatpush1.xpose.msra.mxu0 0.0
    %703 = vmatprep.subr.mxu0 0.0
    %704 = vmatpush1.xpose.msra.mxu0 0.0
    %705 = vmatprep.subr.mxu0 0.0
    %706 = vmatpush1.xpose.msra.mxu0 0.0
    %707 = vmatprep.subr.mxu0 0.0
    %708 = vmatpush1.xpose.msra.mxu0 0.0
    %709 = vmatprep.subr.mxu0 0.0
    %710 = vmatpush1.xpose.msra.mxu0 0.0
    %711 = vmatprep.subr.mxu0 0.0
    %712 = vmatpush1.xpose.msra.mxu0 0.0
    %713 = vmatprep.subr.mxu0 0.0
    %714 = vmatpush1.xpose.msra.mxu0 0.0
    %715 = vmatprep.subr.mxu0 0.0
    %716 = vmatpush1.xpose.msra.mxu0 0.0
    %717 = vmatprep.subr.mxu0 0.0
    %718 = vmatpush1.xpose.msra.mxu0 0.0
    %719 = vmatprep.subr.mxu0 0.0
    %720 = vmatpush1.xpose.msra.mxu0 0.0
    %721 = vmatprep.subr.mxu0 0.0
    %722 = vmatpush1.xpose.msra.mxu0 0.0
    %723 = vmatprep.subr.mxu0 0.0
    %724 = vmatpush1.xpose.msra.mxu0 0.0
    %725 = vmatprep.subr.mxu0 0.0
    %726 = vmatpush1.xpose.msra.mxu0 0.0
    %727 = vmatprep.subr.mxu0 0.0
    %728 = vmatpush1.xpose.msra.mxu0 0.0
    %729 = vmatprep.subr.mxu0 0.0
    %730 = vmatpush1.xpose.msra.mxu0 0.0
    %731 = vmatprep.subr.mxu0 0.0
    %732 = vmatpush1.xpose.msra.mxu0 0.0
    %733 = vmatprep.subr.mxu0 0.0
    %734 = vmatpush1.xpose.msra.mxu0 0.0
    %735 = vmatprep.subr.mxu0 0.0
    %736 = vmatpush1.xpose.msra.mxu0 0.0
    %737 = vmatprep.subr.mxu0 0.0
    %738 = vmatpush1.xpose.msra.mxu0 0.0
    %739 = vmatprep.subr.mxu0 0.0
    %740 = vmatpush1.xpose.msra.mxu0 0.0
    %741 = vmatprep.subr.mxu0 0.0
    %742 = vmatpush1.xpose.msra.mxu0 0.0
    %743 = vmatprep.subr.mxu0 0.0
    %744 = vmatpush1.xpose.msra.mxu0 0.0
    %745 = vmatprep.subr.mxu0 0.0
    %746 = vmatpush1.xpose.msra.mxu0 0.0
    %747 = vmatprep.subr.mxu0 0.0
    %748 = vmatpush1.xpose.msra.mxu0 0.0
    %749 = vmatprep.mubr.f32.mxu0 0.0
    %750 = vmatmul.mubr.f32.gmra.mrb[0].mxu0 %v681
    %v751 = vpop.f32.mrb[0].mxu0
    %v752 = vadd.f32 0.0, %v751
    %v753 = vpop.f32.mrb[0].mxu0
    %754 = vdwg.mxu0
    %v755 = vmul.f32 %v673, 0.35355338
    %v756 = vmul.f32 %v752, 0.35355338
    %v757 = vsel %vm183, %v755, -inf
    %758 = vmax.xlane.f32.xlu0 %v757
    %v759 = vpop.xlane.xlu0 %758
    %v760 = vsel %vm183, %v756, -inf
    %761 = vmax.xlane.f32.xlu0 %v760
    %v762 = vpop.xlane.xlu0 %761
    %v763 = vsub.f32 %v755, %v759
    %v764 = vsub.f32 %v756, %v762
    %v765 = vmul.f32 %v763, 1.442695
    %v766 = vpow.pop %v765
    %v767 = vmul.f32 %v764, 1.442695
    %v768 = vpow.pop %v767
    %v769 = vsel %vm183, %v766, 0.0
    %770 = vadd.xlane.f32.xlu0 %v769
    %v771 = vpop.xlane.xlu0 %770
    %v772 = vsel %vm183, %v768, 0.0
    %773 = vadd.xlane.f32.xlu0 %v772
    %v774 = vpop.xlane.xlu0 %773
    %v775 = vrcp.pop %v771
    %v776 = vrcp.pop %v774
    %v777 = vmul.f32 %v766, %v775
    %v778 = vmul.f32 %v768, %v776
    %779 = vrot.lane.b32.xlu0 %v595, 56
    %v780 = vpop.permute.xlu0 %779
    %v783 = vsel %vm183, %v777, 0
    %785 = vmatprep.subr.mxu0 0.0
    %786 = vmatpush1.msra.mxu0 %v780
    %787 = vmatprep.subr.mxu0 0.0
    %788 = vmatpush1.msra.mxu0 0.0
    %789 = vmatprep.subr.mxu0 0.0
    %790 = vmatpush1.msra.mxu0 0.0
    %791 = vmatprep.subr.mxu0 0.0
    %792 = vmatpush1.msra.mxu0 0.0
    %793 = vmatprep.subr.mxu0 0.0
    %794 = vmatpush1.msra.mxu0 0.0
    %795 = vmatprep.subr.mxu0 0.0
    %796 = vmatpush1.msra.mxu0 0.0
    %797 = vmatprep.subr.mxu0 0.0
    %798 = vmatpush1.msra.mxu0 0.0
    %799 = vmatprep.subr.mxu0 0.0
    %800 = vmatpush1.msra.mxu0 0.0
    %801 = vmatprep.subr.mxu0 0.0
    %802 = vmatpush1.msra.mxu0 0.0
    %803 = vmatprep.subr.mxu0 0.0
    %804 = vmatpush1.msra.mxu0 0.0
    %805 = vmatprep.subr.mxu0 0.0
    %806 = vmatpush1.msra.mxu0 0.0
    %807 = vmatprep.subr.mxu0 0.0
    %808 = vmatpush1.msra.mxu0 0.0
    %809 = vmatprep.subr.mxu0 0.0
    %810 = vmatpush1.msra.mxu0 0.0
    %811 = vmatprep.subr.mxu0 0.0
    %812 = vmatpush1.msra.mxu0 0.0
    %813 = vmatprep.subr.mxu0 0.0
    %814 = vmatpush1.msra.mxu0 0.0
    %815 = vmatprep.subr.mxu0 0.0
    %816 = vmatpush1.msra.mxu0 0.0
    %817 = vmatprep.subr.mxu0 0.0
    %818 = vmatpush1.msra.mxu0 0.0
    %819 = vmatprep.subr.mxu0 0.0
    %820 = vmatpush1.msra.mxu0 0.0
    %821 = vmatprep.subr.mxu0 0.0
    %822 = vmatpush1.msra.mxu0 0.0
    %823 = vmatprep.subr.mxu0 0.0
    %824 = vmatpush1.msra.mxu0 0.0
    %825 = vmatprep.subr.mxu0 0.0
    %826 = vmatpush1.msra.mxu0 0.0
    %827 = vmatprep.subr.mxu0 0.0
    %828 = vmatpush1.msra.mxu0 0.0
    %829 = vmatprep.subr.mxu0 0.0
    %830 = vmatpush1.msra.mxu0 0.0
    %831 = vmatprep.subr.mxu0 0.0
    %832 = vmatpush1.msra.mxu0 0.0
    %833 = vmatprep.subr.mxu0 0.0
    %834 = vmatpush1.msra.mxu0 0.0
    %835 = vmatprep.subr.mxu0 0.0
    %836 = vmatpush1.msra.mxu0 0.0
    %837 = vmatprep.subr.mxu0 0.0
    %838 = vmatpush1.msra.mxu0 0.0
    %839 = vmatprep.subr.mxu0 0.0
    %840 = vmatpush1.msra.mxu0 0.0
    %841 = vmatprep.subr.mxu0 0.0
    %842 = vmatpush1.msra.mxu0 0.0
    %843 = vmatprep.subr.mxu0 0.0
    %844 = vmatpush1.msra.mxu0 0.0
    %845 = vmatprep.subr.mxu0 0.0
    %846 = vmatpush1.msra.mxu0 0.0
    %847 = vmatprep.subr.mxu0 0.0
    %848 = vmatpush1.msra.mxu0 0.0
    %849 = vmatprep.mubr.f32.mxu0 0.0
    %850 = vmatmul.mubr.f32.gmra.mrb[0].mxu0 %v783
    %v851 = vpop.f32.mrb[0].mxu0
    %v852 = vadd.f32 0.0, %v851
    %v853 = vpop.f32.mrb[0].mxu0
    %854 = vdwg.mxu0
    %855 = vrot.lane.b32.xlu0 %v596, 56
    %v856 = vpop.permute.xlu0 %855
    %v859 = vsel %vm183, %v778, 0
    %861 = vmatprep.subr.mxu0 0.0
    %862 = vmatpush1.msra.mxu0 %v856
    %863 = vmatprep.subr.mxu0 0.0
    %864 = vmatpush1.msra.mxu0 0.0
    %865 = vmatprep.subr.mxu0 0.0
    %866 = vmatpush1.msra.mxu0 0.0
    %867 = vmatprep.subr.mxu0 0.0
    %868 = vmatpush1.msra.mxu0 0.0
    %869 = vmatprep.subr.mxu0 0.0
    %870 = vmatpush1.msra.mxu0 0.0
    %871 = vmatprep.subr.mxu0 0.0
    %872 = vmatpush1.msra.mxu0 0.0
    %873 = vmatprep.subr.mxu0 0.0
    %874 = vmatpush1.msra.mxu0 0.0
    %875 = vmatprep.subr.mxu0 0.0
    %876 = vmatpush1.msra.mxu0 0.0
    %877 = vmatprep.subr.mxu0 0.0
    %878 = vmatpush1.msra.mxu0 0.0
    %879 = vmatprep.subr.mxu0 0.0
    %880 = vmatpush1.msra.mxu0 0.0
    %881 = vmatprep.subr.mxu0 0.0
    %882 = vmatpush1.msra.mxu0 0.0
    %883 = vmatprep.subr.mxu0 0.0
    %884 = vmatpush1.msra.mxu0 0.0
    %885 = vmatprep.subr.mxu0 0.0
    %886 = vmatpush1.msra.mxu0 0.0
    %887 = vmatprep.subr.mxu0 0.0
    %888 = vmatpush1.msra.mxu0 0.0
    %889 = vmatprep.subr.mxu0 0.0
    %890 = vmatpush1.msra.mxu0 0.0
    %891 = vmatprep.subr.mxu0 0.0
    %892 = vmatpush1.msra.mxu0 0.0
    %893 = vmatprep.subr.mxu0 0.0
    %894 = vmatpush1.msra.mxu0 0.0
    %895 = vmatprep.subr.mxu0 0.0
    %896 = vmatpush1.msra.mxu0 0.0
    %897 = vmatprep.subr.mxu0 0.0
    %898 = vmatpush1.msra.mxu0 0.0
    %899 = vmatprep.subr.mxu0 0.0
    %900 = vmatpush1.msra.mxu0 0.0
    %901 = vmatprep.subr.mxu0 0.0
    %902 = vmatpush1.msra.mxu0 0.0
    %903 = vmatprep.subr.mxu0 0.0
    %904 = vmatpush1.msra.mxu0 0.0
    %905 = vmatprep.subr.mxu0 0.0
    %906 = vmatpush1.msra.mxu0 0.0
    %907 = vmatprep.subr.mxu0 0.0
    %908 = vmatpush1.msra.mxu0 0.0
    %909 = vmatprep.subr.mxu0 0.0
    %910 = vmatpush1.msra.mxu0 0.0
    %911 = vmatprep.subr.mxu0 0.0
    %912 = vmatpush1.msra.mxu0 0.0
    %913 = vmatprep.subr.mxu0 0.0
    %914 = vmatpush1.msra.mxu0 0.0
    %915 = vmatprep.subr.mxu0 0.0
    %916 = vmatpush1.msra.mxu0 0.0
    %917 = vmatprep.subr.mxu0 0.0
    %918 = vmatpush1.msra.mxu0 0.0
    %919 = vmatprep.subr.mxu0 0.0
    %920 = vmatpush1.msra.mxu0 0.0
    %921 = vmatprep.subr.mxu0 0.0
    %922 = vmatpush1.msra.mxu0 0.0
    %923 = vmatprep.subr.mxu0 0.0
    %924 = vmatpush1.msra.mxu0 0.0
    %925 = vmatprep.mubr.f32.mxu0 0.0
    %926 = vmatmul.mubr.f32.gmra.mrb[0].mxu0 %v859
    %v927 = vpop.f32.mrb[0].mxu0
    %v928 = vadd.f32 0.0, %v927
    %v929 = vpop.f32.mrb[0].mxu0
    %930 = vdwg.mxu0
    %v931 = vld [vmem:[#allocation9 + $0x8] sm:$0xff]
    %v933 = vsel %vm183, %v852, 0
    %v936 = vsel %vm183, %v928, 0
    %938 = vmatprep.subr.mxu0 0.0
    %939 = vmatpush1.msra.mxu0 %v931
    %940 = vmatprep.subr.mxu0 0.0
    %941 = vmatpush1.msra.mxu0 0.0
    %942 = vmatprep.subr.mxu0 0.0
    %943 = vmatpush1.msra.mxu0 0.0
    %944 = vmatprep.subr.mxu0 0.0
    %945 = vmatpush1.msra.mxu0 0.0
    %946 = vmatprep.subr.mxu0 0.0
    %947 = vmatpush1.msra.mxu0 0.0
    %948 = vmatprep.subr.mxu0 0.0
    %949 = vmatpush1.msra.mxu0 0.0
    %950 = vmatprep.subr.mxu0 0.0
    %951 = vmatpush1.msra.mxu0 0.0
    %952 = vmatprep.subr.mxu0 0.0
    %953 = vmatpush1.msra.mxu0 0.0
    %954 = vmatprep.subr.mxu0 0.0
    %955 = vmatpush1.msra.mxu0 0.0
    %956 = vmatprep.subr.mxu0 0.0
    %957 = vmatpush1.msra.mxu0 0.0
    %958 = vmatprep.subr.mxu0 0.0
    %959 = vmatpush1.msra.mxu0 0.0
    %960 = vmatprep.subr.mxu0 0.0
    %961 = vmatpush1.msra.mxu0 0.0
    %962 = vmatprep.subr.mxu0 0.0
    %963 = vmatpush1.msra.mxu0 0.0
    %964 = vmatprep.subr.mxu0 0.0
    %965 = vmatpush1.msra.mxu0 0.0
    %966 = vmatprep.subr.mxu0 0.0
    %967 = vmatpush1.msra.mxu0 0.0
    %968 = vmatprep.subr.mxu0 0.0
    %969 = vmatpush1.msra.mxu0 0.0
    %970 = vmatprep.subr.mxu0 0.0
    %971 = vmatpush1.msra.mxu0 0.0
    %972 = vmatprep.subr.mxu0 0.0
    %973 = vmatpush1.msra.mxu0 0.0
    %974 = vmatprep.subr.mxu0 0.0
    %975 = vmatpush1.msra.mxu0 0.0
    %976 = vmatprep.subr.mxu0 0.0
    %977 = vmatpush1.msra.mxu0 0.0
    %978 = vmatprep.subr.mxu0 0.0
    %979 = vmatpush1.msra.mxu0 0.0
    %980 = vmatprep.subr.mxu0 0.0
    %981 = vmatpush1.msra.mxu0 0.0
    %982 = vmatprep.subr.mxu0 0.0
    %983 = vmatpush1.msra.mxu0 0.0
    %984 = vmatprep.subr.mxu0 0.0
    %985 = vmatpush1.msra.mxu0 0.0
    %986 = vmatprep.subr.mxu0 0.0
    %987 = vmatpush1.msra.mxu0 0.0
    %988 = vmatprep.subr.mxu0 0.0
    %989 = vmatpush1.msra.mxu0 0.0
    %990 = vmatprep.subr.mxu0 0.0
    %991 = vmatpush1.msra.mxu0 0.0
    %992 = vmatprep.subr.mxu0 0.0
    %993 = vmatpush1.msra.mxu0 0.0
    %994 = vmatprep.subr.mxu0 0.0
    %995 = vmatpush1.msra.mxu0 0.0
    %996 = vmatprep.subr.mxu0 0.0
    %997 = vmatpush1.msra.mxu0 0.0
    %998 = vmatprep.subr.mxu0 0.0
    %999 = vmatpush1.msra.mxu0 0.0
    %1000 = vmatprep.subr.mxu0 0.0
    %1001 = vmatpush1.msra.mxu0 0.0
    %1002 = vmatprep.mubr.f32.mxu0 0.0
    %1003 = vmatmul.mubr.f32.gmra.mrb[0].mxu0 %v933
    %v1004 = vpop.f32.mrb[0].mxu0
    %v1005 = vadd.f32 0.0, %v1004
    %v1006 = vpop.f32.mrb[0].mxu0
    %1007 = vmatprep.mubr.f32.mxu0 0.0
    %1008 = vmatmul.mubr.f32.gmra.mrb[0].mxu0 %v936
    %v1009 = vpop.f32.mrb[0].mxu0
    %v1010 = vadd.f32 0.0, %v1009
    %v1011 = vpop.f32.mrb[0].mxu0
    %1012 = vdwg.mxu0
    %v1013 = vld [vmem:[#allocation3] sm:$0xff]
    %v1014 = vld [vmem:[#allocation3 + $0x8] sm:$0xff]
    %v1015 = vadd.f32 %v1013, %v1005
    %v1016 = vadd.f32 %v1014, %v1010
    %1017 = vst.msk [vmem:[#allocation3] sm:$0xff] %vm93, %v1015
    %1018 = vst.msk [vmem:[#allocation3 + $0x8] sm:$0xff] %vm93, %v1016
    %v1019 = vld [vmem:[#allocation2] sm:$0xff]
    %v1020 = vld [vmem:[#allocation2 + $0x8] sm:$0xff]
    %1022 = vrot.lane.b32.xlu0 %v1019, 112
    %v1023 = vpop.permute.xlu0 %1022
    %1024 = vrot.lane.b32.xlu0 %v1019, 80
    %v1025 = vpop.permute.xlu0 %1024
    %v1026 = vsel %vm183, %v1023, 0
    %v1028 = vsel %vm183, %v1025, 0
    %1030 = vmatprep.subr.mxu0 0.0
    %1031 = vmatpush1.xpose.msra.mxu0 %v1028
    %1032 = vmatprep.subr.mxu0 0.0
    %1033 = vmatpush1.xpose.msra.mxu0 0.0
    %1034 = vmatprep.subr.mxu0 0.0
    %1035 = vmatpush1.xpose.msra.mxu0 0.0
    %1036 = vmatprep.subr.mxu0 0.0
    %1037 = vmatpush1.xpose.msra.mxu0 0.0
    %1038 = vmatprep.subr.mxu0 0.0
    %1039 = vmatpush1.xpose.msra.mxu0 0.0
    %1040 = vmatprep.subr.mxu0 0.0
    %1041 = vmatpush1.xpose.msra.mxu0 0.0
    %1042 = vmatprep.subr.mxu0 0.0
    %1043 = vmatpush1.xpose.msra.mxu0 0.0
    %1044 = vmatprep.subr.mxu0 0.0
    %1045 = vmatpush1.xpose.msra.mxu0 0.0
    %1046 = vmatprep.subr.mxu0 0.0
    %1047 = vmatpush1.xpose.msra.mxu0 0.0
    %1048 = vmatprep.subr.mxu0 0.0
    %1049 = vmatpush1.xpose.msra.mxu0 0.0
    %1050 = vmatprep.subr.mxu0 0.0
    %1051 = vmatpush1.xpose.msra.mxu0 0.0
    %1052 = vmatprep.subr.mxu0 0.0
    %1053 = vmatpush1.xpose.msra.mxu0 0.0
    %1054 = vmatprep.subr.mxu0 0.0
    %1055 = vmatpush1.xpose.msra.mxu0 0.0
    %1056 = vmatprep.subr.mxu0 0.0
    %1057 = vmatpush1.xpose.msra.mxu0 0.0
    %1058 = vmatprep.subr.mxu0 0.0
    %1059 = vmatpush1.xpose.msra.mxu0 0.0
    %1060 = vmatprep.subr.mxu0 0.0
    %1061 = vmatpush1.xpose.msra.mxu0 0.0
    %1062 = vmatprep.subr.mxu0 0.0
    %1063 = vmatpush1.xpose.msra.mxu0 0.0
    %1064 = vmatprep.subr.mxu0 0.0
    %1065 = vmatpush1.xpose.msra.mxu0 0.0
    %1066 = vmatprep.subr.mxu0 0.0
    %1067 = vmatpush1.xpose.msra.mxu0 0.0
    %1068 = vmatprep.subr.mxu0 0.0
    %1069 = vmatpush1.xpose.msra.mxu0 0.0
    %1070 = vmatprep.subr.mxu0 0.0
    %1071 = vmatpush1.xpose.msra.mxu0 0.0
    %1072 = vmatprep.subr.mxu0 0.0
    %1073 = vmatpush1.xpose.msra.mxu0 0.0
    %1074 = vmatprep.subr.mxu0 0.0
    %1075 = vmatpush1.xpose.msra.mxu0 0.0
    %1076 = vmatprep.subr.mxu0 0.0
    %1077 = vmatpush1.xpose.msra.mxu0 0.0
    %1078 = vmatprep.subr.mxu0 0.0
    %1079 = vmatpush1.xpose.msra.mxu0 0.0
    %1080 = vmatprep.subr.mxu0 0.0
    %1081 = vmatpush1.xpose.msra.mxu0 0.0
    %1082 = vmatprep.subr.mxu0 0.0
    %1083 = vmatpush1.xpose.msra.mxu0 0.0
    %1084 = vmatprep.subr.mxu0 0.0
    %1085 = vmatpush1.xpose.msra.mxu0 0.0
    %1086 = vmatprep.subr.mxu0 0.0
    %1087 = vmatpush1.xpose.msra.mxu0 0.0
    %1088 = vmatprep.subr.mxu0 0.0
    %1089 = vmatpush1.xpose.msra.mxu0 0.0
    %1090 = vmatprep.subr.mxu0 0.0
    %1091 = vmatpush1.xpose.msra.mxu0 0.0
    %1092 = vmatprep.subr.mxu0 0.0
    %1093 = vmatpush1.xpose.msra.mxu0 0.0
    %1094 = vmatprep.mubr.f32.mxu0 0.0
    %1095 = vmatmul.mubr.f32.gmra.mrb[0].mxu0 %v1026
    %v1096 = vpop.f32.mrb[0].mxu0
    %v1097 = vadd.f32 0.0, %v1096
    %v1098 = vpop.f32.mrb[0].mxu0
    %1099 = vdwg.mxu0
    %1101 = vrot.lane.b32.xlu0 %v1020, 112
    %v1102 = vpop.permute.xlu0 %1101
    %1103 = vrot.lane.b32.xlu0 %v1020, 80
    %v1104 = vpop.permute.xlu0 %1103
    %v1105 = vsel %vm183, %v1102, 0
    %v1107 = vsel %vm183, %v1104, 0
    %1109 = vmatprep.subr.mxu0 0.0
    %1110 = vmatpush1.xpose.msra.mxu0 %v1107
    %1111 = vmatprep.subr.mxu0 0.0
    %1112 = vmatpush1.xpose.msra.mxu0 0.0
    %1113 = vmatprep.subr.mxu0 0.0
    %1114 = vmatpush1.xpose.msra.mxu0 0.0
    %1115 = vmatprep.subr.mxu0 0.0
    %1116 = vmatpush1.xpose.msra.mxu0 0.0
    %1117 = vmatprep.subr.mxu0 0.0
    %1118 = vmatpush1.xpose.msra.mxu0 0.0
    %1119 = vmatprep.subr.mxu0 0.0
    %1120 = vmatpush1.xpose.msra.mxu0 0.0
    %1121 = vmatprep.subr.mxu0 0.0
    %1122 = vmatpush1.xpose.msra.mxu0 0.0
    %1123 = vmatprep.subr.mxu0 0.0
    %1124 = vmatpush1.xpose.msra.mxu0 0.0
    %1125 = vmatprep.subr.mxu0 0.0
    %1126 = vmatpush1.xpose.msra.mxu0 0.0
    %1127 = vmatprep.subr.mxu0 0.0
    %1128 = vmatpush1.xpose.msra.mxu0 0.0
    %1129 = vmatprep.subr.mxu0 0.0
    %1130 = vmatpush1.xpose.msra.mxu0 0.0
    %1131 = vmatprep.subr.mxu0 0.0
    %1132 = vmatpush1.xpose.msra.mxu0 0.0
    %1133 = vmatprep.subr.mxu0 0.0
    %1134 = vmatpush1.xpose.msra.mxu0 0.0
    %1135 = vmatprep.subr.mxu0 0.0
    %1136 = vmatpush1.xpose.msra.mxu0 0.0
    %1137 = vmatprep.subr.mxu0 0.0
    %1138 = vmatpush1.xpose.msra.mxu0 0.0
    %1139 = vmatprep.subr.mxu0 0.0
    %1140 = vmatpush1.xpose.msra.mxu0 0.0
    %1141 = vmatprep.subr.mxu0 0.0
    %1142 = vmatpush1.xpose.msra.mxu0 0.0
    %1143 = vmatprep.subr.mxu0 0.0
    %1144 = vmatpush1.xpose.msra.mxu0 0.0
    %1145 = vmatprep.subr.mxu0 0.0
    %1146 = vmatpush1.xpose.msra.mxu0 0.0
    %1147 = vmatprep.subr.mxu0 0.0
    %1148 = vmatpush1.xpose.msra.mxu0 0.0
    %1149 = vmatprep.subr.mxu0 0.0
    %1150 = vmatpush1.xpose.msra.mxu0 0.0
    %1151 = vmatprep.subr.mxu0 0.0
    %1152 = vmatpush1.xpose.msra.mxu0 0.0
    %1153 = vmatprep.subr.mxu0 0.0
    %1154 = vmatpush1.xpose.msra.mxu0 0.0
    %1155 = vmatprep.subr.mxu0 0.0
    %1156 = vmatpush1.xpose.msra.mxu0 0.0
    %1157 = vmatprep.subr.mxu0 0.0
    %1158 = vmatpush1.xpose.msra.mxu0 0.0
    %1159 = vmatprep.subr.mxu0 0.0
    %1160 = vmatpush1.xpose.msra.mxu0 0.0
    %1161 = vmatprep.subr.mxu0 0.0
    %1162 = vmatpush1.xpose.msra.mxu0 0.0
    %1163 = vmatprep.subr.mxu0 0.0
    %1164 = vmatpush1.xpose.msra.mxu0 0.0
    %1165 = vmatprep.subr.mxu0 0.0
    %1166 = vmatpush1.xpose.msra.mxu0 0.0
    %1167 = vmatprep.subr.mxu0 0.0
    %1168 = vmatpush1.xpose.msra.mxu0 0.0
    %1169 = vmatprep.subr.mxu0 0.0
    %1170 = vmatpush1.xpose.msra.mxu0 0.0
    %1171 = vmatprep.subr.mxu0 0.0
    %1172 = vmatpush1.xpose.msra.mxu0 0.0
    %1173 = vmatprep.mubr.f32.mxu0 0.0
    %1174 = vmatmul.mubr.f32.gmra.mrb[0].mxu0 %v1105
    %v1175 = vpop.f32.mrb[0].mxu0
    %v1176 = vadd.f32 0.0, %v1175
    %v1177 = vpop.f32.mrb[0].mxu0
    %1178 = vdwg.mxu0
    %v1179 = vmul.f32 %v1097, 0.35355338
    %v1180 = vmul.f32 %v1176, 0.35355338
    %v1181 = vsel %vm183, %v1179, -inf
    %1182 = vmax.xlane.f32.xlu0 %v1181
    %v1183 = vpop.xlane.xlu0 %1182
    %v1184 = vsel %vm183, %v1180, -inf
    %1185 = vmax.xlane.f32.xlu0 %v1184
    %v1186 = vpop.xlane.xlu0 %1185
    %v1187 = vsub.f32 %v1179, %v1183
    %v1188 = vsub.f32 %v1180, %v1186
    %v1189 = vmul.f32 %v1187, 1.442695
    %v1190 = vpow.pop %v1189
    %v1191 = vmul.f32 %v1188, 1.442695
    %v1192 = vpow.pop %v1191
    %v1193 = vsel %vm183, %v1190, 0.0
    %1194 = vadd.xlane.f32.xlu0 %v1193
    %v1195 = vpop.xlane.xlu0 %1194
    %v1196 = vsel %vm183, %v1192, 0.0
    %1197 = vadd.xlane.f32.xlu0 %v1196
    %v1198 = vpop.xlane.xlu0 %1197
    %v1199 = vrcp.pop %v1195
    %v1200 = vrcp.pop %v1198
    %v1201 = vmul.f32 %v1190, %v1199
    %v1202 = vmul.f32 %v1192, %v1200
    %1203 = vrot.lane.b32.xlu0 %v1019, 48
    %v1204 = vpop.permute.xlu0 %1203
    %v1207 = vsel %vm183, %v1201, 0
    %1209 = vmatprep.subr.mxu0 0.0
    %1210 = vmatpush1.msra.mxu0 %v1204
    %1211 = vmatprep.subr.mxu0 0.0
    %1212 = vmatpush1.msra.mxu0 0.0
    %1213 = vmatprep.subr.mxu0 0.0
    %1214 = vmatpush1.msra.mxu0 0.0
    %1215 = vmatprep.subr.mxu0 0.0
    %1216 = vmatpush1.msra.mxu0 0.0
    %1217 = vmatprep.subr.mxu0 0.0
    %1218 = vmatpush1.msra.mxu0 0.0
    %1219 = vmatprep.subr.mxu0 0.0
    %1220 = vmatpush1.msra.mxu0 0.0
    %1221 = vmatprep.subr.mxu0 0.0
    %1222 = vmatpush1.msra.mxu0 0.0
    %1223 = vmatprep.subr.mxu0 0.0
    %1224 = vmatpush1.msra.mxu0 0.0
    %1225 = vmatprep.subr.mxu0 0.0
    %1226 = vmatpush1.msra.mxu0 0.0
    %1227 = vmatprep.subr.mxu0 0.0
    %1228 = vmatpush1.msra.mxu0 0.0
    %1229 = vmatprep.subr.mxu0 0.0
    %1230 = vmatpush1.msra.mxu0 0.0
    %1231 = vmatprep.subr.mxu0 0.0
    %1232 = vmatpush1.msra.mxu0 0.0
    %1233 = vmatprep.subr.mxu0 0.0
    %1234 = vmatpush1.msra.mxu0 0.0
    %1235 = vmatprep.subr.mxu0 0.0
    %1236 = vmatpush1.msra.mxu0 0.0
    %1237 = vmatprep.subr.mxu0 0.0
    %1238 = vmatpush1.msra.mxu0 0.0
    %1239 = vmatprep.subr.mxu0 0.0
    %1240 = vmatpush1.msra.mxu0 0.0
    %1241 = vmatprep.subr.mxu0 0.0
    %1242 = vmatpush1.msra.mxu0 0.0
    %1243 = vmatprep.subr.mxu0 0.0
    %1244 = vmatpush1.msra.mxu0 0.0
    %1245 = vmatprep.subr.mxu0 0.0
    %1246 = vmatpush1.msra.mxu0 0.0
    %1247 = vmatprep.subr.mxu0 0.0
    %1248 = vmatpush1.msra.mxu0 0.0
    %1249 = vmatprep.subr.mxu0 0.0
    %1250 = vmatpush1.msra.mxu0 0.0
    %1251 = vmatprep.subr.mxu0 0.0
    %1252 = vmatpush1.msra.mxu0 0.0
    %1253 = vmatprep.subr.mxu0 0.0
    %1254 = vmatpush1.msra.mxu0 0.0
    %1255 = vmatprep.subr.mxu0 0.0
    %1256 = vmatpush1.msra.mxu0 0.0
    %1257 = vmatprep.subr.mxu0 0.0
    %1258 = vmatpush1.msra.mxu0 0.0
    %1259 = vmatprep.subr.mxu0 0.0
    %1260 = vmatpush1.msra.mxu0 0.0
    %1261 = vmatprep.subr.mxu0 0.0
    %1262 = vmatpush1.msra.mxu0 0.0
    %1263 = vmatprep.subr.mxu0 0.0
    %1264 = vmatpush1.msra.mxu0 0.0
    %1265 = vmatprep.subr.mxu0 0.0
    %1266 = vmatpush1.msra.mxu0 0.0
    %1267 = vmatprep.subr.mxu0 0.0
    %1268 = vmatpush1.msra.mxu0 0.0
    %1269 = vmatprep.subr.mxu0 0.0
    %1270 = vmatpush1.msra.mxu0 0.0
    %1271 = vmatprep.subr.mxu0 0.0
    %1272 = vmatpush1.msra.mxu0 0.0
    %1273 = vmatprep.mubr.f32.mxu0 0.0
    %1274 = vmatmul.mubr.f32.gmra.mrb[0].mxu0 %v1207
    %v1275 = vpop.f32.mrb[0].mxu0
    %v1276 = vadd.f32 0.0, %v1275
    %v1277 = vpop.f32.mrb[0].mxu0
    %1278 = vdwg.mxu0
    %1279 = vrot.lane.b32.xlu0 %v1020, 48
    %v1280 = vpop.permute.xlu0 %1279
    %v1283 = vsel %vm183, %v1202, 0
    %1285 = vmatprep.subr.mxu0 0.0
    %1286 = vmatpush1.msra.mxu0 %v1280
    %1287 = vmatprep.subr.mxu0 0.0
    %1288 = vmatpush1.msra.mxu0 0.0
    %1289 = vmatprep.subr.mxu0 0.0
    %1290 = vmatpush1.msra.mxu0 0.0
    %1291 = vmatprep.subr.mxu0 0.0
    %1292 = vmatpush1.msra.mxu0 0.0
    %1293 = vmatprep.subr.mxu0 0.0
    %1294 = vmatpush1.msra.mxu0 0.0
    %1295 = vmatprep.subr.mxu0 0.0
    %1296 = vmatpush1.msra.mxu0 0.0
    %1297 = vmatprep.subr.mxu0 0.0
    %1298 = vmatpush1.msra.mxu0 0.0
    %1299 = vmatprep.subr.mxu0 0.0
    %1300 = vmatpush1.msra.mxu0 0.0
    %1301 = vmatprep.subr.mxu0 0.0
    %1302 = vmatpush1.msra.mxu0 0.0
    %1303 = vmatprep.subr.mxu0 0.0
    %1304 = vmatpush1.msra.mxu0 0.0
    %1305 = vmatprep.subr.mxu0 0.0
    %1306 = vmatpush1.msra.mxu0 0.0
    %1307 = vmatprep.subr.mxu0 0.0
    %1308 = vmatpush1.msra.mxu0 0.0
    %1309 = vmatprep.subr.mxu0 0.0
    %1310 = vmatpush1.msra.mxu0 0.0
    %1311 = vmatprep.subr.mxu0 0.0
    %1312 = vmatpush1.msra.mxu0 0.0
    %1313 = vmatprep.subr.mxu0 0.0
    %1314 = vmatpush1.msra.mxu0 0.0
    %1315 = vmatprep.subr.mxu0 0.0
    %1316 = vmatpush1.msra.mxu0 0.0
    %1317 = vmatprep.subr.mxu0 0.0
    %1318 = vmatpush1.msra.mxu0 0.0
    %1319 = vmatprep.subr.mxu0 0.0
    %1320 = vmatpush1.msra.mxu0 0.0
    %1321 = vmatprep.subr.mxu0 0.0
    %1322 = vmatpush1.msra.mxu0 0.0
    %1323 = vmatprep.subr.mxu0 0.0
    %1324 = vmatpush1.msra.mxu0 0.0
    %1325 = vmatprep.subr.mxu0 0.0
    %1326 = vmatpush1.msra.mxu0 0.0
    %1327 = vmatprep.subr.mxu0 0.0
    %1328 = vmatpush1.msra.mxu0 0.0
    %1329 = vmatprep.subr.mxu0 0.0
    %1330 = vmatpush1.msra.mxu0 0.0
    %1331 = vmatprep.subr.mxu0 0.0
    %1332 = vmatpush1.msra.mxu0 0.0
    %1333 = vmatprep.subr.mxu0 0.0
    %1334 = vmatpush1.msra.mxu0 0.0
    %1335 = vmatprep.subr.mxu0 0.0
    %1336 = vmatpush1.msra.mxu0 0.0
    %1337 = vmatprep.subr.mxu0 0.0
    %1338 = vmatpush1.msra.mxu0 0.0
    %1339 = vmatprep.subr.mxu0 0.0
    %1340 = vmatpush1.msra.mxu0 0.0
    %1341 = vmatprep.subr.mxu0 0.0
    %1342 = vmatpush1.msra.mxu0 0.0
    %1343 = vmatprep.subr.mxu0 0.0
    %1344 = vmatpush1.msra.mxu0 0.0
    %1345 = vmatprep.subr.mxu0 0.0
    %1346 = vmatpush1.msra.mxu0 0.0
    %1347 = vmatprep.subr.mxu0 0.0
    %1348 = vmatpush1.msra.mxu0 0.0
    %1349 = vmatprep.mubr.f32.mxu0 0.0
    %1350 = vmatmul.mubr.f32.gmra.mrb[0].mxu0 %v1283
    %v1351 = vpop.f32.mrb[0].mxu0
    %v1352 = vadd.f32 0.0, %v1351
    %v1353 = vpop.f32.mrb[0].mxu0
    %1354 = vdwg.mxu0
    %v1355 = vld [vmem:[#allocation9 + $0x10] sm:$0xff]
    %v1357 = vsel %vm183, %v1276, 0
    %v1360 = vsel %vm183, %v1352, 0
    %1362 = vmatprep.subr.mxu0 0.0
    %1363 = vmatpush1.msra.mxu0 %v1355
    %1364 = vmatprep.subr.mxu0 0.0
    %1365 = vmatpush1.msra.mxu0 0.0
    %1366 = vmatprep.subr.mxu0 0.0
    %1367 = vmatpush1.msra.mxu0 0.0
    %1368 = vmatprep.subr.mxu0 0.0
    %1369 = vmatpush1.msra.mxu0 0.0
    %1370 = vmatprep.subr.mxu0 0.0
    %1371 = vmatpush1.msra.mxu0 0.0
    %1372 = vmatprep.subr.mxu0 0.0
    %1373 = vmatpush1.msra.mxu0 0.0
    %1374 = vmatprep.subr.mxu0 0.0
    %1375 = vmatpush1.msra.mxu0 0.0
    %1376 = vmatprep.subr.mxu0 0.0
    %1377 = vmatpush1.msra.mxu0 0.0
    %1378 = vmatprep.subr.mxu0 0.0
    %1379 = vmatpush1.msra.mxu0 0.0
    %1380 = vmatprep.subr.mxu0 0.0
    %1381 = vmatpush1.msra.mxu0 0.0
    %1382 = vmatprep.subr.mxu0 0.0
    %1383 = vmatpush1.msra.mxu0 0.0
    %1384 = vmatprep.subr.mxu0 0.0
    %1385 = vmatpush1.msra.mxu0 0.0
    %1386 = vmatprep.subr.mxu0 0.0
    %1387 = vmatpush1.msra.mxu0 0.0
    %1388 = vmatprep.subr.mxu0 0.0
    %1389 = vmatpush1.msra.mxu0 0.0
    %1390 = vmatprep.subr.mxu0 0.0
    %1391 = vmatpush1.msra.mxu0 0.0
    %1392 = vmatprep.subr.mxu0 0.0
    %1393 = vmatpush1.msra.mxu0 0.0
    %1394 = vmatprep.subr.mxu0 0.0
    %1395 = vmatpush1.msra.mxu0 0.0
    %1396 = vmatprep.subr.mxu0 0.0
    %1397 = vmatpush1.msra.mxu0 0.0
    %1398 = vmatprep.subr.mxu0 0.0
    %1399 = vmatpush1.msra.mxu0 0.0
    %1400 = vmatprep.subr.mxu0 0.0
    %1401 = vmatpush1.msra.mxu0 0.0
    %1402 = vmatprep.subr.mxu0 0.0
    %1403 = vmatpush1.msra.mxu0 0.0
    %1404 = vmatprep.subr.mxu0 0.0
    %1405 = vmatpush1.msra.mxu0 0.0
    %1406 = vmatprep.subr.mxu0 0.0
    %1407 = vmatpush1.msra.mxu0 0.0
    %1408 = vmatprep.subr.mxu0 0.0
    %1409 = vmatpush1.msra.mxu0 0.0
    %1410 = vmatprep.subr.mxu0 0.0
    %1411 = vmatpush1.msra.mxu0 0.0
    %1412 = vmatprep.subr.mxu0 0.0
    %1413 = vmatpush1.msra.mxu0 0.0
    %1414 = vmatprep.subr.mxu0 0.0
    %1415 = vmatpush1.msra.mxu0 0.0
    %1416 = vmatprep.subr.mxu0 0.0
    %1417 = vmatpush1.msra.mxu0 0.0
    %1418 = vmatprep.subr.mxu0 0.0
    %1419 = vmatpush1.msra.mxu0 0.0
    %1420 = vmatprep.subr.mxu0 0.0
    %1421 = vmatpush1.msra.mxu0 0.0
    %1422 = vmatprep.subr.mxu0 0.0
    %1423 = vmatpush1.msra.mxu0 0.0
    %1424 = vmatprep.subr.mxu0 0.0
    %1425 = vmatpush1.msra.mxu0 0.0
    %1426 = vmatprep.mubr.f32.mxu0 0.0
    %1427 = vmatmul.mubr.f32.gmra.mrb[0].mxu0 %v1357
    %v1428 = vpop.f32.mrb[0].mxu0
    %v1429 = vadd.f32 0.0, %v1428
    %v1430 = vpop.f32.mrb[0].mxu0
    %1431 = vmatprep.mubr.f32.mxu0 0.0
    %1432 = vmatmul.mubr.f32.gmra.mrb[0].mxu0 %v1360
    %v1433 = vpop.f32.mrb[0].mxu0
    %v1434 = vadd.f32 0.0, %v1433
    %v1435 = vpop.f32.mrb[0].mxu0
    %1436 = vdwg.mxu0
    %v1437 = vld [vmem:[#allocation3] sm:$0xff]
    %v1438 = vld [vmem:[#allocation3 + $0x8] sm:$0xff]
    %v1439 = vadd.f32 %v1437, %v1429
    %v1440 = vadd.f32 %v1438, %v1434
    %1441 = vst.msk [vmem:[#allocation3] sm:$0xff] %vm93, %v1439
    %1442 = vst.msk [vmem:[#allocation3 + $0x8] sm:$0xff] %vm93, %v1440
    %v1443 = vld [vmem:[#allocation2] sm:$0xff]
    %v1444 = vld [vmem:[#allocation2 + $0x8] sm:$0xff]
    %1446 = vrot.lane.b32.xlu0 %v1443, 104
    %v1447 = vpop.permute.xlu0 %1446
    %1448 = vrot.lane.b32.xlu0 %v1443, 72
    %v1449 = vpop.permute.xlu0 %1448
    %v1450 = vsel %vm183, %v1447, 0
    %v1452 = vsel %vm183, %v1449, 0
    %1454 = vmatprep.subr.mxu0 0.0
    %1455 = vmatpush1.xpose.msra.mxu0 %v1452
    %1456 = vmatprep.subr.mxu0 0.0
    %1457 = vmatpush1.xpose.msra.mxu0 0.0
    %1458 = vmatprep.subr.mxu0 0.0
    %1459 = vmatpush1.xpose.msra.mxu0 0.0
    %1460 = vmatprep.subr.mxu0 0.0
    %1461 = vmatpush1.xpose.msra.mxu0 0.0
    %1462 = vmatprep.subr.mxu0 0.0
    %1463 = vmatpush1.xpose.msra.mxu0 0.0
    %1464 = vmatprep.subr.mxu0 0.0
    %1465 = vmatpush1.xpose.msra.mxu0 0.0
    %1466 = vmatprep.subr.mxu0 0.0
    %1467 = vmatpush1.xpose.msra.mxu0 0.0
    %1468 = vmatprep.subr.mxu0 0.0
    %1469 = vmatpush1.xpose.msra.mxu0 0.0
    %1470 = vmatprep.subr.mxu0 0.0
    %1471 = vmatpush1.xpose.msra.mxu0 0.0
    %1472 = vmatprep.subr.mxu0 0.0
    %1473 = vmatpush1.xpose.msra.mxu0 0.0
    %1474 = vmatprep.subr.mxu0 0.0
    %1475 = vmatpush1.xpose.msra.mxu0 0.0
    %1476 = vmatprep.subr.mxu0 0.0
    %1477 = vmatpush1.xpose.msra.mxu0 0.0
    %1478 = vmatprep.subr.mxu0 0.0
    %1479 = vmatpush1.xpose.msra.mxu0 0.0
    %1480 = vmatprep.subr.mxu0 0.0
    %1481 = vmatpush1.xpose.msra.mxu0 0.0
    %1482 = vmatprep.subr.mxu0 0.0
    %1483 = vmatpush1.xpose.msra.mxu0 0.0
    %1484 = vmatprep.subr.mxu0 0.0
    %1485 = vmatpush1.xpose.msra.mxu0 0.0
    %1486 = vmatprep.subr.mxu0 0.0
    %1487 = vmatpush1.xpose.msra.mxu0 0.0
    %1488 = vmatprep.subr.mxu0 0.0
    %1489 = vmatpush1.xpose.msra.mxu0 0.0
    %1490 = vmatprep.subr.mxu0 0.0
    %1491 = vmatpush1.xpose.msra.mxu0 0.0
    %1492 = vmatprep.subr.mxu0 0.0
    %1493 = vmatpush1.xpose.msra.mxu0 0.0
    %1494 = vmatprep.subr.mxu0 0.0
    %1495 = vmatpush1.xpose.msra.mxu0 0.0
    %1496 = vmatprep.subr.mxu0 0.0
    %1497 = vmatpush1.xpose.msra.mxu0 0.0
    %1498 = vmatprep.subr.mxu0 0.0
    %1499 = vmatpush1.xpose.msra.mxu0 0.0
    %1500 = vmatprep.subr.mxu0 0.0
    %1501 = vmatpush1.xpose.msra.mxu0 0.0
    %1502 = vmatprep.subr.mxu0 0.0
    %1503 = vmatpush1.xpose.msra.mxu0 0.0
    %1504 = vmatprep.subr.mxu0 0.0
    %1505 = vmatpush1.xpose.msra.mxu0 0.0
    %1506 = vmatprep.subr.mxu0 0.0
    %1507 = vmatpush1.xpose.msra.mxu0 0.0
    %1508 = vmatprep.subr.mxu0 0.0
    %1509 = vmatpush1.xpose.msra.mxu0 0.0
    %1510 = vmatprep.subr.mxu0 0.0
    %1511 = vmatpush1.xpose.msra.mxu0 0.0
    %1512 = vmatprep.subr.mxu0 0.0
    %1513 = vmatpush1.xpose.msra.mxu0 0.0
    %1514 = vmatprep.subr.mxu0 0.0
    %1515 = vmatpush1.xpose.msra.mxu0 0.0
    %1516 = vmatprep.subr.mxu0 0.0
    %1517 = vmatpush1.xpose.msra.mxu0 0.0
    %1518 = vmatprep.mubr.f32.mxu0 0.0
    %1519 = vmatmul.mubr.f32.gmra.mrb[0].mxu0 %v1450
    %v1520 = vpop.f32.mrb[0].mxu0
    %v1521 = vadd.f32 0.0, %v1520
    %v1522 = vpop.f32.mrb[0].mxu0
    %1523 = vdwg.mxu0
    %1525 = vrot.lane.b32.xlu0 %v1444, 104
    %v1526 = vpop.permute.xlu0 %1525
    %1527 = vrot.lane.b32.xlu0 %v1444, 72
    %v1528 = vpop.permute.xlu0 %1527
    %v1529 = vsel %vm183, %v1526, 0
    %v1531 = vsel %vm183, %v1528, 0
    %1533 = vmatprep.subr.mxu0 0.0
    %1534 = vmatpush1.xpose.msra.mxu0 %v1531
    %1535 = vmatprep.subr.mxu0 0.0
    %1536 = vmatpush1.xpose.msra.mxu0 0.0
    %1537 = vmatprep.subr.mxu0 0.0
    %1538 = vmatpush1.xpose.msra.mxu0 0.0
    %1539 = vmatprep.subr.mxu0 0.0
    %1540 = vmatpush1.xpose.msra.mxu0 0.0
    %1541 = vmatprep.subr.mxu0 0.0
    %1542 = vmatpush1.xpose.msra.mxu0 0.0
    %1543 = vmatprep.subr.mxu0 0.0
    %1544 = vmatpush1.xpose.msra.mxu0 0.0
    %1545 = vmatprep.subr.mxu0 0.0
    %1546 = vmatpush1.xpose.msra.mxu0 0.0
    %1547 = vmatprep.subr.mxu0 0.0
    %1548 = vmatpush1.xpose.msra.mxu0 0.0
    %1549 = vmatprep.subr.mxu0 0.0
    %1550 = vmatpush1.xpose.msra.mxu0 0.0
    %1551 = vmatprep.subr.mxu0 0.0
    %1552 = vmatpush1.xpose.msra.mxu0 0.0
    %1553 = vmatprep.subr.mxu0 0.0
    %1554 = vmatpush1.xpose.msra.mxu0 0.0
    %1555 = vmatprep.subr.mxu0 0.0
    %1556 = vmatpush1.xpose.msra.mxu0 0.0
    %1557 = vmatprep.subr.mxu0 0.0
    %1558 = vmatpush1.xpose.msra.mxu0 0.0
    %1559 = vmatprep.subr.mxu0 0.0
    %1560 = vmatpush1.xpose.msra.mxu0 0.0
    %1561 = vmatprep.subr.mxu0 0.0
    %1562 = vmatpush1.xpose.msra.mxu0 0.0
    %1563 = vmatprep.subr.mxu0 0.0
    %1564 = vmatpush1.xpose.msra.mxu0 0.0
    %1565 = vmatprep.subr.mxu0 0.0
    %1566 = vmatpush1.xpose.msra.mxu0 0.0
    %1567 = vmatprep.subr.mxu0 0.0
    %1568 = vmatpush1.xpose.msra.mxu0 0.0
    %1569 = vmatprep.subr.mxu0 0.0
    %1570 = vmatpush1.xpose.msra.mxu0 0.0
    %1571 = vmatprep.subr.mxu0 0.0
    %1572 = vmatpush1.xpose.msra.mxu0 0.0
    %1573 = vmatprep.subr.mxu0 0.0
    %1574 = vmatpush1.xpose.msra.mxu0 0.0
    %1575 = vmatprep.subr.mxu0 0.0
    %1576 = vmatpush1.xpose.msra.mxu0 0.0
    %1577 = vmatprep.subr.mxu0 0.0
    %1578 = vmatpush1.xpose.msra.mxu0 0.0
    %1579 = vmatprep.subr.mxu0 0.0
    %1580 = vmatpush1.xpose.msra.mxu0 0.0
    %1581 = vmatprep.subr.mxu0 0.0
    %1582 = vmatpush1.xpose.msra.mxu0 0.0
    %1583 = vmatprep.subr.mxu0 0.0
    %1584 = vmatpush1.xpose.msra.mxu0 0.0
    %1585 = vmatprep.subr.mxu0 0.0
    %1586 = vmatpush1.xpose.msra.mxu0 0.0
    %1587 = vmatprep.subr.mxu0 0.0
    %1588 = vmatpush1.xpose.msra.mxu0 0.0
    %1589 = vmatprep.subr.mxu0 0.0
    %1590 = vmatpush1.xpose.msra.mxu0 0.0
    %1591 = vmatprep.subr.mxu0 0.0
    %1592 = vmatpush1.xpose.msra.mxu0 0.0
    %1593 = vmatprep.subr.mxu0 0.0
    %1594 = vmatpush1.xpose.msra.mxu0 0.0
    %1595 = vmatprep.subr.mxu0 0.0
    %1596 = vmatpush1.xpose.msra.mxu0 0.0
    %1597 = vmatprep.mubr.f32.mxu0 0.0
    %1598 = vmatmul.mubr.f32.gmra.mrb[0].mxu0 %v1529
    %v1599 = vpop.f32.mrb[0].mxu0
    %v1600 = vadd.f32 0.0, %v1599
    %v1601 = vpop.f32.mrb[0].mxu0
    %1602 = vdwg.mxu0
    %v1603 = vmul.f32 %v1521, 0.35355338
    %v1604 = vmul.f32 %v1600, 0.35355338
    %v1605 = vsel %vm183, %v1603, -inf
    %1606 = vmax.xlane.f32.xlu0 %v1605
    %v1607 = vpop.xlane.xlu0 %1606
    %v1608 = vsel %vm183, %v1604, -inf
    %1609 = vmax.xlane.f32.xlu0 %v1608
    %v1610 = vpop.xlane.xlu0 %1609
    %v1611 = vsub.f32 %v1603, %v1607
    %v1612 = vsub.f32 %v1604, %v1610
    %v1613 = vmul.f32 %v1611, 1.442695
    %v1614 = vpow.pop %v1613
    %v1615 = vmul.f32 %v1612, 1.442695
    %v1616 = vpow.pop %v1615
    %v1617 = vsel %vm183, %v1614, 0.0
    %1618 = vadd.xlane.f32.xlu0 %v1617
    %v1619 = vpop.xlane.xlu0 %1618
    %v1620 = vsel %vm183, %v1616, 0.0
    %1621 = vadd.xlane.f32.xlu0 %v1620
    %v1622 = vpop.xlane.xlu0 %1621
    %v1623 = vrcp.pop %v1619
    %v1624 = vrcp.pop %v1622
    %v1625 = vmul.f32 %v1614, %v1623
    %v1626 = vmul.f32 %v1616, %v1624
    %1627 = vrot.lane.b32.xlu0 %v1443, 40
    %v1628 = vpop.permute.xlu0 %1627
    %v1631 = vsel %vm183, %v1625, 0
    %1633 = vmatprep.subr.mxu0 0.0
    %1634 = vmatpush1.msra.mxu0 %v1628
    %1635 = vmatprep.subr.mxu0 0.0
    %1636 = vmatpush1.msra.mxu0 0.0
    %1637 = vmatprep.subr.mxu0 0.0
    %1638 = vmatpush1.msra.mxu0 0.0
    %1639 = vmatprep.subr.mxu0 0.0
    %1640 = vmatpush1.msra.mxu0 0.0
    %1641 = vmatprep.subr.mxu0 0.0
    %1642 = vmatpush1.msra.mxu0 0.0
    %1643 = vmatprep.subr.mxu0 0.0
    %1644 = vmatpush1.msra.mxu0 0.0
    %1645 = vmatprep.subr.mxu0 0.0
    %1646 = vmatpush1.msra.mxu0 0.0
    %1647 = vmatprep.subr.mxu0 0.0
    %1648 = vmatpush1.msra.mxu0 0.0
    %1649 = vmatprep.subr.mxu0 0.0
    %1650 = vmatpush1.msra.mxu0 0.0
    %1651 = vmatprep.subr.mxu0 0.0
    %1652 = vmatpush1.msra.mxu0 0.0
    %1653 = vmatprep.subr.mxu0 0.0
    %1654 = vmatpush1.msra.mxu0 0.0
    %1655 = vmatprep.subr.mxu0 0.0
    %1656 = vmatpush1.msra.mxu0 0.0
    %1657 = vmatprep.subr.mxu0 0.0
    %1658 = vmatpush1.msra.mxu0 0.0
    %1659 = vmatprep.subr.mxu0 0.0
    %1660 = vmatpush1.msra.mxu0 0.0
    %1661 = vmatprep.subr.mxu0 0.0
    %1662 = vmatpush1.msra.mxu0 0.0
    %1663 = vmatprep.subr.mxu0 0.0
    %1664 = vmatpush1.msra.mxu0 0.0
    %1665 = vmatprep.subr.mxu0 0.0
    %1666 = vmatpush1.msra.mxu0 0.0
    %1667 = vmatprep.subr.mxu0 0.0
    %1668 = vmatpush1.msra.mxu0 0.0
    %1669 = vmatprep.subr.mxu0 0.0
    %1670 = vmatpush1.msra.mxu0 0.0
    %1671 = vmatprep.subr.mxu0 0.0
    %1672 = vmatpush1.msra.mxu0 0.0
    %1673 = vmatprep.subr.mxu0 0.0
    %1674 = vmatpush1.msra.mxu0 0.0
    %1675 = vmatprep.subr.mxu0 0.0
    %1676 = vmatpush1.msra.mxu0 0.0
    %1677 = vmatprep.subr.mxu0 0.0
    %1678 = vmatpush1.msra.mxu0 0.0
    %1679 = vmatprep.subr.mxu0 0.0
    %1680 = vmatpush1.msra.mxu0 0.0
    %1681 = vmatprep.subr.mxu0 0.0
    %1682 = vmatpush1.msra.mxu0 0.0
    %1683 = vmatprep.subr.mxu0 0.0
    %1684 = vmatpush1.msra.mxu0 0.0
    %1685 = vmatprep.subr.mxu0 0.0
    %1686 = vmatpush1.msra.mxu0 0.0
    %1687 = vmatprep.subr.mxu0 0.0
    %1688 = vmatpush1.msra.mxu0 0.0
    %1689 = vmatprep.subr.mxu0 0.0
    %1690 = vmatpush1.msra.mxu0 0.0
    %1691 = vmatprep.subr.mxu0 0.0
    %1692 = vmatpush1.msra.mxu0 0.0
    %1693 = vmatprep.subr.mxu0 0.0
    %1694 = vmatpush1.msra.mxu0 0.0
    %1695 = vmatprep.subr.mxu0 0.0
    %1696 = vmatpush1.msra.mxu0 0.0
    %1697 = vmatprep.mubr.f32.mxu0 0.0
    %1698 = vmatmul.mubr.f32.gmra.mrb[0].mxu0 %v1631
    %v1699 = vpop.f32.mrb[0].mxu0
    %v1700 = vadd.f32 0.0, %v1699
    %v1701 = vpop.f32.mrb[0].mxu0
    %1702 = vdwg.mxu0
    %1703 = vrot.lane.b32.xlu0 %v1444, 40
    %v1704 = vpop.permute.xlu0 %1703
    %v1707 = vsel %vm183, %v1626, 0
    %1709 = vmatprep.subr.mxu0 0.0
    %1710 = vmatpush1.msra.mxu0 %v1704
    %1711 = vmatprep.subr.mxu0 0.0
    %1712 = vmatpush1.msra.mxu0 0.0
    %1713 = vmatprep.subr.mxu0 0.0
    %1714 = vmatpush1.msra.mxu0 0.0
    %1715 = vmatprep.subr.mxu0 0.0
    %1716 = vmatpush1.msra.mxu0 0.0
    %1717 = vmatprep.subr.mxu0 0.0
    %1718 = vmatpush1.msra.mxu0 0.0
    %1719 = vmatprep.subr.mxu0 0.0
    %1720 = vmatpush1.msra.mxu0 0.0
    %1721 = vmatprep.subr.mxu0 0.0
    %1722 = vmatpush1.msra.mxu0 0.0
    %1723 = vmatprep.subr.mxu0 0.0
    %1724 = vmatpush1.msra.mxu0 0.0
    %1725 = vmatprep.subr.mxu0 0.0
    %1726 = vmatpush1.msra.mxu0 0.0
    %1727 = vmatprep.subr.mxu0 0.0
    %1728 = vmatpush1.msra.mxu0 0.0
    %1729 = vmatprep.subr.mxu0 0.0
    %1730 = vmatpush1.msra.mxu0 0.0
    %1731 = vmatprep.subr.mxu0 0.0
    %1732 = vmatpush1.msra.mxu0 0.0
    %1733 = vmatprep.subr.mxu0 0.0
    %1734 = vmatpush1.msra.mxu0 0.0
    %1735 = vmatprep.subr.mxu0 0.0
    %1736 = vmatpush1.msra.mxu0 0.0
    %1737 = vmatprep.subr.mxu0 0.0
    %1738 = vmatpush1.msra.mxu0 0.0
    %1739 = vmatprep.subr.mxu0 0.0
    %1740 = vmatpush1.msra.mxu0 0.0
    %1741 = vmatprep.subr.mxu0 0.0
    %1742 = vmatpush1.msra.mxu0 0.0
    %1743 = vmatprep.subr.mxu0 0.0
    %1744 = vmatpush1.msra.mxu0 0.0
    %1745 = vmatprep.subr.mxu0 0.0
    %1746 = vmatpush1.msra.mxu0 0.0
    %1747 = vmatprep.subr.mxu0 0.0
    %1748 = vmatpush1.msra.mxu0 0.0
    %1749 = vmatprep.subr.mxu0 0.0
    %1750 = vmatpush1.msra.mxu0 0.0
    %1751 = vmatprep.subr.mxu0 0.0
    %1752 = vmatpush1.msra.mxu0 0.0
    %1753 = vmatprep.subr.mxu0 0.0
    %1754 = vmatpush1.msra.mxu0 0.0
    %1755 = vmatprep.subr.mxu0 0.0
    %1756 = vmatpush1.msra.mxu0 0.0
    %1757 = vmatprep.subr.mxu0 0.0
    %1758 = vmatpush1.msra.mxu0 0.0
    %1759 = vmatprep.subr.mxu0 0.0
    %1760 = vmatpush1.msra.mxu0 0.0
    %1761 = vmatprep.subr.mxu0 0.0
    %1762 = vmatpush1.msra.mxu0 0.0
    %1763 = vmatprep.subr.mxu0 0.0
    %1764 = vmatpush1.msra.mxu0 0.0
    %1765 = vmatprep.subr.mxu0 0.0
    %1766 = vmatpush1.msra.mxu0 0.0
    %1767 = vmatprep.subr.mxu0 0.0
    %1768 = vmatpush1.msra.mxu0 0.0
    %1769 = vmatprep.subr.mxu0 0.0
    %1770 = vmatpush1.msra.mxu0 0.0
    %1771 = vmatprep.subr.mxu0 0.0
    %1772 = vmatpush1.msra.mxu0 0.0
    %1773 = vmatprep.mubr.f32.mxu0 0.0
    %1774 = vmatmul.mubr.f32.gmra.mrb[0].mxu0 %v1707
    %v1775 = vpop.f32.mrb[0].mxu0
    %v1776 = vadd.f32 0.0, %v1775
    %v1777 = vpop.f32.mrb[0].mxu0
    %1778 = vdwg.mxu0
    %v1779 = vld [vmem:[#allocation9 + $0x18] sm:$0xff]
    %v1781 = vsel %vm183, %v1700, 0
    %v1784 = vsel %vm183, %v1776, 0
    %1786 = vmatprep.subr.mxu0 0.0
    %1787 = vmatpush1.msra.mxu0 %v1779
    %1788 = vmatprep.subr.mxu0 0.0
    %1789 = vmatpush1.msra.mxu0 0.0
    %1790 = vmatprep.subr.mxu0 0.0
    %1791 = vmatpush1.msra.mxu0 0.0
    %1792 = vmatprep.subr.mxu0 0.0
    %1793 = vmatpush1.msra.mxu0 0.0
    %1794 = vmatprep.subr.mxu0 0.0
    %1795 = vmatpush1.msra.mxu0 0.0
    %1796 = vmatprep.subr.mxu0 0.0
    %1797 = vmatpush1.msra.mxu0 0.0
    %1798 = vmatprep.subr.mxu0 0.0
    %1799 = vmatpush1.msra.mxu0 0.0
    %1800 = vmatprep.subr.mxu0 0.0
    %1801 = vmatpush1.msra.mxu0 0.0
    %1802 = vmatprep.subr.mxu0 0.0
    %1803 = vmatpush1.msra.mxu0 0.0
    %1804 = vmatprep.subr.mxu0 0.0
    %1805 = vmatpush1.msra.mxu0 0.0
    %1806 = vmatprep.subr.mxu0 0.0
    %1807 = vmatpush1.msra.mxu0 0.0
    %1808 = vmatprep.subr.mxu0 0.0
    %1809 = vmatpush1.msra.mxu0 0.0
    %1810 = vmatprep.subr.mxu0 0.0
    %1811 = vmatpush1.msra.mxu0 0.0
    %1812 = vmatprep.subr.mxu0 0.0
    %1813 = vmatpush1.msra.mxu0 0.0
    %1814 = vmatprep.subr.mxu0 0.0
    %1815 = vmatpush1.msra.mxu0 0.0
    %1816 = vmatprep.subr.mxu0 0.0
    %1817 = vmatpush1.msra.mxu0 0.0
    %1818 = vmatprep.subr.mxu0 0.0
    %1819 = vmatpush1.msra.mxu0 0.0
    %1820 = vmatprep.subr.mxu0 0.0
    %1821 = vmatpush1.msra.mxu0 0.0
    %1822 = vmatprep.subr.mxu0 0.0
    %1823 = vmatpush1.msra.mxu0 0.0
    %1824 = vmatprep.subr.mxu0 0.0
    %1825 = vmatpush1.msra.mxu0 0.0
    %1826 = vmatprep.subr.mxu0 0.0
    %1827 = vmatpush1.msra.mxu0 0.0
    %1828 = vmatprep.subr.mxu0 0.0
    %1829 = vmatpush1.msra.mxu0 0.0
    %1830 = vmatprep.subr.mxu0 0.0
    %1831 = vmatpush1.msra.mxu0 0.0
    %1832 = vmatprep.subr.mxu0 0.0
    %1833 = vmatpush1.msra.mxu0 0.0
    %1834 = vmatprep.subr.mxu0 0.0
    %1835 = vmatpush1.msra.mxu0 0.0
    %1836 = vmatprep.subr.mxu0 0.0
    %1837 = vmatpush1.msra.mxu0 0.0
    %1838 = vmatprep.subr.mxu0 0.0
    %1839 = vmatpush1.msra.mxu0 0.0
    %1840 = vmatprep.subr.mxu0 0.0
    %1841 = vmatpush1.msra.mxu0 0.0
    %1842 = vmatprep.subr.mxu0 0.0
    %1843 = vmatpush1.msra.mxu0 0.0
    %1844 = vmatprep.subr.mxu0 0.0
    %1845 = vmatpush1.msra.mxu0 0.0
    %1846 = vmatprep.subr.mxu0 0.0
    %1847 = vmatpush1.msra.mxu0 0.0
    %1848 = vmatprep.subr.mxu0 0.0
    %1849 = vmatpush1.msra.mxu0 0.0
    %1850 = vmatprep.mubr.f32.mxu0 0.0
    %1851 = vmatmul.mubr.f32.gmra.mrb[0].mxu0 %v1781
    %v1852 = vpop.f32.mrb[0].mxu0
    %v1853 = vadd.f32 0.0, %v1852
    %v1854 = vpop.f32.mrb[0].mxu0
    %1855 = vmatprep.mubr.f32.mxu0 0.0
    %1856 = vmatmul.mubr.f32.gmra.mrb[0].mxu0 %v1784
    %v1857 = vpop.f32.mrb[0].mxu0
    %v1858 = vadd.f32 0.0, %v1857
    %v1859 = vpop.f32.mrb[0].mxu0
    %1860 = vdwg.mxu0
    %v1861 = vld [vmem:[#allocation3] sm:$0xff]
    %v1862 = vld [vmem:[#allocation3 + $0x8] sm:$0xff]
    %v1863 = vadd.f32 %v1861, %v1853
    %v1864 = vadd.f32 %v1862, %v1858
    %1865 = vst.msk [vmem:[#allocation3] sm:$0xff] %vm93, %v1863
    %1866 = vst.msk [vmem:[#allocation3 + $0x8] sm:$0xff] %vm93, %v1864
    %v1867 = vld [vmem:[#allocation3] sm:$0xff]
    %v1868 = vld [vmem:[#allocation3 + $0x8] sm:$0xff]
    %v1869 = vadd.f32 %v80, %v1867
    %v1870 = vadd.f32 %v81, %v1868
    %v1871 = vld [vmem:[%s4] sm:$0x1]
    %v1873 = vlaneseq
    %v1874 = vshrl.u32 %v1873, 7
    %v1875 = vsub.s32 0, %v1874
    %v1876 = vrot.slane %v1871, %v1875
    %v1878 = vadd.f32 %v1869, %v1876
    %v1879 = vadd.f32 %v1870, %v1876
    %v1880 = vsel %vm93, %v1878, 0.0
    %1881 = vadd.xlane.f32.xlu0 %v1880
    %v1882 = vpop.xlane.xlu0 %1881
    %v1883 = vsel %vm93, %v1879, 0.0
    %1884 = vadd.xlane.f32.xlu0 %v1883
    %v1885 = vpop.xlane.xlu0 %1884
    %v1886 = vrcp.pop 32.0
    %v1887 = vmul.f32 %v1882, %v1886
    %v1888 = vmul.f32 %v1885, %v1886
    %v1889 = vsub.f32 %v1878, %v1887
    %v1890 = vsub.f32 %v1879, %v1888
    %v1891 = vmul.f32 %v1889, %v1889
    %v1892 = vmul.f32 %v1890, %v1890
    %v1893 = vsel %vm93, %v1891, 0.0
    %1894 = vadd.xlane.f32.xlu0 %v1893
    %v1895 = vpop.xlane.xlu0 %1894
    %v1896 = vsel %vm93, %v1892, 0.0
    %1897 = vadd.xlane.f32.xlu0 %v1896
    %v1898 = vpop.xlane.xlu0 %1897
    %v1899 = vmul.f32 %v1895, %v1886
    %v1900 = vmul.f32 %v1898, %v1886
    %v1901 = vadd.f32 %v1899, 1e-05
    %v1902 = vadd.f32 %v1900, 1e-05
    %v1903 = vrsqrt.pop %v1901
    %v1904 = vrsqrt.pop %v1902
    %v1905 = vmul.f32 %v1889, %v1903
    %v1906 = vmul.f32 %v1890, %v1904
    %v1907 = vld [vmem:[%s5] sm:$0x1]
    %v1909 = vlaneseq
    %v1910 = vshrl.u32 %v1909, 7
    %v1911 = vsub.s32 0, %v1910
    %v1912 = vrot.slane %v1907, %v1911
    %v1914 = vmul.f32 %v1905, %v1912
    %v1915 = vmul.f32 %v1906, %v1912
    %v1916 = vld [vmem:[#allocation10] sm:$0x1]
    %v1918 = vlaneseq
    %v1919 = vshrl.u32 %v1918, 7
    %v1920 = vsub.s32 0, %v1919
    %v1921 = vrot.slane %v1916, %v1920
    %v1923 = vadd.f32 %v1914, %v1921
    %v1924 = vadd.f32 %v1915, %v1921
    %1925 = vst.msk [vmem:[#allocation12] sm:$0xff] %vm93, %v1923
    %1926 = vst.msk [vmem:[#allocation12 + $0x8] sm:$0xff] %vm93, %v1924
    // Predicated region
    $region46: #{sa_forward.1} parent=1 // pred_check
      _
    $region47: #{sa_forward.1} parent=1 // pred_check_branch
      %1928 = sbr.rel (0) target = $region49
    $region48: #{sa_forward.1} parent=1 // pred_region
      %s1930 = ssub.s32 256, 256
      %1931 = vsyncadd [#allocation6], %s1930
      %s1932 = sshll.u32 [#allocation12], 4
      %s1933 = int_to_ptr.vmem [resolvable:$true] %s1932
      %1938 = dma.vmem_to_hbm [thread:$0]  %s1933, 256, %s7, [#allocation6], 128, 128, 8
    $region49: #{sa_forward.1} parent=1 // pred_fallthru
      _
    // Predicated region
    $region50: #{sa_forward.1} parent=1 // pred_check
      _
    $region51: #{sa_forward.1} parent=1 // pred_check_branch
      %1940 = sbr.rel (0) target = $region53
    $region52: #{sa_forward.1} parent=1 // pred_region
      %1941 = dma.done [#allocation6], 256
    $region53: #{sa_forward.1} parent=1 // pred_fallthru
      _
    %1942 = vsyncpa [#allocation5], 1
    %1943 = vsyncpa [#allocation8], 1
    %1944 = vsyncpa [#allocation11], 1
    %1945 = vsyncpa [#allocation6], 1

// kernel: sa_forward.1
$region0: #{sa_forward.1}
  #allocation0 [shape = 'u32[]', space=smem, size = 0x4, offset = 0x4, fixed_abs, tag = 'smem constant byte address 0x4 - core index']
  #allocation1 [shape = 'u32[144,128]{1,0:T(1,128)}', space=vmem, size = 0x12000, scoped, tag = 'internal scratch']
  #allocation2 [shape = 'f32[16,96]{1,0:T(8,128)}', space=vmem, size = 0x2000, scoped, tag = 'scratch operand']
  #allocation3 [shape = 'f32[16,32]{1,0:T(8,128)}', space=vmem, size = 0x2000, scoped, tag = 'scratch operand']
  %s0 = inlined_call_operand.hbm [shape: f32[2,8,32], index: 0, kind: input, shape index: {}]
  %s1 = inlined_call_operand.hbm [shape: f32[32,96], index: 1, kind: input, shape index: {}]
  %s2 = inlined_call_operand.vmem [shape: f32[1,96], index: 2, kind: input, shape index: {}]
  %s3 = inlined_call_operand.hbm [shape: f32[32,32], index: 3, kind: input, shape index: {}]
  %s4 = inlined_call_operand.vmem [shape: f32[1,32], index: 4, kind: input, shape index: {}]
  %s5 = inlined_call_operand.vmem [shape: f32[1,32], index: 5, kind: input, shape index: {}]
  %s6 = inlined_call_operand.hbm [shape: f32[1,32], index: 6, kind: input, shape index: {}]
  %s7 = inlined_call_operand.hbm [shape: f32[2,8,32], index: 7, kind: output, shape index: {}]
  %s8 = sld [smem:[#allocation0]]
  $region54: #{sa_forward.1} parent=0
    _
  %s10 = ssub.s32 1, %s8
  %s11 = scalar_select 0, %s10, %s8
  $region1: #{sa_forward.1} parent=0
    #allocation4 [shape = 'u8[8192]{0}', space=vmem, size = 0x2000, scoped, tag = 'input window, operand 0, single buffered']
    #allocation5 [shape = 's32[1]{0}', space=sflag, size = 0x4, scoped, tag = 'scoped memory for sa_forward.1']
    #allocation6 [shape = 's32[1]{0}', space=sflag, size = 0x4, scoped, tag = 'scoped memory for sa_forward.1']
    #allocation7 [shape = 'u8[16384]{0}', space=vmem, size = 0x4000, scoped, tag = 'input window, operand 1, single buffered']
    #allocation8 [shape = 's32[1]{0}', space=sflag, size = 0x4, scoped, tag = 'scoped memory for sa_forward.1']
    #allocation9 [shape = 'u8[16384]{0}', space=vmem, size = 0x4000, scoped, tag = 'input window, operand 3, single buffered']
    #allocation10 [shape = 'u8[512]{0}', space=vmem, size = 0x400, scoped, tag = 'input window, operand 6, single buffered']
    #allocation11 [shape = 's32[1]{0}', space=sflag, size = 0x4, scoped, tag = 'scoped memory for sa_forward.1']
    #allocation12 [shape = 'u8[8192]{0}', space=vmem, size = 0x2000, scoped, tag = 'output window, operand 0, single buffered']
    %12 = vsyncpa [#allocation5], 0
    %13 = vsyncpa [#allocation8], 0
    %14 = vsyncpa [#allocation11], 0
    %15 = vsyncpa [#allocation6], 0
    // Predicated region
    $region2: #{sa_forward.1} parent=1 // pred_check
      _
    $region3: #{sa_forward.1} parent=1 // pred_check_branch
      %17 = sbr.rel (0) target = $region5
    $region4: #{sa_forward.1} parent=1 // pred_region
      %s19 = ssub.s32 256, 256
      %20 = vsyncadd [#allocation5], %s19
      %s21 = sshll.u32 [#allocation4], 4
      %s22 = int_to_ptr.vmem [resolvable:$true] %s21
      %27 = dma.hbm_to_vmem [thread:$0]  %s0, 256, %s22, [#allocation5], 128, 128, 8
    $region5: #{sa_forward.1} parent=1 // pred_fallthru
      _
    // Predicated region
    $region6: #{sa_forward.1} parent=1 // pred_check
      _
    $region7: #{sa_forward.1} parent=1 // pred_check_branch
      %29 = sbr.rel (0) target = $region9
    $region8: #{sa_forward.1} parent=1 // pred_region
      %s31 = ssub.s32 512, 512
      %32 = vsyncadd [#allocation8], %s31
      %s33 = sshll.u32 [#allocation7], 4
      %s34 = int_to_ptr.vmem [resolvable:$true] %s33
      %39 = dma.hbm_to_vmem [thread:$0]  %s1, 512, %s34, [#allocation8], 128, 128, 8
    $region9: #{sa_forward.1} parent=1 // pred_fallthru
      _
    // Predicated region
    $region10: #{sa_forward.1} parent=1 // pred_check
      _
    $region11: #{sa_forward.1} parent=1 // pred_check_branch
      %41 = sbr.rel (0) target = $region13
    $region12: #{sa_forward.1} parent=1 // pred_region
      _
    $region13: #{sa_forward.1} parent=1 // pred_fallthru
      _
    // Predicated region
    $region14: #{sa_forward.1} parent=1 // pred_check
      _
    $region15: #{sa_forward.1} parent=1 // pred_check_branch
      %43 = sbr.rel (0) target = $region17
    $region16: #{sa_forward.1} parent=1 // pred_region
      %s45 = ssub.s32 512, 512
      %46 = vsyncadd [#allocation8], %s45
      %s47 = sshll.u32 [#allocation9], 4
      %s48 = int_to_ptr.vmem [resolvable:$true] %s47
      %53 = dma.hbm_to_vmem [thread:$0]  %s3, 512, %s48, [#allocation8], 128, 128, 8
    $region17: #{sa_forward.1} parent=1 // pred_fallthru
      _
    // Predicated region
    $region18: #{sa_forward.1} parent=1 // pred_check
      _
    $region19: #{sa_forward.1} parent=1 // pred_check_branch
      %55 = sbr.rel (0) target = $region21
    $region20: #{sa_forward.1} parent=1 // pred_region
      _
    $region21: #{sa_forward.1} parent=1 // pred_fallthru
      _
    // Predicated region
    $region22: #{sa_forward.1} parent=1 // pred_check
      _
    $region23: #{sa_forward.1} parent=1 // pred_check_branch
      %57 = sbr.rel (0) target = $region25
    $region24: #{sa_forward.1} parent=1 // pred_region
      _
    $region25: #{sa_forward.1} parent=1 // pred_fallthru
      _
    // Predicated region
    $region26: #{sa_forward.1} parent=1 // pred_check
      _
    $region27: #{sa_forward.1} parent=1 // pred_check_branch
      %59 = sbr.rel (0) target = $region29
    $region28: #{sa_forward.1} parent=1 // pred_region
      %s61 = ssub.s32 16, 16
      %62 = vsyncadd [#allocation11], %s61
      %s64 = sshll.u32 [#allocation10], 4
      %s65 = int_to_ptr.vmem [resolvable:$true] %s64
      %67 = dma.hbm_to_vmem [thread:$0]  %s6, 16, %s65, [#allocation11]
    $region29: #{sa_forward.1} parent=1 // pred_fallthru
      _
    // Predicated region
    $region30: #{sa_forward.1} parent=1 // pred_check
      _
    $region31: #{sa_forward.1} parent=1 // pred_check_branch
      %69 = sbr.rel (0) target = $region33
    $region32: #{sa_forward.1} parent=1 // pred_region
      %70 = dma.done [#allocation5], 256
    $region33: #{sa_forward.1} parent=1 // pred_fallthru
      _
    // Predicated region
    $region34: #{sa_forward.1} parent=1 // pred_check
      _
    $region35: #{sa_forward.1} parent=1 // pred_check_branch
      %72 = sbr.rel (0) target = $region37
    $region36: #{sa_forward.1} parent=1 // pred_region
      %73 = dma.done [#allocation8], 512
    $region37: #{sa_forward.1} parent=1 // pred_fallthru
      _
    // Predicated region
    $region38: #{sa_forward.1} parent=1 // pred_check
      _
    $region39: #{sa_forward.1} parent=1 // pred_check_branch
      %75 = sbr.rel (0) target = $region41
    $region40: #{sa_forward.1} parent=1 // pred_region
      %76 = dma.done [#allocation8], 512
    $region41: #{sa_forward.1} parent=1 // pred_fallthru
      _
    // Predicated region
    $region42: #{sa_forward.1} parent=1 // pred_check
      _
    $region43: #{sa_forward.1} parent=1 // pred_check_branch
      %78 = sbr.rel (0) target = $region45
    $region44: #{sa_forward.1} parent=1 // pred_region
      %79 = dma.done [#allocation11], 16
    $region45: #{sa_forward.1} parent=1 // pred_fallthru
      _
    %v80 = vld [vmem:[#allocation4] sm:$0xff]
    %v81 = vld [vmem:[#allocation4 + $0x8] sm:$0xff]
    %v82 = vld [vmem:[#allocation7] sm:$0xff]
    %v83 = vld [vmem:[#allocation7 + $0x8] sm:$0xff]
    %v84 = vld [vmem:[#allocation7 + $0x10] sm:$0xff]
    %v85 = vld [vmem:[#allocation7 + $0x18] sm:$0xff]
    %v86 = vld [vmem:[%s2] sm:$0x1]
    %v88 = vlaneseq
    %v89 = vshrl.u32 %v88, 7
    %v90 = vsub.s32 0, %v89
    %v91 = vrot.slane %v86, %v90
    %vm93 = vcmask 261120
    %v95 = vsel %vm93, %v80, 0
    %v98 = vsel %vm93, %v81, 0
    %100 = vmatprep.subr.mxu0 0.0
    %101 = vmatpush1.msra.mxu0 %v82
    %102 = vmatprep.subr.mxu0 0.0
    %103 = vmatpush1.msra.mxu0 %v83
    %104 = vmatprep.subr.mxu0 0.0
    %105 = vmatpush1.msra.mxu0 %v84
    %106 = vmatprep.subr.mxu0 0.0
    %107 = vmatpush1.msra.mxu0 %v85
    %108 = vmatprep.subr.mxu0 0.0
    %109 = vmatpush1.msra.mxu0 0.0
    %110 = vmatprep.subr.mxu0 0.0
    %111 = vmatpush1.msra.mxu0 0.0
    %112 = vmatprep.subr.mxu0 0.0
    %113 = vmatpush1.msra.mxu0 0.0
    %114 = vmatprep.subr.mxu0 0.0
    %115 = vmatpush1.msra.mxu0 0.0
    %116 = vmatprep.subr.mxu0 0.0
    %117 = vmatpush1.msra.mxu0 0.0
    %118 = vmatprep.subr.mxu0 0.0
    %119 = vmatpush1.msra.mxu0 0.0
    %120 = vmatprep.subr.mxu0 0.0
    %121 = vmatpush1.msra.mxu0 0.0
    %122 = vmatprep.subr.mxu0 0.0
    %123 = vmatpush1.msra.mxu0 0.0
    %124 = vmatprep.subr.mxu0 0.0
    %125 = vmatpush1.msra.mxu0 0.0
    %126 = vmatprep.subr.mxu0 0.0
    %127 = vmatpush1.msra.mxu0 0.0
    %128 = vmatprep.subr.mxu0 0.0
    %129 = vmatpush1.msra.mxu0 0.0
    %130 = vmatprep.subr.mxu0 0.0
    %131 = vmatpush1.msra.mxu0 0.0
    %132 = vmatprep.subr.mxu0 0.0
    %133 = vmatpush1.msra.mxu0 0.0
    %134 = vmatprep.subr.mxu0 0.0
    %135 = vmatpush1.msra.mxu0 0.0
    %136 = vmatprep.subr.mxu0 0.0
    %137 = vmatpush1.msra.mxu0 0.0
    %138 = vmatprep.subr.mxu0 0.0
    %139 = vmatpush1.msra.mxu0 0.0
    %140 = vmatprep.subr.mxu0 0.0
    %141 = vmatpush1.msra.mxu0 0.0
    %142 = vmatprep.subr.mxu0 0.0
    %143 = vmatpush1.msra.mxu0 0.0
    %144 = vmatprep.subr.mxu0 0.0
    %145 = vmatpush1.msra.mxu0 0.0
    %146 = vmatprep.subr.mxu0 0.0
    %147 = vmatpush1.msra.mxu0 0.0
    %148 = vmatprep.subr.mxu0 0.0
    %149 = vmatpush1.msra.mxu0 0.0
    %150 = vmatprep.subr.mxu0 0.0
    %151 = vmatpush1.msra.mxu0 0.0
    %152 = vmatprep.subr.mxu0 0.0
    %153 = vmatpush1.msra.mxu0 0.0
    %154 = vmatprep.subr.mxu0 0.0
    %155 = vmatpush1.msra.mxu0 0.0
    %156 = vmatprep.subr.mxu0 0.0
    %157 = vmatpush1.msra.mxu0 0.0
    %158 = vmatprep.subr.mxu0 0.0
    %159 = vmatpush1.msra.mxu0 0.0
    %160 = vmatprep.subr.mxu0 0.0
    %161 = vmatpush1.msra.mxu0 0.0
    %162 = vmatprep.subr.mxu0 0.0
    %163 = vmatpush1.msra.mxu0 0.0
    %164 = vmatprep.mubr.f32.mxu0 0.0
    %165 = vmatmul.mubr.f32.gmra.mrb[0].mxu0 %v95
    %v166 = vpop.f32.mrb[0].mxu0
    %v167 = vadd.f32 %v91, %v166
    %v168 = vpop.f32.mrb[0].mxu0
    %169 = vmatprep.mubr.f32.mxu0 0.0
    %170 = vmatmul.mubr.f32.gmra.mrb[0].mxu0 %v98
    %v171 = vpop.f32.mrb[0].mxu0
    %v172 = vadd.f32 %v91, %v171
    %v173 = vpop.f32.mrb[0].mxu0
    %174 = vdwg.mxu0
    %vm175 = vcmask 785408
    %176 = vst.msk [vmem:[#allocation2] sm:$0xff] %vm175, %v167
    %177 = vst.msk [vmem:[#allocation2 + $0x8] sm:$0xff] %vm175, %v172
    %v178 = vld [vmem:[#allocation2] sm:$0xff]
    %v179 = vld [vmem:[#allocation2 + $0x8] sm:$0xff]
    %181 = vrot.lane.b32.xlu0 %v178, 96
    %v182 = vpop.permute.xlu0 %181
    %vm183 = vcmask 64512
    %v184 = vsel %vm183, %v178, 0
    %v186 = vsel %vm183, %v182, 0
    %188 = vmatprep.subr.mxu0 0.0
    %189 = vmatpush1.xpose.msra.mxu0 %v186
    %190 = vmatprep.subr.mxu0 0.0
    %191 = vmatpush1.xpose.msra.mxu0 0.0
    %192 = vmatprep.subr.mxu0 0.0
    %193 = vmatpush1.xpose.msra.mxu0 0.0
    %194 = vmatprep.subr.mxu0 0.0
    %195 = vmatpush1.xpose.msra.mxu0 0.0
    %196 = vmatprep.subr.mxu0 0.0
    %197 = vmatpush1.xpose.msra.mxu0 0.0
    %198 = vmatprep.subr.mxu0 0.0
    %199 = vmatpush1.xpose.msra.mxu0 0.0
    %200 = vmatprep.subr.mxu0 0.0
    %201 = vmatpush1.xpose.msra.mxu0 0.0
    %202 = vmatprep.subr.mxu0 0.0
    %203 = vmatpush1.xpose.msra.mxu0 0.0
    %204 = vmatprep.subr.mxu0 0.0
    %205 = vmatpush1.xpose.msra.mxu0 0.0
    %206 = vmatprep.subr.mxu0 0.0
    %207 = vmatpush1.xpose.msra.mxu0 0.0
    %208 = vmatprep.subr.mxu0 0.0
    %209 = vmatpush1.xpose.msra.mxu0 0.0
    %210 = vmatprep.subr.mxu0 0.0
    %211 = vmatpush1.xpose.msra.mxu0 0.0
    %212 = vmatprep.subr.mxu0 0.0
    %213 = vmatpush1.xpose.msra.mxu0 0.0
    %214 = vmatprep.subr.mxu0 0.0
    %215 = vmatpush1.xpose.msra.mxu0 0.0
    %216 = vmatprep.subr.mxu0 0.0
    %217 = vmatpush1.xpose.msra.mxu0 0.0
    %218 = vmatprep.subr.mxu0 0.0
    %219 = vmatpush1.xpose.msra.mxu0 0.0
    %220 = vmatprep.subr.mxu0 0.0
    %221 = vmatpush1.xpose.msra.mxu0 0.0
    %222 = vmatprep.subr.mxu0 0.0
    %223 = vmatpush1.xpose.msra.mxu0 0.0
    %224 = vmatprep.subr.mxu0 0.0
    %225 = vmatpush1.xpose.msra.mxu0 0.0
    %226 = vmatprep.subr.mxu0 0.0
    %227 = vmatpush1.xpose.msra.mxu0 0.0
    %228 = vmatprep.subr.mxu0 0.0
    %229 = vmatpush1.xpose.msra.mxu0 0.0
    %230 = vmatprep.subr.mxu0 0.0
    %231 = vmatpush1.xpose.msra.mxu0 0.0
    %232 = vmatprep.subr.mxu0 0.0
    %233 = vmatpush1.xpose.msra.mxu0 0.0
    %234 = vmatprep.subr.mxu0 0.0
    %235 = vmatpush1.xpose.msra.mxu0 0.0
    %236 = vmatprep.subr.mxu0 0.0
    %237 = vmatpush1.xpose.msra.mxu0 0.0
    %238 = vmatprep.subr.mxu0 0.0
    %239 = vmatpush1.xpose.msra.mxu0 0.0
    %240 = vmatprep.subr.mxu0 0.0
    %241 = vmatpush1.xpose.msra.mxu0 0.0
    %242 = vmatprep.subr.mxu0 0.0
    %243 = vmatpush1.xpose.msra.mxu0 0.0
    %244 = vmatprep.subr.mxu0 0.0
    %245 = vmatpush1.xpose.msra.mxu0 0.0
    %246 = vmatprep.subr.mxu0 0.0
    %247 = vmatpush1.xpose.msra.mxu0 0.0
    %248 = vmatprep.subr.mxu0 0.0
    %249 = vmatpush1.xpose.msra.mxu0 0.0
    %250 = vmatprep.subr.mxu0 0.0
    %251 = vmatpush1.xpose.msra.mxu0 0.0
    %252 = vmatprep.mubr.f32.mxu0 0.0
    %253 = vmatmul.mubr.f32.gmra.mrb[0].mxu0 %v184
    %v254 = vpop.f32.mrb[0].mxu0
    %v255 = vadd.f32 0.0, %v254
    %v256 = vpop.f32.mrb[0].mxu0
    %257 = vdwg.mxu0
    %259 = vrot.lane.b32.xlu0 %v179, 96
    %v260 = vpop.permute.xlu0 %259
    %v261 = vsel %vm183, %v179, 0
    %v263 = vsel %vm183, %v260, 0
    %265 = vmatprep.subr.mxu0 0.0
    %266 = vmatpush1.xpose.msra.mxu0 %v263
    %267 = vmatprep.subr.mxu0 0.0
    %268 = vmatpush1.xpose.msra.mxu0 0.0
    %269 = vmatprep.subr.mxu0 0.0
    %270 = vmatpush1.xpose.msra.mxu0 0.0
    %271 = vmatprep.subr.mxu0 0.0
    %272 = vmatpush1.xpose.msra.mxu0 0.0
    %273 = vmatprep.subr.mxu0 0.0
    %274 = vmatpush1.xpose.msra.mxu0 0.0
    %275 = vmatprep.subr.mxu0 0.0
    %276 = vmatpush1.xpose.msra.mxu0 0.0
    %277 = vmatprep.subr.mxu0 0.0
    %278 = vmatpush1.xpose.msra.mxu0 0.0
    %279 = vmatprep.subr.mxu0 0.0
    %280 = vmatpush1.xpose.msra.mxu0 0.0
    %281 = vmatprep.subr.mxu0 0.0
    %282 = vmatpush1.xpose.msra.mxu0 0.0
    %283 = vmatprep.subr.mxu0 0.0
    %284 = vmatpush1.xpose.msra.mxu0 0.0
    %285 = vmatprep.subr.mxu0 0.0
    %286 = vmatpush1.xpose.msra.mxu0 0.0
    %287 = vmatprep.subr.mxu0 0.0
    %288 = vmatpush1.xpose.msra.mxu0 0.0
    %289 = vmatprep.subr.mxu0 0.0
    %290 = vmatpush1.xpose.msra.mxu0 0.0
    %291 = vmatprep.subr.mxu0 0.0
    %292 = vmatpush1.xpose.msra.mxu0 0.0
    %293 = vmatprep.subr.mxu0 0.0
    %294 = vmatpush1.xpose.msra.mxu0 0.0
    %295 = vmatprep.subr.mxu0 0.0
    %296 = vmatpush1.xpose.msra.mxu0 0.0
    %297 = vmatprep.subr.mxu0 0.0
    %298 = vmatpush1.xpose.msra.mxu0 0.0
    %299 = vmatprep.subr.mxu0 0.0
    %300 = vmatpush1.xpose.msra.mxu0 0.0
    %301 = vmatprep.subr.mxu0 0.0
    %302 = vmatpush1.xpose.msra.mxu0 0.0
    %303 = vmatprep.subr.mxu0 0.0
    %304 = vmatpush1.xpose.msra.mxu0 0.0
    %305 = vmatprep.subr.mxu0 0.0
    %306 = vmatpush1.xpose.msra.mxu0 0.0
    %307 = vmatprep.subr.mxu0 0.0
    %308 = vmatpush1.xpose.msra.mxu0 0.0
    %309 = vmatprep.subr.mxu0 0.0
    %310 = vmatpush1.xpose.msra.mxu0 0.0
    %311 = vmatprep.subr.mxu0 0.0
    %312 = vmatpush1.xpose.msra.mxu0 0.0
    %313 = vmatprep.subr.mxu0 0.0
    %314 = vmatpush1.xpose.msra.mxu0 0.0
    %315 = vmatprep.subr.mxu0 0.0
    %316 = vmatpush1.xpose.msra.mxu0 0.0
    %317 = vmatprep.subr.mxu0 0.0
    %318 = vmatpush1.xpose.msra.mxu0 0.0
    %319 = vmatprep.subr.mxu0 0.0
    %320 = vmatpush1.xpose.msra.mxu0 0.0
    %321 = vmatprep.subr.mxu0 0.0
    %322 = vmatpush1.xpose.msra.mxu0 0.0
    %323 = vmatprep.subr.mxu0 0.0
    %324 = vmatpush1.xpose.msra.mxu0 0.0
    %325 = vmatprep.subr.mxu0 0.0
    %326 = vmatpush1.xpose.msra.mxu0 0.0
    %327 = vmatprep.subr.mxu0 0.0
    %328 = vmatpush1.xpose.msra.mxu0 0.0
    %329 = vmatprep.mubr.f32.mxu0 0.0
    %330 = vmatmul.mubr.f32.gmra.mrb[0].mxu0 %v261
    %v331 = vpop.f32.mrb[0].mxu0
    %v332 = vadd.f32 0.0, %v331
    %v333 = vpop.f32.mrb[0].mxu0
    %334 = vdwg.mxu0
    %v335 = vmul.f32 %v255, 0.35355338
    %v336 = vmul.f32 %v332, 0.35355338
    %v337 = vsel %vm183, %v335, -inf
    %338 = vmax.xlane.f32.xlu0 %v337
    %v339 = vpop.xlane.xlu0 %338
    %v340 = vsel %vm183, %v336, -inf
    %341 = vmax.xlane.f32.xlu0 %v340
    %v342 = vpop.xlane.xlu0 %341
    %v343 = vsub.f32 %v335, %v339
    %v344 = vsub.f32 %v336, %v342
    %v345 = vmul.f32 %v343, 1.442695
    %v346 = vpow.pop %v345
    %v347 = vmul.f32 %v344, 1.442695
    %v348 = vpow.pop %v347
    %v349 = vsel %vm183, %v346, 0.0
    %350 = vadd.xlane.f32.xlu0 %v349
    %v351 = vpop.xlane.xlu0 %350
    %v352 = vsel %vm183, %v348, 0.0
    %353 = vadd.xlane.f32.xlu0 %v352
    %v354 = vpop.xlane.xlu0 %353
    %v355 = vrcp.pop %v351
    %v356 = vrcp.pop %v354
    %v357 = vmul.f32 %v346, %v355
    %v358 = vmul.f32 %v348, %v356
    %359 = vrot.lane.b32.xlu0 %v178, 64
    %v360 = vpop.permute.xlu0 %359
    %v363 = vsel %vm183, %v357, 0
    %365 = vmatprep.subr.mxu0 0.0
    %366 = vmatpush1.msra.mxu0 %v360
    %367 = vmatprep.subr.mxu0 0.0
    %368 = vmatpush1.msra.mxu0 0.0
    %369 = vmatprep.subr.mxu0 0.0
    %370 = vmatpush1.msra.mxu0 0.0
    %371 = vmatprep.subr.mxu0 0.0
    %372 = vmatpush1.msra.mxu0 0.0
    %373 = vmatprep.subr.mxu0 0.0
    %374 = vmatpush1.msra.mxu0 0.0
    %375 = vmatprep.subr.mxu0 0.0
    %376 = vmatpush1.msra.mxu0 0.0
    %377 = vmatprep.subr.mxu0 0.0
    %378 = vmatpush1.msra.mxu0 0.0
    %379 = vmatprep.subr.mxu0 0.0
    %380 = vmatpush1.msra.mxu0 0.0
    %381 = vmatprep.subr.mxu0 0.0
    %382 = vmatpush1.msra.mxu0 0.0
    %383 = vmatprep.subr.mxu0 0.0
    %384 = vmatpush1.msra.mxu0 0.0
    %385 = vmatprep.subr.mxu0 0.0
    %386 = vmatpush1.msra.mxu0 0.0
    %387 = vmatprep.subr.mxu0 0.0
    %388 = vmatpush1.msra.mxu0 0.0
    %389 = vmatprep.subr.mxu0 0.0
    %390 = vmatpush1.msra.mxu0 0.0
    %391 = vmatprep.subr.mxu0 0.0
    %392 = vmatpush1.msra.mxu0 0.0
    %393 = vmatprep.subr.mxu0 0.0
    %394 = vmatpush1.msra.mxu0 0.0
    %395 = vmatprep.subr.mxu0 0.0
    %396 = vmatpush1.msra.mxu0 0.0
    %397 = vmatprep.subr.mxu0 0.0
    %398 = vmatpush1.msra.mxu0 0.0
    %399 = vmatprep.subr.mxu0 0.0
    %400 = vmatpush1.msra.mxu0 0.0
    %401 = vmatprep.subr.mxu0 0.0
    %402 = vmatpush1.msra.mxu0 0.0
    %403 = vmatprep.subr.mxu0 0.0
    %404 = vmatpush1.msra.mxu0 0.0
    %405 = vmatprep.subr.mxu0 0.0
    %406 = vmatpush1.msra.mxu0 0.0
    %407 = vmatprep.subr.mxu0 0.0
    %408 = vmatpush1.msra.mxu0 0.0
    %409 = vmatprep.subr.mxu0 0.0
    %410 = vmatpush1.msra.mxu0 0.0
    %411 = vmatprep.subr.mxu0 0.0
    %412 = vmatpush1.msra.mxu0 0.0
    %413 = vmatprep.subr.mxu0 0.0
    %414 = vmatpush1.msra.mxu0 0.0
    %415 = vmatprep.subr.mxu0 0.0
    %416 = vmatpush1.msra.mxu0 0.0
    %417 = vmatprep.subr.mxu0 0.0
    %418 = vmatpush1.msra.mxu0 0.0
    %419 = vmatprep.subr.mxu0 0.0
    %420 = vmatpush1.msra.mxu0 0.0
    %421 = vmatprep.subr.mxu0 0.0
    %422 = vmatpush1.msra.mxu0 0.0
    %423 = vmatprep.subr.mxu0 0.0
    %424 = vmatpush1.msra.mxu0 0.0
    %425 = vmatprep.subr.mxu0 0.0
    %426 = vmatpush1.msra.mxu0 0.0
    %427 = vmatprep.subr.mxu0 0.0
    %428 = vmatpush1.msra.mxu0 0.0
    %429 = vmatprep.mubr.f32.mxu0 0.0
    %430 = vmatmul.mubr.f32.gmra.mrb[0].mxu0 %v363
    %v431 = vpop.f32.mrb[0].mxu0
    %v432 = vadd.f32 0.0, %v431
    %v433 = vpop.f32.mrb[0].mxu0
    %434 = vdwg.mxu0
    %435 = vrot.lane.b32.xlu0 %v179, 64
    %v436 = vpop.permute.xlu0 %435
    %v439 = vsel %vm183, %v358, 0
    %441 = vmatprep.subr.mxu0 0.0
    %442 = vmatpush1.msra.mxu0 %v436
    %443 = vmatprep.subr.mxu0 0.0
    %444 = vmatpush1.msra.mxu0 0.0
    %445 = vmatprep.subr.mxu0 0.0
    %446 = vmatpush1.msra.mxu0 0.0
    %447 = vmatprep.subr.mxu0 0.0
    %448 = vmatpush1.msra.mxu0 0.0
    %449 = vmatprep.subr.mxu0 0.0
    %450 = vmatpush1.msra.mxu0 0.0
    %451 = vmatprep.subr.mxu0 0.0
    %452 = vmatpush1.msra.mxu0 0.0
    %453 = vmatprep.subr.mxu0 0.0
    %454 = vmatpush1.msra.mxu0 0.0
    %455 = vmatprep.subr.mxu0 0.0
    %456 = vmatpush1.msra.mxu0 0.0
    %457 = vmatprep.subr.mxu0 0.0
    %458 = vmatpush1.msra.mxu0 0.0
    %459 = vmatprep.subr.mxu0 0.0
    %460 = vmatpush1.msra.mxu0 0.0
    %461 = vmatprep.subr.mxu0 0.0
    %462 = vmatpush1.msra.mxu0 0.0
    %463 = vmatprep.subr.mxu0 0.0
    %464 = vmatpush1.msra.mxu0 0.0
    %465 = vmatprep.subr.mxu0 0.0
    %466 = vmatpush1.msra.mxu0 0.0
    %467 = vmatprep.subr.mxu0 0.0
    %468 = vmatpush1.msra.mxu0 0.0
    %469 = vmatprep.subr.mxu0 0.0
    %470 = vmatpush1.msra.mxu0 0.0
    %471 = vmatprep.subr.mxu0 0.0
    %472 = vmatpush1.msra.mxu0 0.0
    %473 = vmatprep.subr.mxu0 0.0
    %474 = vmatpush1.msra.mxu0 0.0
    %475 = vmatprep.subr.mxu0 0.0
    %476 = vmatpush1.msra.mxu0 0.0
    %477 = vmatprep.subr.mxu0 0.0
    %478 = vmatpush1.msra.mxu0 0.0
    %479 = vmatprep.subr.mxu0 0.0
    %480 = vmatpush1.msra.mxu0 0.0
    %481 = vmatprep.subr.mxu0 0.0
    %482 = vmatpush1.msra.mxu0 0.0
    %483 = vmatprep.subr.mxu0 0.0
    %484 = vmatpush1.msra.mxu0 0.0
    %485 = vmatprep.subr.mxu0 0.0
    %486 = vmatpush1.msra.mxu0 0.0
    %487 = vmatprep.subr.mxu0 0.0
    %488 = vmatpush1.msra.mxu0 0.0
    %489 = vmatprep.subr.mxu0 0.0
    %490 = vmatpush1.msra.mxu0 0.0
    %491 = vmatprep.subr.mxu0 0.0
    %492 = vmatpush1.msra.mxu0 0.0
    %493 = vmatprep.subr.mxu0 0.0
    %494 = vmatpush1.msra.mxu0 0.0
    %495 = vmatprep.subr.mxu0 0.0
    %496 = vmatpush1.msra.mxu0 0.0
    %497 = vmatprep.subr.mxu0 0.0
    %498 = vmatpush1.msra.mxu0 0.0
    %499 = vmatprep.subr.mxu0 0.0
    %500 = vmatpush1.msra.mxu0 0.0
    %501 = vmatprep.subr.mxu0 0.0
    %502 = vmatpush1.msra.mxu0 0.0
    %503 = vmatprep.subr.mxu0 0.0
    %504 = vmatpush1.msra.mxu0 0.0
    %505 = vmatprep.mubr.f32.mxu0 0.0
    %506 = vmatmul.mubr.f32.gmra.mrb[0].mxu0 %v439
    %v507 = vpop.f32.mrb[0].mxu0
    %v508 = vadd.f32 0.0, %v507
    %v509 = vpop.f32.mrb[0].mxu0
    %510 = vdwg.mxu0
    %v511 = vld [vmem:[#allocation9] sm:$0xff]
    %v513 = vsel %vm183, %v432, 0
    %v516 = vsel %vm183, %v508, 0
    %518 = vmatprep.subr.mxu0 0.0
    %519 = vmatpush1.msra.mxu0 %v511
    %520 = vmatprep.subr.mxu0 0.0
    %521 = vmatpush1.msra.mxu0 0.0
    %522 = vmatprep.subr.mxu0 0.0
    %523 = vmatpush1.msra.mxu0 0.0
    %524 = vmatprep.subr.mxu0 0.0
    %525 = vmatpush1.msra.mxu0 0.0
    %526 = vmatprep.subr.mxu0 0.0
    %527 = vmatpush1.msra.mxu0 0.0
    %528 = vmatprep.subr.mxu0 0.0
    %529 = vmatpush1.msra.mxu0 0.0
    %530 = vmatprep.subr.mxu0 0.0
    %531 = vmatpush1.msra.mxu0 0.0
    %532 = vmatprep.subr.mxu0 0.0
    %533 = vmatpush1.msra.mxu0 0.0
    %534 = vmatprep.subr.mxu0 0.0
    %535 = vmatpush1.msra.mxu0 0.0
    %536 = vmatprep.subr.mxu0 0.0
    %537 = vmatpush1.msra.mxu0 0.0
    %538 = vmatprep.subr.mxu0 0.0
    %539 = vmatpush1.msra.mxu0 0.0
    %540 = vmatprep.subr.mxu0 0.0
    %541 = vmatpush1.msra.mxu0 0.0
    %542 = vmatprep.subr.mxu0 0.0
    %543 = vmatpush1.msra.mxu0 0.0
    %544 = vmatprep.subr.mxu0 0.0
    %545 = vmatpush1.msra.mxu0 0.0
    %546 = vmatprep.subr.mxu0 0.0
    %547 = vmatpush1.msra.mxu0 0.0
    %548 = vmatprep.subr.mxu0 0.0
    %549 = vmatpush1.msra.mxu0 0.0
    %550 = vmatprep.subr.mxu0 0.0
    %551 = vmatpush1.msra.mxu0 0.0
    %552 = vmatprep.subr.mxu0 0.0
    %553 = vmatpush1.msra.mxu0 0.0
    %554 = vmatprep.subr.mxu0 0.0
    %555 = vmatpush1.msra.mxu0 0.0
    %556 = vmatprep.subr.mxu0 0.0
    %557 = vmatpush1.msra.mxu0 0.0
    %558 = vmatprep.subr.mxu0 0.0
    %559 = vmatpush1.msra.mxu0 0.0
    %560 = vmatprep.subr.mxu0 0.0
    %561 = vmatpush1.msra.mxu0 0.0
    %562 = vmatprep.subr.mxu0 0.0
    %563 = vmatpush1.msra.mxu0 0.0
    %564 = vmatprep.subr.mxu0 0.0
    %565 = vmatpush1.msra.mxu0 0.0
    %566 = vmatprep.subr.mxu0 0.0
    %567 = vmatpush1.msra.mxu0 0.0
    %568 = vmatprep.subr.mxu0 0.0
    %569 = vmatpush1.msra.mxu0 0.0
    %570 = vmatprep.subr.mxu0 0.0
    %571 = vmatpush1.msra.mxu0 0.0
    %572 = vmatprep.subr.mxu0 0.0
    %573 = vmatpush1.msra.mxu0 0.0
    %574 = vmatprep.subr.mxu0 0.0
    %575 = vmatpush1.msra.mxu0 0.0
    %576 = vmatprep.subr.mxu0 0.0
    %577 = vmatpush1.msra.mxu0 0.0
    %578 = vmatprep.subr.mxu0 0.0
    %579 = vmatpush1.msra.mxu0 0.0
    %580 = vmatprep.subr.mxu0 0.0
    %581 = vmatpush1.msra.mxu0 0.0
    %582 = vmatprep.mubr.f32.mxu0 0.0
    %583 = vmatmul.mubr.f32.gmra.mrb[0].mxu0 %v513
    %v584 = vpop.f32.mrb[0].mxu0
    %v585 = vadd.f32 0.0, %v584
    %v586 = vpop.f32.mrb[0].mxu0
    %587 = vmatprep.mubr.f32.mxu0 0.0
    %588 = vmatmul.mubr.f32.gmra.mrb[0].mxu0 %v516
    %v589 = vpop.f32.mrb[0].mxu0
    %v590 = vadd.f32 0.0, %v589
    %v591 = vpop.f32.mrb[0].mxu0
    %592 = vdwg.mxu0
    %593 = vst.msk [vmem:[#allocation3] sm:$0xff] %vm93, %v585
    %594 = vst.msk [vmem:[#allocation3 + $0x8] sm:$0xff] %vm93, %v590
    %v595 = vld [vmem:[#allocation2] sm:$0xff]
    %v596 = vld [vmem:[#allocation2 + $0x8] sm:$0xff]
    %598 = vrot.lane.b32.xlu0 %v595, 120
    %v599 = vpop.permute.xlu0 %598
    %600 = vrot.lane.b32.xlu0 %v595, 88
    %v601 = vpop.permute.xlu0 %600
    %v602 = vsel %vm183, %v599, 0
    %v604 = vsel %vm183, %v601, 0
    %606 = vmatprep.subr.mxu0 0.0
    %607 = vmatpush1.xpose.msra.mxu0 %v604
    %608 = vmatprep.subr.mxu0 0.0
    %609 = vmatpush1.xpose.msra.mxu0 0.0
    %610 = vmatprep.subr.mxu0 0.0
    %611 = vmatpush1.xpose.msra.mxu0 0.0
    %612 = vmatprep.subr.mxu0 0.0
    %613 = vmatpush1.xpose.msra.mxu0 0.0
    %614 = vmatprep.subr.mxu0 0.0
    %615 = vmatpush1.xpose.msra.mxu0 0.0
    %616 = vmatprep.subr.mxu0 0.0
    %617 = vmatpush1.xpose.msra.mxu0 0.0
    %618 = vmatprep.subr.mxu0 0.0
    %619 = vmatpush1.xpose.msra.mxu0 0.0
    %620 = vmatprep.subr.mxu0 0.0
    %621 = vmatpush1.xpose.msra.mxu0 0.0
    %622 = vmatprep.subr.mxu0 0.0
    %623 = vmatpush1.xpose.msra.mxu0 0.0
    %624 = vmatprep.subr.mxu0 0.0
    %625 = vmatpush1.xpose.msra.mxu0 0.0
    %626 = vmatprep.subr.mxu0 0.0
    %627 = vmatpush1.xpose.msra.mxu0 0.0
    %628 = vmatprep.subr.mxu0 0.0
    %629 = vmatpush1.xpose.msra.mxu0 0.0
    %630 = vmatprep.subr.mxu0 0.0
    %631 = vmatpush1.xpose.msra.mxu0 0.0
    %632 = vmatprep.subr.mxu0 0.0
    %633 = vmatpush1.xpose.msra.mxu0 0.0
    %634 = vmatprep.subr.mxu0 0.0
    %635 = vmatpush1.xpose.msra.mxu0 0.0
    %636 = vmatprep.subr.mxu0 0.0
    %637 = vmatpush1.xpose.msra.mxu0 0.0
    %638 = vmatprep.subr.mxu0 0.0
    %639 = vmatpush1.xpose.msra.mxu0 0.0
    %640 = vmatprep.subr.mxu0 0.0
    %641 = vmatpush1.xpose.msra.mxu0 0.0
    %642 = vmatprep.subr.mxu0 0.0
    %643 = vmatpush1.xpose.msra.mxu0 0.0
    %644 = vmatprep.subr.mxu0 0.0
    %645 = vmatpush1.xpose.msra.mxu0 0.0
    %646 = vmatprep.subr.mxu0 0.0
    %647 = vmatpush1.xpose.msra.mxu0 0.0
    %648 = vmatprep.subr.mxu0 0.0
    %649 = vmatpush1.xpose.msra.mxu0 0.0
    %650 = vmatprep.subr.mxu0 0.0
    %651 = vmatpush1.xpose.msra.mxu0 0.0
    %652 = vmatprep.subr.mxu0 0.0
    %653 = vmatpush1.xpose.msra.mxu0 0.0
    %654 = vmatprep.subr.mxu0 0.0
    %655 = vmatpush1.xpose.msra.mxu0 0.0
    %656 = vmatprep.subr.mxu0 0.0
    %657 = vmatpush1.xpose.msra.mxu0 0.0
    %658 = vmatprep.subr.mxu0 0.0
    %659 = vmatpush1.xpose.msra.mxu0 0.0
    %660 = vmatprep.subr.mxu0 0.0
    %661 = vmatpush1.xpose.msra.mxu0 0.0
    %662 = vmatprep.subr.mxu0 0.0
    %663 = vmatpush1.xpose.msra.mxu0 0.0
    %664 = vmatprep.subr.mxu0 0.0
    %665 = vmatpush1.xpose.msra.mxu0 0.0
    %666 = vmatprep.subr.mxu0 0.0
    %667 = vmatpush1.xpose.msra.mxu0 0.0
    %668 = vmatprep.subr.mxu0 0.0
    %669 = vmatpush1.xpose.msra.mxu0 0.0
    %670 = vmatprep.mubr.f32.mxu0 0.0
    %671 = vmatmul.mubr.f32.gmra.mrb[0].mxu0 %v602
    %v672 = vpop.f32.mrb[0].mxu0
    %v673 = vadd.f32 0.0, %v672
    %v674 = vpop.f32.mrb[0].mxu0
    %675 = vdwg.mxu0
    %677 = vrot.lane.b32.xlu0 %v596, 120
    %v678 = vpop.permute.xlu0 %677
    %679 = vrot.lane.b32.xlu0 %v596, 88
    %v680 = vpop.permute.xlu0 %679
    %v681 = vsel %vm183, %v678, 0
    %v683 = vsel %vm183, %v680, 0
    %685 = vmatprep.subr.mxu0 0.0
    %686 = vmatpush1.xpose.msra.mxu0 %v683
    %687 = vmatprep.subr.mxu0 0.0
    %688 = vmatpush1.xpose.msra.mxu0 0.0
    %689 = vmatprep.subr.mxu0 0.0
    %690 = vmatpush1.xpose.msra.mxu0 0.0
    %691 = vmatprep.subr.mxu0 0.0
    %692 = vmatpush1.xpose.msra.mxu0 0.0
    %693 = vmatprep.subr.mxu0 0.0
    %694 = vmatpush1.xpose.msra.mxu0 0.0
    %695 = vmatprep.subr.mxu0 0.0
    %696 = vmatpush1.xpose.msra.mxu0 0.0
    %697 = vmatprep.subr.mxu0 0.0
    %698 = vmatpush1.xpose.msra.mxu0 0.0
    %699 = vmatprep.subr.mxu0 0.0
    %700 = vmatpush1.xpose.msra.mxu0 0.0
    %701 = vmatprep.subr.mxu0 0.0
    %702 = vmatpush1.xpose.msra.mxu0 0.0
    %703 = vmatprep.subr.mxu0 0.0
    %704 = vmatpush1.xpose.msra.mxu0 0.0
    %705 = vmatprep.subr.mxu0 0.0
    %706 = vmatpush1.xpose.msra.mxu0 0.0
    %707 = vmatprep.subr.mxu0 0.0
    %708 = vmatpush1.xpose.msra.mxu0 0.0
    %709 = vmatprep.subr.mxu0 0.0
    %710 = vmatpush1.xpose.msra.mxu0 0.0
    %711 = vmatprep.subr.mxu0 0.0
    %712 = vmatpush1.xpose.msra.mxu0 0.0
    %713 = vmatprep.subr.mxu0 0.0
    %714 = vmatpush1.xpose.msra.mxu0 0.0
    %715 = vmatprep.subr.mxu0 0.0
    %716 = vmatpush1.xpose.msra.mxu0 0.0
    %717 = vmatprep.subr.mxu0 0.0
    %718 = vmatpush1.xpose.msra.mxu0 0.0
    %719 = vmatprep.subr.mxu0 0.0
    %720 = vmatpush1.xpose.msra.mxu0 0.0
    %721 = vmatprep.subr.mxu0 0.0
    %722 = vmatpush1.xpose.msra.mxu0 0.0
    %723 = vmatprep.subr.mxu0 0.0
    %724 = vmatpush1.xpose.msra.mxu0 0.0
    %725 = vmatprep.subr.mxu0 0.0
    %726 = vmatpush1.xpose.msra.mxu0 0.0
    %727 = vmatprep.subr.mxu0 0.0
    %728 = vmatpush1.xpose.msra.mxu0 0.0
    %729 = vmatprep.subr.mxu0 0.0
    %730 = vmatpush1.xpose.msra.mxu0 0.0
    %731 = vmatprep.subr.mxu0 0.0
    %732 = vmatpush1.xpose.msra.mxu0 0.0
    %733 = vmatprep.subr.mxu0 0.0
    %734 = vmatpush1.xpose.msra.mxu0 0.0
    %735 = vmatprep.subr.mxu0 0.0
    %736 = vmatpush1.xpose.msra.mxu0 0.0
    %737 = vmatprep.subr.mxu0 0.0
    %738 = vmatpush1.xpose.msra.mxu0 0.0
    %739 = vmatprep.subr.mxu0 0.0
    %740 = vmatpush1.xpose.msra.mxu0 0.0
    %741 = vmatprep.subr.mxu0 0.0
    %742 = vmatpush1.xpose.msra.mxu0 0.0
    %743 = vmatprep.subr.mxu0 0.0
    %744 = vmatpush1.xpose.msra.mxu0 0.0
    %745 = vmatprep.subr.mxu0 0.0
    %746 = vmatpush1.xpose.msra.mxu0 0.0
    %747 = vmatprep.subr.mxu0 0.0
    %748 = vmatpush1.xpose.msra.mxu0 0.0
    %749 = vmatprep.mubr.f32.mxu0 0.0
    %750 = vmatmul.mubr.f32.gmra.mrb[0].mxu0 %v681
    %v751 = vpop.f32.mrb[0].mxu0
    %v752 = vadd.f32 0.0, %v751
    %v753 = vpop.f32.mrb[0].mxu0
    %754 = vdwg.mxu0
    %v755 = vmul.f32 %v673, 0.35355338
    %v756 = vmul.f32 %v752, 0.35355338
    %v757 = vsel %vm183, %v755, -inf
    %758 = vmax.xlane.f32.xlu0 %v757
    %v759 = vpop.xlane.xlu0 %758
    %v760 = vsel %vm183, %v756, -inf
    %761 = vmax.xlane.f32.xlu0 %v760
    %v762 = vpop.xlane.xlu0 %761
    %v763 = vsub.f32 %v755, %v759
    %v764 = vsub.f32 %v756, %v762
    %v765 = vmul.f32 %v763, 1.442695
    %v766 = vpow.pop %v765
    %v767 = vmul.f32 %v764, 1.442695
    %v768 = vpow.pop %v767
    %v769 = vsel %vm183, %v766, 0.0
    %770 = vadd.xlane.f32.xlu0 %v769
    %v771 = vpop.xlane.xlu0 %770
    %v772 = vsel %vm183, %v768, 0.0
    %773 = vadd.xlane.f32.xlu0 %v772
    %v774 = vpop.xlane.xlu0 %773
    %v775 = vrcp.pop %v771
    %v776 = vrcp.pop %v774
    %v777 = vmul.f32 %v766, %v775
    %v778 = vmul.f32 %v768, %v776
    %779 = vrot.lane.b32.xlu0 %v595, 56
    %v780 = vpop.permute.xlu0 %779
    %v783 = vsel %vm183, %v777, 0
    %785 = vmatprep.subr.mxu0 0.0
    %786 = vmatpush1.msra.mxu0 %v780
    %787 = vmatprep.subr.mxu0 0.0
    %788 = vmatpush1.msra.mxu0 0.0
    %789 = vmatprep.subr.mxu0 0.0
    %790 = vmatpush1.msra.mxu0 0.0
    %791 = vmatprep.subr.mxu0 0.0
    %792 = vmatpush1.msra.mxu0 0.0
    %793 = vmatprep.subr.mxu0 0.0
    %794 = vmatpush1.msra.mxu0 0.0
    %795 = vmatprep.subr.mxu0 0.0
    %796 = vmatpush1.msra.mxu0 0.0
    %797 = vmatprep.subr.mxu0 0.0
    %798 = vmatpush1.msra.mxu0 0.0
    %799 = vmatprep.subr.mxu0 0.0
    %800 = vmatpush1.msra.mxu0 0.0
    %801 = vmatprep.subr.mxu0 0.0
    %802 = vmatpush1.msra.mxu0 0.0
    %803 = vmatprep.subr.mxu0 0.0
    %804 = vmatpush1.msra.mxu0 0.0
    %805 = vmatprep.subr.mxu0 0.0
    %806 = vmatpush1.msra.mxu0 0.0
    %807 = vmatprep.subr.mxu0 0.0
    %808 = vmatpush1.msra.mxu0 0.0
    %809 = vmatprep.subr.mxu0 0.0
    %810 = vmatpush1.msra.mxu0 0.0
    %811 = vmatprep.subr.mxu0 0.0
    %812 = vmatpush1.msra.mxu0 0.0
    %813 = vmatprep.subr.mxu0 0.0
    %814 = vmatpush1.msra.mxu0 0.0
    %815 = vmatprep.subr.mxu0 0.0
    %816 = vmatpush1.msra.mxu0 0.0
    %817 = vmatprep.subr.mxu0 0.0
    %818 = vmatpush1.msra.mxu0 0.0
    %819 = vmatprep.subr.mxu0 0.0
    %820 = vmatpush1.msra.mxu0 0.0
    %821 = vmatprep.subr.mxu0 0.0
    %822 = vmatpush1.msra.mxu0 0.0
    %823 = vmatprep.subr.mxu0 0.0
    %824 = vmatpush1.msra.mxu0 0.0
    %825 = vmatprep.subr.mxu0 0.0
    %826 = vmatpush1.msra.mxu0 0.0
    %827 = vmatprep.subr.mxu0 0.0
    %828 = vmatpush1.msra.mxu0 0.0
    %829 = vmatprep.subr.mxu0 0.0
    %830 = vmatpush1.msra.mxu0 0.0
    %831 = vmatprep.subr.mxu0 0.0
    %832 = vmatpush1.msra.mxu0 0.0
    %833 = vmatprep.subr.mxu0 0.0
    %834 = vmatpush1.msra.mxu0 0.0
    %835 = vmatprep.subr.mxu0 0.0
    %836 = vmatpush1.msra.mxu0 0.0
    %837 = vmatprep.subr.mxu0 0.0
    %838 = vmatpush1.msra.mxu0 0.0
    %839 = vmatprep.subr.mxu0 0.0
    %840 = vmatpush1.msra.mxu0 0.0
    %841 = vmatprep.subr.mxu0 0.0
    %842 = vmatpush1.msra.mxu0 0.0
    %843 = vmatprep.subr.mxu0 0.0
    %844 = vmatpush1.msra.mxu0 0.0
    %845 = vmatprep.subr.mxu0 0.0
    %846 = vmatpush1.msra.mxu0 0.0
    %847 = vmatprep.subr.mxu0 0.0
    %848 = vmatpush1.msra.mxu0 0.0
    %849 = vmatprep.mubr.f32.mxu0 0.0
    %850 = vmatmul.mubr.f32.gmra.mrb[0].mxu0 %v783
    %v851 = vpop.f32.mrb[0].mxu0
    %v852 = vadd.f32 0.0, %v851
    %v853 = vpop.f32.mrb[0].mxu0
    %854 = vdwg.mxu0
    %855 = vrot.lane.b32.xlu0 %v596, 56
    %v856 = vpop.permute.xlu0 %855
    %v859 = vsel %vm183, %v778, 0
    %861 = vmatprep.subr.mxu0 0.0
    %862 = vmatpush1.msra.mxu0 %v856
    %863 = vmatprep.subr.mxu0 0.0
    %864 = vmatpush1.msra.mxu0 0.0
    %865 = vmatprep.subr.mxu0 0.0
    %866 = vmatpush1.msra.mxu0 0.0
    %867 = vmatprep.subr.mxu0 0.0
    %868 = vmatpush1.msra.mxu0 0.0
    %869 = vmatprep.subr.mxu0 0.0
    %870 = vmatpush1.msra.mxu0 0.0
    %871 = vmatprep.subr.mxu0 0.0
    %872 = vmatpush1.msra.mxu0 0.0
    %873 = vmatprep.subr.mxu0 0.0
    %874 = vmatpush1.msra.mxu0 0.0
    %875 = vmatprep.subr.mxu0 0.0
    %876 = vmatpush1.msra.mxu0 0.0
    %877 = vmatprep.subr.mxu0 0.0
    %878 = vmatpush1.msra.mxu0 0.0
    %879 = vmatprep.subr.mxu0 0.0
    %880 = vmatpush1.msra.mxu0 0.0
    %881 = vmatprep.subr.mxu0 0.0
    %882 = vmatpush1.msra.mxu0 0.0
    %883 = vmatprep.subr.mxu0 0.0
    %884 = vmatpush1.msra.mxu0 0.0
    %885 = vmatprep.subr.mxu0 0.0
    %886 = vmatpush1.msra.mxu0 0.0
    %887 = vmatprep.subr.mxu0 0.0
    %888 = vmatpush1.msra.mxu0 0.0
    %889 = vmatprep.subr.mxu0 0.0
    %890 = vmatpush1.msra.mxu0 0.0
    %891 = vmatprep.subr.mxu0 0.0
    %892 = vmatpush1.msra.mxu0 0.0
    %893 = vmatprep.subr.mxu0 0.0
    %894 = vmatpush1.msra.mxu0 0.0
    %895 = vmatprep.subr.mxu0 0.0
    %896 = vmatpush1.msra.mxu0 0.0
    %897 = vmatprep.subr.mxu0 0.0
    %898 = vmatpush1.msra.mxu0 0.0
    %899 = vmatprep.subr.mxu0 0.0
    %900 = vmatpush1.msra.mxu0 0.0
    %901 = vmatprep.subr.mxu0 0.0
    %902 = vmatpush1.msra.mxu0 0.0
    %903 = vmatprep.subr.mxu0 0.0
    %904 = vmatpush1.msra.mxu0 0.0
    %905 = vmatprep.subr.mxu0 0.0
    %906 = vmatpush1.msra.mxu0 0.0
    %907 = vmatprep.subr.mxu0 0.0
    %908 = vmatpush1.msra.mxu0 0.0
    %909 = vmatprep.subr.mxu0 0.0
    %910 = vmatpush1.msra.mxu0 0.0
    %911 = vmatprep.subr.mxu0 0.0
    %912 = vmatpush1.msra.mxu0 0.0
    %913 = vmatprep.subr.mxu0 0.0
    %914 = vmatpush1.msra.mxu0 0.0
    %915 = vmatprep.subr.mxu0 0.0
    %916 = vmatpush1.msra.mxu0 0.0
    %917 = vmatprep.subr.mxu0 0.0
    %918 = vmatpush1.msra.mxu0 0.0
    %919 = vmatprep.subr.mxu0 0.0
    %920 = vmatpush1.msra.mxu0 0.0
    %921 = vmatprep.subr.mxu0 0.0
    %922 = vmatpush1.msra.mxu0 0.0
    %923 = vmatprep.subr.mxu0 0.0
    %924 = vmatpush1.msra.mxu0 0.0
    %925 = vmatprep.mubr.f32.mxu0 0.0
    %926 = vmatmul.mubr.f32.gmra.mrb[0].mxu0 %v859
    %v927 = vpop.f32.mrb[0].mxu0
    %v928 = vadd.f32 0.0, %v927
    %v929 = vpop.f32.mrb[0].mxu0
    %930 = vdwg.mxu0
    %v931 = vld [vmem:[#allocation9 + $0x8] sm:$0xff]
    %v933 = vsel %vm183, %v852, 0
    %v936 = vsel %vm183, %v928, 0
    %938 = vmatprep.subr.mxu0 0.0
    %939 = vmatpush1.msra.mxu0 %v931
    %940 = vmatprep.subr.mxu0 0.0
    %941 = vmatpush1.msra.mxu0 0.0
    %942 = vmatprep.subr.mxu0 0.0
    %943 = vmatpush1.msra.mxu0 0.0
    %944 = vmatprep.subr.mxu0 0.0
    %945 = vmatpush1.msra.mxu0 0.0
    %946 = vmatprep.subr.mxu0 0.0
    %947 = vmatpush1.msra.mxu0 0.0
    %948 = vmatprep.subr.mxu0 0.0
    %949 = vmatpush1.msra.mxu0 0.0
    %950 = vmatprep.subr.mxu0 0.0
    %951 = vmatpush1.msra.mxu0 0.0
    %952 = vmatprep.subr.mxu0 0.0
    %953 = vmatpush1.msra.mxu0 0.0
    %954 = vmatprep.subr.mxu0 0.0
    %955 = vmatpush1.msra.mxu0 0.0
    %956 = vmatprep.subr.mxu0 0.0
    %957 = vmatpush1.msra.mxu0 0.0
    %958 = vmatprep.subr.mxu0 0.0
    %959 = vmatpush1.msra.mxu0 0.0
    %960 = vmatprep.subr.mxu0 0.0
    %961 = vmatpush1.msra.mxu0 0.0
    %962 = vmatprep.subr.mxu0 0.0
    %963 = vmatpush1.msra.mxu0 0.0
    %964 = vmatprep.subr.mxu0 0.0
    %965 = vmatpush1.msra.mxu0 0.0
    %966 = vmatprep.subr.mxu0 0.0
    %967 = vmatpush1.msra.mxu0 0.0
    %968 = vmatprep.subr.mxu0 0.0
    %969 = vmatpush1.msra.mxu0 0.0
    %970 = vmatprep.subr.mxu0 0.0
    %971 = vmatpush1.msra.mxu0 0.0
    %972 = vmatprep.subr.mxu0 0.0
    %973 = vmatpush1.msra.mxu0 0.0
    %974 = vmatprep.subr.mxu0 0.0
    %975 = vmatpush1.msra.mxu0 0.0
    %976 = vmatprep.subr.mxu0 0.0
    %977 = vmatpush1.msra.mxu0 0.0
    %978 = vmatprep.subr.mxu0 0.0
    %979 = vmatpush1.msra.mxu0 0.0
    %980 = vmatprep.subr.mxu0 0.0
    %981 = vmatpush1.msra.mxu0 0.0
    %982 = vmatprep.subr.mxu0 0.0
    %983 = vmatpush1.msra.mxu0 0.0
    %984 = vmatprep.subr.mxu0 0.0
    %985 = vmatpush1.msra.mxu0 0.0
    %986 = vmatprep.subr.mxu0 0.0
    %987 = vmatpush1.msra.mxu0 0.0
    %988 = vmatprep.subr.mxu0 0.0
    %989 = vmatpush1.msra.mxu0 0.0
    %990 = vmatprep.subr.mxu0 0.0
    %991 = vmatpush1.msra.mxu0 0.0
    %992 = vmatprep.subr.mxu0 0.0
    %993 = vmatpush1.msra.mxu0 0.0
    %994 = vmatprep.subr.mxu0 0.0
    %995 = vmatpush1.msra.mxu0 0.0
    %996 = vmatprep.subr.mxu0 0.0
    %997 = vmatpush1.msra.mxu0 0.0
    %998 = vmatprep.subr.mxu0 0.0
    %999 = vmatpush1.msra.mxu0 0.0
    %1000 = vmatprep.subr.mxu0 0.0
    %1001 = vmatpush1.msra.mxu0 0.0
    %1002 = vmatprep.mubr.f32.mxu0 0.0
    %1003 = vmatmul.mubr.f32.gmra.mrb[0].mxu0 %v933
    %v1004 = vpop.f32.mrb[0].mxu0
    %v1005 = vadd.f32 0.0, %v1004
    %v1006 = vpop.f32.mrb[0].mxu0
    %1007 = vmatprep.mubr.f32.mxu0 0.0
    %1008 = vmatmul.mubr.f32.gmra.mrb[0].mxu0 %v936
    %v1009 = vpop.f32.mrb[0].mxu0
    %v1010 = vadd.f32 0.0, %v1009
    %v1011 = vpop.f32.mrb[0].mxu0
    %1012 = vdwg.mxu0
    %v1013 = vld [vmem:[#allocation3] sm:$0xff]
    %v1014 = vld [vmem:[#allocation3 + $0x8] sm:$0xff]
    %v1015 = vadd.f32 %v1013, %v1005
    %v1016 = vadd.f32 %v1014, %v1010
    %1017 = vst.msk [vmem:[#allocation3] sm:$0xff] %vm93, %v1015
    %1018 = vst.msk [vmem:[#allocation3 + $0x8] sm:$0xff] %vm93, %v1016
    %v1019 = vld [vmem:[#allocation2] sm:$0xff]
    %v1020 = vld [vmem:[#allocation2 + $0x8] sm:$0xff]
    %1022 = vrot.lane.b32.xlu0 %v1019, 112
    %v1023 = vpop.permute.xlu0 %1022
    %1024 = vrot.lane.b32.xlu0 %v1019, 80
    %v1025 = vpop.permute.xlu0 %1024
    %v1026 = vsel %vm183, %v1023, 0
    %v1028 = vsel %vm183, %v1025, 0
    %1030 = vmatprep.subr.mxu0 0.0
    %1031 = vmatpush1.xpose.msra.mxu0 %v1028
    %1032 = vmatprep.subr.mxu0 0.0
    %1033 = vmatpush1.xpose.msra.mxu0 0.0
    %1034 = vmatprep.subr.mxu0 0.0
    %1035 = vmatpush1.xpose.msra.mxu0 0.0
    %1036 = vmatprep.subr.mxu0 0.0
    %1037 = vmatpush1.xpose.msra.mxu0 0.0
    %1038 = vmatprep.subr.mxu0 0.0
    %1039 = vmatpush1.xpose.msra.mxu0 0.0
    %1040 = vmatprep.subr.mxu0 0.0
    %1041 = vmatpush1.xpose.msra.mxu0 0.0
    %1042 = vmatprep.subr.mxu0 0.0
    %1043 = vmatpush1.xpose.msra.mxu0 0.0
    %1044 = vmatprep.subr.mxu0 0.0
    %1045 = vmatpush1.xpose.msra.mxu0 0.0
    %1046 = vmatprep.subr.mxu0 0.0
    %1047 = vmatpush1.xpose.msra.mxu0 0.0
    %1048 = vmatprep.subr.mxu0 0.0
    %1049 = vmatpush1.xpose.msra.mxu0 0.0
    %1050 = vmatprep.subr.mxu0 0.0
    %1051 = vmatpush1.xpose.msra.mxu0 0.0
    %1052 = vmatprep.subr.mxu0 0.0
    %1053 = vmatpush1.xpose.msra.mxu0 0.0
    %1054 = vmatprep.subr.mxu0 0.0
    %1055 = vmatpush1.xpose.msra.mxu0 0.0
    %1056 = vmatprep.subr.mxu0 0.0
    %1057 = vmatpush1.xpose.msra.mxu0 0.0
    %1058 = vmatprep.subr.mxu0 0.0
    %1059 = vmatpush1.xpose.msra.mxu0 0.0
    %1060 = vmatprep.subr.mxu0 0.0
    %1061 = vmatpush1.xpose.msra.mxu0 0.0
    %1062 = vmatprep.subr.mxu0 0.0
    %1063 = vmatpush1.xpose.msra.mxu0 0.0
    %1064 = vmatprep.subr.mxu0 0.0
    %1065 = vmatpush1.xpose.msra.mxu0 0.0
    %1066 = vmatprep.subr.mxu0 0.0
    %1067 = vmatpush1.xpose.msra.mxu0 0.0
    %1068 = vmatprep.subr.mxu0 0.0
    %1069 = vmatpush1.xpose.msra.mxu0 0.0
    %1070 = vmatprep.subr.mxu0 0.0
    %1071 = vmatpush1.xpose.msra.mxu0 0.0
    %1072 = vmatprep.subr.mxu0 0.0
    %1073 = vmatpush1.xpose.msra.mxu0 0.0
    %1074 = vmatprep.subr.mxu0 0.0
    %1075 = vmatpush1.xpose.msra.mxu0 0.0
    %1076 = vmatprep.subr.mxu0 0.0
    %1077 = vmatpush1.xpose.msra.mxu0 0.0
    %1078 = vmatprep.subr.mxu0 0.0
    %1079 = vmatpush1.xpose.msra.mxu0 0.0
    %1080 = vmatprep.subr.mxu0 0.0
    %1081 = vmatpush1.xpose.msra.mxu0 0.0
    %1082 = vmatprep.subr.mxu0 0.0
    %1083 = vmatpush1.xpose.msra.mxu0 0.0
    %1084 = vmatprep.subr.mxu0 0.0
    %1085 = vmatpush1.xpose.msra.mxu0 0.0
    %1086 = vmatprep.subr.mxu0 0.0
    %1087 = vmatpush1.xpose.msra.mxu0 0.0
    %1088 = vmatprep.subr.mxu0 0.0
    %1089 = vmatpush1.xpose.msra.mxu0 0.0
    %1090 = vmatprep.subr.mxu0 0.0
    %1091 = vmatpush1.xpose.msra.mxu0 0.0
    %1092 = vmatprep.subr.mxu0 0.0
    %1093 = vmatpush1.xpose.msra.mxu0 0.0
    %1094 = vmatprep.mubr.f32.mxu0 0.0
    %1095 = vmatmul.mubr.f32.gmra.mrb[0].mxu0 %v1026
    %v1096 = vpop.f32.mrb[0].mxu0
    %v1097 = vadd.f32 0.0, %v1096
    %v1098 = vpop.f32.mrb[0].mxu0
    %1099 = vdwg.mxu0
    %1101 = vrot.lane.b32.xlu0 %v1020, 112
    %v1102 = vpop.permute.xlu0 %1101
    %1103 = vrot.lane.b32.xlu0 %v1020, 80
    %v1104 = vpop.permute.xlu0 %1103
    %v1105 = vsel %vm183, %v1102, 0
    %v1107 = vsel %vm183, %v1104, 0
    %1109 = vmatprep.subr.mxu0 0.0
    %1110 = vmatpush1.xpose.msra.mxu0 %v1107
    %1111 = vmatprep.subr.mxu0 0.0
    %1112 = vmatpush1.xpose.msra.mxu0 0.0
    %1113 = vmatprep.subr.mxu0 0.0
    %1114 = vmatpush1.xpose.msra.mxu0 0.0
    %1115 = vmatprep.subr.mxu0 0.0
    %1116 = vmatpush1.xpose.msra.mxu0 0.0
    %1117 = vmatprep.subr.mxu0 0.0
    %1118 = vmatpush1.xpose.msra.mxu0 0.0
    %1119 = vmatprep.subr.mxu0 0.0
    %1120 = vmatpush1.xpose.msra.mxu0 0.0
    %1121 = vmatprep.subr.mxu0 0.0
    %1122 = vmatpush1.xpose.msra.mxu0 0.0
    %1123 = vmatprep.subr.mxu0 0.0
    %1124 = vmatpush1.xpose.msra.mxu0 0.0
    %1125 = vmatprep.subr.mxu0 0.0
    %1126 = vmatpush1.xpose.msra.mxu0 0.0
    %1127 = vmatprep.subr.mxu0 0.0
    %1128 = vmatpush1.xpose.msra.mxu0 0.0
    %1129 = vmatprep.subr.mxu0 0.0
    %1130 = vmatpush1.xpose.msra.mxu0 0.0
    %1131 = vmatprep.subr.mxu0 0.0
    %1132 = vmatpush1.xpose.msra.mxu0 0.0
    %1133 = vmatprep.subr.mxu0 0.0
    %1134 = vmatpush1.xpose.msra.mxu0 0.0
    %1135 = vmatprep.subr.mxu0 0.0
    %1136 = vmatpush1.xpose.msra.mxu0 0.0
    %1137 = vmatprep.subr.mxu0 0.0
    %1138 = vmatpush1.xpose.msra.mxu0 0.0
    %1139 = vmatprep.subr.mxu0 0.0
    %1140 = vmatpush1.xpose.msra.mxu0 0.0
    %1141 = vmatprep.subr.mxu0 0.0
    %1142 = vmatpush1.xpose.msra.mxu0 0.0
    %1143 = vmatprep.subr.mxu0 0.0
    %1144 = vmatpush1.xpose.msra.mxu0 0.0
    %1145 = vmatprep.subr.mxu0 0.0
    %1146 = vmatpush1.xpose.msra.mxu0 0.0
    %1147 = vmatprep.subr.mxu0 0.0
    %1148 = vmatpush1.xpose.msra.mxu0 0.0
    %1149 = vmatprep.subr.mxu0 0.0
    %1150 = vmatpush1.xpose.msra.mxu0 0.0
    %1151 = vmatprep.subr.mxu0 0.0
    %1152 = vmatpush1.xpose.msra.mxu0 0.0
    %1153 = vmatprep.subr.mxu0 0.0
    %1154 = vmatpush1.xpose.msra.mxu0 0.0
    %1155 = vmatprep.subr.mxu0 0.0
    %1156 = vmatpush1.xpose.msra.mxu0 0.0
    %1157 = vmatprep.subr.mxu0 0.0
    %1158 = vmatpush1.xpose.msra.mxu0 0.0
    %1159 = vmatprep.subr.mxu0 0.0
    %1160 = vmatpush1.xpose.msra.mxu0 0.0
    %1161 = vmatprep.subr.mxu0 0.0
    %1162 = vmatpush1.xpose.msra.mxu0 0.0
    %1163 = vmatprep.subr.mxu0 0.0
    %1164 = vmatpush1.xpose.msra.mxu0 0.0
    %1165 = vmatprep.subr.mxu0 0.0
    %1166 = vmatpush1.xpose.msra.mxu0 0.0
    %1167 = vmatprep.subr.mxu0 0.0
    %1168 = vmatpush1.xpose.msra.mxu0 0.0
    %1169 = vmatprep.subr.mxu0 0.0
    %1170 = vmatpush1.xpose.msra.mxu0 0.0
    %1171 = vmatprep.subr.mxu0 0.0
    %1172 = vmatpush1.xpose.msra.mxu0 0.0
    %1173 = vmatprep.mubr.f32.mxu0 0.0
    %1174 = vmatmul.mubr.f32.gmra.mrb[0].mxu0 %v1105
    %v1175 = vpop.f32.mrb[0].mxu0
    %v1176 = vadd.f32 0.0, %v1175
    %v1177 = vpop.f32.mrb[0].mxu0
    %1178 = vdwg.mxu0
    %v1179 = vmul.f32 %v1097, 0.35355338
    %v1180 = vmul.f32 %v1176, 0.35355338
    %v1181 = vsel %vm183, %v1179, -inf
    %1182 = vmax.xlane.f32.xlu0 %v1181
    %v1183 = vpop.xlane.xlu0 %1182
    %v1184 = vsel %vm183, %v1180, -inf
    %1185 = vmax.xlane.f32.xlu0 %v1184
    %v1186 = vpop.xlane.xlu0 %1185
    %v1187 = vsub.f32 %v1179, %v1183
    %v1188 = vsub.f32 %v1180, %v1186
    %v1189 = vmul.f32 %v1187, 1.442695
    %v1190 = vpow.pop %v1189
    %v1191 = vmul.f32 %v1188, 1.442695
    %v1192 = vpow.pop %v1191
    %v1193 = vsel %vm183, %v1190, 0.0
    %1194 = vadd.xlane.f32.xlu0 %v1193
    %v1195 = vpop.xlane.xlu0 %1194
    %v1196 = vsel %vm183, %v1192, 0.0
    %1197 = vadd.xlane.f32.xlu0 %v1196
    %v1198 = vpop.xlane.xlu0 %1197
    %v1199 = vrcp.pop %v1195
    %v1200 = vrcp.pop %v1198
    %v1201 = vmul.f32 %v1190, %v1199
    %v1202 = vmul.f32 %v1192, %v1200
    %1203 = vrot.lane.b32.xlu0 %v1019, 48
    %v1204 = vpop.permute.xlu0 %1203
    %v1207 = vsel %vm183, %v1201, 0
    %1209 = vmatprep.subr.mxu0 0.0
    %1210 = vmatpush1.msra.mxu0 %v1204
    %1211 = vmatprep.subr.mxu0 0.0
    %1212 = vmatpush1.msra.mxu0 0.0
    %1213 = vmatprep.subr.mxu0 0.0
    %1214 = vmatpush1.msra.mxu0 0.0
    %1215 = vmatprep.subr.mxu0 0.0
    %1216 = vmatpush1.msra.mxu0 0.0
    %1217 = vmatprep.subr.mxu0 0.0
    %1218 = vmatpush1.msra.mxu0 0.0
    %1219 = vmatprep.subr.mxu0 0.0
    %1220 = vmatpush1.msra.mxu0 0.0
    %1221 = vmatprep.subr.mxu0 0.0
    %1222 = vmatpush1.msra.mxu0 0.0
    %1223 = vmatprep.subr.mxu0 0.0
    %1224 = vmatpush1.msra.mxu0 0.0
    %1225 = vmatprep.subr.mxu0 0.0
    %1226 = vmatpush1.msra.mxu0 0.0
    %1227 = vmatprep.subr.mxu0 0.0
    %1228 = vmatpush1.msra.mxu0 0.0
    %1229 = vmatprep.subr.mxu0 0.0
    %1230 = vmatpush1.msra.mxu0 0.0
    %1231 = vmatprep.subr.mxu0 0.0
    %1232 = vmatpush1.msra.mxu0 0.0
    %1233 = vmatprep.subr.mxu0 0.0
    %1234 = vmatpush1.msra.mxu0 0.0
    %1235 = vmatprep.subr.mxu0 0.0
    %1236 = vmatpush1.msra.mxu0 0.0
    %1237 = vmatprep.subr.mxu0 0.0
    %1238 = vmatpush1.msra.mxu0 0.0
    %1239 = vmatprep.subr.mxu0 0.0
    %1240 = vmatpush1.msra.mxu0 0.0
    %1241 = vmatprep.subr.mxu0 0.0
    %1242 = vmatpush1.msra.mxu0 0.0
    %1243 = vmatprep.subr.mxu0 0.0
    %1244 = vmatpush1.msra.mxu0 0.0
    %1245 = vmatprep.subr.mxu0 0.0
    %1246 = vmatpush1.msra.mxu0 0.0
    %1247 = vmatprep.subr.mxu0 0.0
    %1248 = vmatpush1.msra.mxu0 0.0
    %1249 = vmatprep.subr.mxu0 0.0
    %1250 = vmatpush1.msra.mxu0 0.0
    %1251 = vmatprep.subr.mxu0 0.0
    %1252 = vmatpush1.msra.mxu0 0.0
    %1253 = vmatprep.subr.mxu0 0.0
    %1254 = vmatpush1.msra.mxu0 0.0
    %1255 = vmatprep.subr.mxu0 0.0
    %1256 = vmatpush1.msra.mxu0 0.0
    %1257 = vmatprep.subr.mxu0 0.0
    %1258 = vmatpush1.msra.mxu0 0.0
    %1259 = vmatprep.subr.mxu0 0.0
    %1260 = vmatpush1.msra.mxu0 0.0
    %1261 = vmatprep.subr.mxu0 0.0
    %1262 = vmatpush1.msra.mxu0 0.0
    %1263 = vmatprep.subr.mxu0 0.0
    %1264 = vmatpush1.msra.mxu0 0.0
    %1265 = vmatprep.subr.mxu0 0.0
    %1266 = vmatpush1.msra.mxu0 0.0
    %1267 = vmatprep.subr.mxu0 0.0
    %1268 = vmatpush1.msra.mxu0 0.0
    %1269 = vmatprep.subr.mxu0 0.0
    %1270 = vmatpush1.msra.mxu0 0.0
    %1271 = vmatprep.subr.mxu0 0.0
    %1272 = vmatpush1.msra.mxu0 0.0
    %1273 = vmatprep.mubr.f32.mxu0 0.0
    %1274 = vmatmul.mubr.f32.gmra.mrb[0].mxu0 %v1207
    %v1275 = vpop.f32.mrb[0].mxu0
    %v1276 = vadd.f32 0.0, %v1275
    %v1277 = vpop.f32.mrb[0].mxu0
    %1278 = vdwg.mxu0
    %1279 = vrot.lane.b32.xlu0 %v1020, 48
    %v1280 = vpop.permute.xlu0 %1279
    %v1283 = vsel %vm183, %v1202, 0
    %1285 = vmatprep.subr.mxu0 0.0
    %1286 = vmatpush1.msra.mxu0 %v1280
    %1287 = vmatprep.subr.mxu0 0.0
    %1288 = vmatpush1.msra.mxu0 0.0
    %1289 = vmatprep.subr.mxu0 0.0
    %1290 = vmatpush1.msra.mxu0 0.0
    %1291 = vmatprep.subr.mxu0 0.0
    %1292 = vmatpush1.msra.mxu0 0.0
    %1293 = vmatprep.subr.mxu0 0.0
    %1294 = vmatpush1.msra.mxu0 0.0
    %1295 = vmatprep.subr.mxu0 0.0
    %1296 = vmatpush1.msra.mxu0 0.0
    %1297 = vmatprep.subr.mxu0 0.0
    %1298 = vmatpush1.msra.mxu0 0.0
    %1299 = vmatprep.subr.mxu0 0.0
    %1300 = vmatpush1.msra.mxu0 0.0
    %1301 = vmatprep.subr.mxu0 0.0
    %1302 = vmatpush1.msra.mxu0 0.0
    %1303 = vmatprep.subr.mxu0 0.0
    %1304 = vmatpush1.msra.mxu0 0.0
    %1305 = vmatprep.subr.mxu0 0.0
    %1306 = vmatpush1.msra.mxu0 0.0
    %1307 = vmatprep.subr.mxu0 0.0
    %1308 = vmatpush1.msra.mxu0 0.0
    %1309 = vmatprep.subr.mxu0 0.0
    %1310 = vmatpush1.msra.mxu0 0.0
    %1311 = vmatprep.subr.mxu0 0.0
    %1312 = vmatpush1.msra.mxu0 0.0
    %1313 = vmatprep.subr.mxu0 0.0
    %1314 = vmatpush1.msra.mxu0 0.0
    %1315 = vmatprep.subr.mxu0 0.0
    %1316 = vmatpush1.msra.mxu0 0.0
    %1317 = vmatprep.subr.mxu0 0.0
    %1318 = vmatpush1.msra.mxu0 0.0
    %1319 = vmatprep.subr.mxu0 0.0
    %1320 = vmatpush1.msra.mxu0 0.0
    %1321 = vmatprep.subr.mxu0 0.0
    %1322 = vmatpush1.msra.mxu0 0.0
    %1323 = vmatprep.subr.mxu0 0.0
    %1324 = vmatpush1.msra.mxu0 0.0
    %1325 = vmatprep.subr.mxu0 0.0
    %1326 = vmatpush1.msra.mxu0 0.0
    %1327 = vmatprep.subr.mxu0 0.0
    %1328 = vmatpush1.msra.mxu0 0.0
    %1329 = vmatprep.subr.mxu0 0.0
    %1330 = vmatpush1.msra.mxu0 0.0
    %1331 = vmatprep.subr.mxu0 0.0
    %1332 = vmatpush1.msra.mxu0 0.0
    %1333 = vmatprep.subr.mxu0 0.0
    %1334 = vmatpush1.msra.mxu0 0.0
    %1335 = vmatprep.subr.mxu0 0.0
    %1336 = vmatpush1.msra.mxu0 0.0
    %1337 = vmatprep.subr.mxu0 0.0
    %1338 = vmatpush1.msra.mxu0 0.0
    %1339 = vmatprep.subr.mxu0 0.0
    %1340 = vmatpush1.msra.mxu0 0.0
    %1341 = vmatprep.subr.mxu0 0.0
    %1342 = vmatpush1.msra.mxu0 0.0
    %1343 = vmatprep.subr.mxu0 0.0
    %1344 = vmatpush1.msra.mxu0 0.0
    %1345 = vmatprep.subr.mxu0 0.0
    %1346 = vmatpush1.msra.mxu0 0.0
    %1347 = vmatprep.subr.mxu0 0.0
    %1348 = vmatpush1.msra.mxu0 0.0
    %1349 = vmatprep.mubr.f32.mxu0 0.0
    %1350 = vmatmul.mubr.f32.gmra.mrb[0].mxu0 %v1283
    %v1351 = vpop.f32.mrb[0].mxu0
    %v1352 = vadd.f32 0.0, %v1351
    %v1353 = vpop.f32.mrb[0].mxu0
    %1354 = vdwg.mxu0
    %v1355 = vld [vmem:[#allocation9 + $0x10] sm:$0xff]
    %v1357 = vsel %vm183, %v1276, 0
    %v1360 = vsel %vm183, %v1352, 0
    %1362 = vmatprep.subr.mxu0 0.0
    %1363 = vmatpush1.msra.mxu0 %v1355
    %1364 = vmatprep.subr.mxu0 0.0
    %1365 = vmatpush1.msra.mxu0 0.0
    %1366 = vmatprep.subr.mxu0 0.0
    %1367 = vmatpush1.msra.mxu0 0.0
    %1368 = vmatprep.subr.mxu0 0.0
    %1369 = vmatpush1.msra.mxu0 0.0
    %1370 = vmatprep.subr.mxu0 0.0
    %1371 = vmatpush1.msra.mxu0 0.0
    %1372 = vmatprep.subr.mxu0 0.0
    %1373 = vmatpush1.msra.mxu0 0.0
    %1374 = vmatprep.subr.mxu0 0.0
    %1375 = vmatpush1.msra.mxu0 0.0
    %1376 = vmatprep.subr.mxu0 0.0
    %1377 = vmatpush1.msra.mxu0 0.0
    %1378 = vmatprep.subr.mxu0 0.0
    %1379 = vmatpush1.msra.mxu0 0.0
    %1380 = vmatprep.subr.mxu0 0.0
    %1381 = vmatpush1.msra.mxu0 0.0
    %1382 = vmatprep.subr.mxu0 0.0
    %1383 = vmatpush1.msra.mxu0 0.0
    %1384 = vmatprep.subr.mxu0 0.0
    %1385 = vmatpush1.msra.mxu0 0.0
    %1386 = vmatprep.subr.mxu0 0.0
    %1387 = vmatpush1.msra.mxu0 0.0
    %1388 = vmatprep.subr.mxu0 0.0
    %1389 = vmatpush1.msra.mxu0 0.0
    %1390 = vmatprep.subr.mxu0 0.0
    %1391 = vmatpush1.msra.mxu0 0.0
    %1392 = vmatprep.subr.mxu0 0.0
    %1393 = vmatpush1.msra.mxu0 0.0
    %1394 = vmatprep.subr.mxu0 0.0
    %1395 = vmatpush1.msra.mxu0 0.0
    %1396 = vmatprep.subr.mxu0 0.0
    %1397 = vmatpush1.msra.mxu0 0.0
    %1398 = vmatprep.subr.mxu0 0.0
    %1399 = vmatpush1.msra.mxu0 0.0
    %1400 = vmatprep.subr.mxu0 0.0
    %1401 = vmatpush1.msra.mxu0 0.0
    %1402 = vmatprep.subr.mxu0 0.0
    %1403 = vmatpush1.msra.mxu0 0.0
    %1404 = vmatprep.subr.mxu0 0.0
    %1405 = vmatpush1.msra.mxu0 0.0
    %1406 = vmatprep.subr.mxu0 0.0
    %1407 = vmatpush1.msra.mxu0 0.0
    %1408 = vmatprep.subr.mxu0 0.0
    %1409 = vmatpush1.msra.mxu0 0.0
    %1410 = vmatprep.subr.mxu0 0.0
    %1411 = vmatpush1.msra.mxu0 0.0
    %1412 = vmatprep.subr.mxu0 0.0
    %1413 = vmatpush1.msra.mxu0 0.0
    %1414 = vmatprep.subr.mxu0 0.0
    %1415 = vmatpush1.msra.mxu0 0.0
    %1416 = vmatprep.subr.mxu0 0.0
    %1417 = vmatpush1.msra.mxu0 0.0
    %1418 = vmatprep.subr.mxu0 0.0
    %1419 = vmatpush1.msra.mxu0 0.0
    %1420 = vmatprep.subr.mxu0 0.0
    %1421 = vmatpush1.msra.mxu0 0.0
    %1422 = vmatprep.subr.mxu0 0.0
    %1423 = vmatpush1.msra.mxu0 0.0
    %1424 = vmatprep.subr.mxu0 0.0
    %1425 = vmatpush1.msra.mxu0 0.0
    %1426 = vmatprep.mubr.f32.mxu0 0.0
    %1427 = vmatmul.mubr.f32.gmra.mrb[0].mxu0 %v1357
    %v1428 = vpop.f32.mrb[0].mxu0
    %v1429 = vadd.f32 0.0, %v1428
    %v1430 = vpop.f32.mrb[0].mxu0
    %1431 = vmatprep.mubr.f32.mxu0 0.0
    %1432 = vmatmul.mubr.f32.gmra.mrb[0].mxu0 %v1360
    %v1433 = vpop.f32.mrb[0].mxu0
    %v1434 = vadd.f32 0.0, %v1433
    %v1435 = vpop.f32.mrb[0].mxu0
    %1436 = vdwg.mxu0
    %v1437 = vld [vmem:[#allocation3] sm:$0xff]
    %v1438 = vld [vmem:[#allocation3 + $0x8] sm:$0xff]
    %v1439 = vadd.f32 %v1437, %v1429
    %v1440 = vadd.f32 %v1438, %v1434
    %1441 = vst.msk [vmem:[#allocation3] sm:$0xff] %vm93, %v1439
    %1442 = vst.msk [vmem:[#allocation3 + $0x8] sm:$0xff] %vm93, %v1440
    %v1443 = vld [vmem:[#allocation2] sm:$0xff]
    %v1444 = vld [vmem:[#allocation2 + $0x8] sm:$0xff]
    %1446 = vrot.lane.b32.xlu0 %v1443, 104
    %v1447 = vpop.permute.xlu0 %1446
    %1448 = vrot.lane.b32.xlu0 %v1443, 72
    %v1449 = vpop.permute.xlu0 %1448
    %v1450 = vsel %vm183, %v1447, 0
    %v1452 = vsel %vm183, %v1449, 0
    %1454 = vmatprep.subr.mxu0 0.0
    %1455 = vmatpush1.xpose.msra.mxu0 %v1452
    %1456 = vmatprep.subr.mxu0 0.0
    %1457 = vmatpush1.xpose.msra.mxu0 0.0
    %1458 = vmatprep.subr.mxu0 0.0
    %1459 = vmatpush1.xpose.msra.mxu0 0.0
    %1460 = vmatprep.subr.mxu0 0.0
    %1461 = vmatpush1.xpose.msra.mxu0 0.0
    %1462 = vmatprep.subr.mxu0 0.0
    %1463 = vmatpush1.xpose.msra.mxu0 0.0
    %1464 = vmatprep.subr.mxu0 0.0
    %1465 = vmatpush1.xpose.msra.mxu0 0.0
    %1466 = vmatprep.subr.mxu0 0.0
    %1467 = vmatpush1.xpose.msra.mxu0 0.0
    %1468 = vmatprep.subr.mxu0 0.0
    %1469 = vmatpush1.xpose.msra.mxu0 0.0
    %1470 = vmatprep.subr.mxu0 0.0
    %1471 = vmatpush1.xpose.msra.mxu0 0.0
    %1472 = vmatprep.subr.mxu0 0.0
    %1473 = vmatpush1.xpose.msra.mxu0 0.0
    %1474 = vmatprep.subr.mxu0 0.0
    %1475 = vmatpush1.xpose.msra.mxu0 0.0
    %1476 = vmatprep.subr.mxu0 0.0
    %1477 = vmatpush1.xpose.msra.mxu0 0.0
    %1478 = vmatprep.subr.mxu0 0.0
    %1479 = vmatpush1.xpose.msra.mxu0 0.0
    %1480 = vmatprep.subr.mxu0 0.0
    %1481 = vmatpush1.xpose.msra.mxu0 0.0
    %1482 = vmatprep.subr.mxu0 0.0
    %1483 = vmatpush1.xpose.msra.mxu0 0.0
    %1484 = vmatprep.subr.mxu0 0.0
    %1485 = vmatpush1.xpose.msra.mxu0 0.0
    %1486 = vmatprep.subr.mxu0 0.0
    %1487 = vmatpush1.xpose.msra.mxu0 0.0
    %1488 = vmatprep.subr.mxu0 0.0
    %1489 = vmatpush1.xpose.msra.mxu0 0.0
    %1490 = vmatprep.subr.mxu0 0.0
    %1491 = vmatpush1.xpose.msra.mxu0 0.0
    %1492 = vmatprep.subr.mxu0 0.0
    %1493 = vmatpush1.xpose.msra.mxu0 0.0
    %1494 = vmatprep.subr.mxu0 0.0
    %1495 = vmatpush1.xpose.msra.mxu0 0.0
    %1496 = vmatprep.subr.mxu0 0.0
    %1497 = vmatpush1.xpose.msra.mxu0 0.0
    %1498 = vmatprep.subr.mxu0 0.0
    %1499 = vmatpush1.xpose.msra.mxu0 0.0
    %1500 = vmatprep.subr.mxu0 0.0
    %1501 = vmatpush1.xpose.msra.mxu0 0.0
    %1502 = vmatprep.subr.mxu0 0.0
    %1503 = vmatpush1.xpose.msra.mxu0 0.0
    %1504 = vmatprep.subr.mxu0 0.0
    %1505 = vmatpush1.xpose.msra.mxu0 0.0
    %1506 = vmatprep.subr.mxu0 0.0
    %1507 = vmatpush1.xpose.msra.mxu0 0.0
    %1508 = vmatprep.subr.mxu0 0.0
    %1509 = vmatpush1.xpose.msra.mxu0 0.0
    %1510 = vmatprep.subr.mxu0 0.0
    %1511 = vmatpush1.xpose.msra.mxu0 0.0
    %1512 = vmatprep.subr.mxu0 0.0
    %1513 = vmatpush1.xpose.msra.mxu0 0.0
    %1514 = vmatprep.subr.mxu0 0.0
    %1515 = vmatpush1.xpose.msra.mxu0 0.0
    %1516 = vmatprep.subr.mxu0 0.0
    %1517 = vmatpush1.xpose.msra.mxu0 0.0
    %1518 = vmatprep.mubr.f32.mxu0 0.0
    %1519 = vmatmul.mubr.f32.gmra.mrb[0].mxu0 %v1450
    %v1520 = vpop.f32.mrb[0].mxu0
    %v1521 = vadd.f32 0.0, %v1520
    %v1522 = vpop.f32.mrb[0].mxu0
    %1523 = vdwg.mxu0
    %1525 = vrot.lane.b32.xlu0 %v1444, 104
    %v1526 = vpop.permute.xlu0 %1525
    %1527 = vrot.lane.b32.xlu0 %v1444, 72
    %v1528 = vpop.permute.xlu0 %1527
    %v1529 = vsel %vm183, %v1526, 0
    %v1531 = vsel %vm183, %v1528, 0
    %1533 = vmatprep.subr.mxu0 0.0
    %1534 = vmatpush1.xpose.msra.mxu0 %v1531
    %1535 = vmatprep.subr.mxu0 0.0
    %1536 = vmatpush1.xpose.msra.mxu0 0.0
    %1537 = vmatprep.subr.mxu0 0.0
    %1538 = vmatpush1.xpose.msra.mxu0 0.0
    %1539 = vmatprep.subr.mxu0 0.0
    %1540 = vmatpush1.xpose.msra.mxu0 0.0
    %1541 = vmatprep.subr.mxu0 0.0
    %1542 = vmatpush1.xpose.msra.mxu0 0.0
    %1543 = vmatprep.subr.mxu0 0.0
    %1544 = vmatpush1.xpose.msra.mxu0 0.0
    %1545 = vmatprep.subr.mxu0 0.0
    %1546 = vmatpush1.xpose.msra.mxu0 0.0
    %1547 = vmatprep.subr.mxu0 0.0
    %1548 = vmatpush1.xpose.msra.mxu0 0.0
    %1549 = vmatprep.subr.mxu0 0.0
    %1550 = vmatpush1.xpose.msra.mxu0 0.0
    %1551 = vmatprep.subr.mxu0 0.0
    %1552 = vmatpush1.xpose.msra.mxu0 0.0
    %1553 = vmatprep.subr.mxu0 0.0
    %1554 = vmatpush1.xpose.msra.mxu0 0.0
    %1555 = vmatprep.subr.mxu0 0.0
    %1556 = vmatpush1.xpose.msra.mxu0 0.0
    %1557 = vmatprep.subr.mxu0 0.0
    %1558 = vmatpush1.xpose.msra.mxu0 0.0
    %1559 = vmatprep.subr.mxu0 0.0
    %1560 = vmatpush1.xpose.msra.mxu0 0.0
    %1561 = vmatprep.subr.mxu0 0.0
    %1562 = vmatpush1.xpose.msra.mxu0 0.0
    %1563 = vmatprep.subr.mxu0 0.0
    %1564 = vmatpush1.xpose.msra.mxu0 0.0
    %1565 = vmatprep.subr.mxu0 0.0
    %1566 = vmatpush1.xpose.msra.mxu0 0.0
    %1567 = vmatprep.subr.mxu0 0.0
    %1568 = vmatpush1.xpose.msra.mxu0 0.0
    %1569 = vmatprep.subr.mxu0 0.0
    %1570 = vmatpush1.xpose.msra.mxu0 0.0
    %1571 = vmatprep.subr.mxu0 0.0
    %1572 = vmatpush1.xpose.msra.mxu0 0.0
    %1573 = vmatprep.subr.mxu0 0.0
    %1574 = vmatpush1.xpose.msra.mxu0 0.0
    %1575 = vmatprep.subr.mxu0 0.0
    %1576 = vmatpush1.xpose.msra.mxu0 0.0
    %1577 = vmatprep.subr.mxu0 0.0
    %1578 = vmatpush1.xpose.msra.mxu0 0.0
    %1579 = vmatprep.subr.mxu0 0.0
    %1580 = vmatpush1.xpose.msra.mxu0 0.0
    %1581 = vmatprep.subr.mxu0 0.0
    %1582 = vmatpush1.xpose.msra.mxu0 0.0
    %1583 = vmatprep.subr.mxu0 0.0
    %1584 = vmatpush1.xpose.msra.mxu0 0.0
    %1585 = vmatprep.subr.mxu0 0.0
    %1586 = vmatpush1.xpose.msra.mxu0 0.0
    %1587 = vmatprep.subr.mxu0 0.0
    %1588 = vmatpush1.xpose.msra.mxu0 0.0
    %1589 = vmatprep.subr.mxu0 0.0
    %1590 = vmatpush1.xpose.msra.mxu0 0.0
    %1591 = vmatprep.subr.mxu0 0.0
    %1592 = vmatpush1.xpose.msra.mxu0 0.0
    %1593 = vmatprep.subr.mxu0 0.0
    %1594 = vmatpush1.xpose.msra.mxu0 0.0
    %1595 = vmatprep.subr.mxu0 0.0
    %1596 = vmatpush1.xpose.msra.mxu0 0.0
    %1597 = vmatprep.mubr.f32.mxu0 0.0
    %1598 = vmatmul.mubr.f32.gmra.mrb[0].mxu0 %v1529
    %v1599 = vpop.f32.mrb[0].mxu0
    %v1600 = vadd.f32 0.0, %v1599
    %v1601 = vpop.f32.mrb[0].mxu0
    %1602 = vdwg.mxu0
    %v1603 = vmul.f32 %v1521, 0.35355338
    %v1604 = vmul.f32 %v1600, 0.35355338
    %v1605 = vsel %vm183, %v1603, -inf
    %1606 = vmax.xlane.f32.xlu0 %v1605
    %v1607 = vpop.xlane.xlu0 %1606
    %v1608 = vsel %vm183, %v1604, -inf
    %1609 = vmax.xlane.f32.xlu0 %v1608
    %v1610 = vpop.xlane.xlu0 %1609
    %v1611 = vsub.f32 %v1603, %v1607
    %v1612 = vsub.f32 %v1604, %v1610
    %v1613 = vmul.f32 %v1611, 1.442695
    %v1614 = vpow.pop %v1613
    %v1615 = vmul.f32 %v1612, 1.442695
    %v1616 = vpow.pop %v1615
    %v1617 = vsel %vm183, %v1614, 0.0
    %1618 = vadd.xlane.f32.xlu0 %v1617
    %v1619 = vpop.xlane.xlu0 %1618
    %v1620 = vsel %vm183, %v1616, 0.0
    %1621 = vadd.xlane.f32.xlu0 %v1620
    %v1622 = vpop.xlane.xlu0 %1621
    %v1623 = vrcp.pop %v1619
    %v1624 = vrcp.pop %v1622
    %v1625 = vmul.f32 %v1614, %v1623
    %v1626 = vmul.f32 %v1616, %v1624
    %1627 = vrot.lane.b32.xlu0 %v1443, 40
    %v1628 = vpop.permute.xlu0 %1627
    %v1631 = vsel %vm183, %v1625, 0
    %1633 = vmatprep.subr.mxu0 0.0
    %1634 = vmatpush1.msra.mxu0 %v1628
    %1635 = vmatprep.subr.mxu0 0.0
    %1636 = vmatpush1.msra.mxu0 0.0
    %1637 = vmatprep.subr.mxu0 0.0
    %1638 = vmatpush1.msra.mxu0 0.0
    %1639 = vmatprep.subr.mxu0 0.0
    %1640 = vmatpush1.msra.mxu0 0.0
    %1641 = vmatprep.subr.mxu0 0.0
    %1642 = vmatpush1.msra.mxu0 0.0
    %1643 = vmatprep.subr.mxu0 0.0
    %1644 = vmatpush1.msra.mxu0 0.0
    %1645 = vmatprep.subr.mxu0 0.0
    %1646 = vmatpush1.msra.mxu0 0.0
    %1647 = vmatprep.subr.mxu0 0.0
    %1648 = vmatpush1.msra.mxu0 0.0
    %1649 = vmatprep.subr.mxu0 0.0
    %1650 = vmatpush1.msra.mxu0 0.0
    %1651 = vmatprep.subr.mxu0 0.0
    %1652 = vmatpush1.msra.mxu0 0.0
    %1653 = vmatprep.subr.mxu0 0.0
    %1654 = vmatpush1.msra.mxu0 0.0
    %1655 = vmatprep.subr.mxu0 0.0
    %1656 = vmatpush1.msra.mxu0 0.0
    %1657 = vmatprep.subr.mxu0 0.0
    %1658 = vmatpush1.msra.mxu0 0.0
    %1659 = vmatprep.subr.mxu0 0.0
    %1660 = vmatpush1.msra.mxu0 0.0
    %1661 = vmatprep.subr.mxu0 0.0
    %1662 = vmatpush1.msra.mxu0 0.0
    %1663 = vmatprep.subr.mxu0 0.0
    %1664 = vmatpush1.msra.mxu0 0.0
    %1665 = vmatprep.subr.mxu0 0.0
    %1666 = vmatpush1.msra.mxu0 0.0
    %1667 = vmatprep.subr.mxu0 0.0
    %1668 = vmatpush1.msra.mxu0 0.0
    %1669 = vmatprep.subr.mxu0 0.0
    %1670 = vmatpush1.msra.mxu0 0.0
    %1671 = vmatprep.subr.mxu0 0.0
    %1672 = vmatpush1.msra.mxu0 0.0
    %1673 = vmatprep.subr.mxu0 0.0
    %1674 = vmatpush1.msra.mxu0 0.0
    %1675 = vmatprep.subr.mxu0 0.0
    %1676 = vmatpush1.msra.mxu0 0.0
    %1677 = vmatprep.subr.mxu0 0.0
    %1678 = vmatpush1.msra.mxu0 0.0
    %1679 = vmatprep.subr.mxu0 0.0
    %1680 = vmatpush1.msra.mxu0 0.0
    %1681 = vmatprep.subr.mxu0 0.0
    %1682 = vmatpush1.msra.mxu0 0.0
    %1683 = vmatprep.subr.mxu0 0.0
    %1684 = vmatpush1.msra.mxu0 0.0
    %1685 = vmatprep.subr.mxu0 0.0
    %1686 = vmatpush1.msra.mxu0 0.0
    %1687 = vmatprep.subr.mxu0 0.0
    %1688 = vmatpush1.msra.mxu0 0.0
    %1689 = vmatprep.subr.mxu0 0.0
    %1690 = vmatpush1.msra.mxu0 0.0
    %1691 = vmatprep.subr.mxu0 0.0
    %1692 = vmatpush1.msra.mxu0 0.0
    %1693 = vmatprep.subr.mxu0 0.0
    %1694 = vmatpush1.msra.mxu0 0.0
    %1695 = vmatprep.subr.mxu0 0.0
    %1696 = vmatpush1.msra.mxu0 0.0
    %1697 = vmatprep.mubr.f32.mxu0 0.0
    %1698 = vmatmul.mubr.f32.gmra.mrb[0].mxu0 %v1631
    %v1699 = vpop.f32.mrb[0].mxu0
    %v1700 = vadd.f32 0.0, %v1699
    %v1701 = vpop.f32.mrb[0].mxu0
    %1702 = vdwg.mxu0
    %1703 = vrot.lane.b32.xlu0 %v1444, 40
    %v1704 = vpop.permute.xlu0 %1703
    %v1707 = vsel %vm183, %v1626, 0
    %1709 = vmatprep.subr.mxu0 0.0
    %1710 = vmatpush1.msra.mxu0 %v1704
    %1711 = vmatprep.subr.mxu0 0.0
    %1712 = vmatpush1.msra.mxu0 0.0
    %1713 = vmatprep.subr.mxu0 0.0
    %1714 = vmatpush1.msra.mxu0 0.0
    %1715 = vmatprep.subr.mxu0 0.0
    %1716 = vmatpush1.msra.mxu0 0.0
    %1717 = vmatprep.subr.mxu0 0.0
    %1718 = vmatpush1.msra.mxu0 0.0
    %1719 = vmatprep.subr.mxu0 0.0
    %1720 = vmatpush1.msra.mxu0 0.0
    %1721 = vmatprep.subr.mxu0 0.0
    %1722 = vmatpush1.msra.mxu0 0.0
    %1723 = vmatprep.subr.mxu0 0.0
    %1724 = vmatpush1.msra.mxu0 0.0
    %1725 = vmatprep.subr.mxu0 0.0
    %1726 = vmatpush1.msra.mxu0 0.0
    %1727 = vmatprep.subr.mxu0 0.0
    %1728 = vmatpush1.msra.mxu0 0.0
    %1729 = vmatprep.subr.mxu0 0.0
    %1730 = vmatpush1.msra.mxu0 0.0
    %1731 = vmatprep.subr.mxu0 0.0
    %1732 = vmatpush1.msra.mxu0 0.0
    %1733 = vmatprep.subr.mxu0 0.0
    %1734 = vmatpush1.msra.mxu0 0.0
    %1735 = vmatprep.subr.mxu0 0.0
    %1736 = vmatpush1.msra.mxu0 0.0
    %1737 = vmatprep.subr.mxu0 0.0
    %1738 = vmatpush1.msra.mxu0 0.0
    %1739 = vmatprep.subr.mxu0 0.0
    %1740 = vmatpush1.msra.mxu0 0.0
    %1741 = vmatprep.subr.mxu0 0.0
    %1742 = vmatpush1.msra.mxu0 0.0
    %1743 = vmatprep.subr.mxu0 0.0
    %1744 = vmatpush1.msra.mxu0 0.0
    %1745 = vmatprep.subr.mxu0 0.0
    %1746 = vmatpush1.msra.mxu0 0.0
    %1747 = vmatprep.subr.mxu0 0.0
    %1748 = vmatpush1.msra.mxu0 0.0
    %1749 = vmatprep.subr.mxu0 0.0
    %1750 = vmatpush1.msra.mxu0 0.0
    %1751 = vmatprep.subr.mxu0 0.0
    %1752 = vmatpush1.msra.mxu0 0.0
    %1753 = vmatprep.subr.mxu0 0.0
    %1754 = vmatpush1.msra.mxu0 0.0
    %1755 = vmatprep.subr.mxu0 0.0
    %1756 = vmatpush1.msra.mxu0 0.0
    %1757 = vmatprep.subr.mxu0 0.0
    %1758 = vmatpush1.msra.mxu0 0.0
    %1759 = vmatprep.subr.mxu0 0.0
    %1760 = vmatpush1.msra.mxu0 0.0
    %1761 = vmatprep.subr.mxu0 0.0
    %1762 = vmatpush1.msra.mxu0 0.0
    %1763 = vmatprep.subr.mxu0 0.0
    %1764 = vmatpush1.msra.mxu0 0.0
    %1765 = vmatprep.subr.mxu0 0.0
    %1766 = vmatpush1.msra.mxu0 0.0
    %1767 = vmatprep.subr.mxu0 0.0
    %1768 = vmatpush1.msra.mxu0 0.0
    %1769 = vmatprep.subr.mxu0 0.0
    %1770 = vmatpush1.msra.mxu0 0.0
    %1771 = vmatprep.subr.mxu0 0.0
    %1772 = vmatpush1.msra.mxu0 0.0
    %1773 = vmatprep.mubr.f32.mxu0 0.0
    %1774 = vmatmul.mubr.f32.gmra.mrb[0].mxu0 %v1707
    %v1775 = vpop.f32.mrb[0].mxu0
    %v1776 = vadd.f32 0.0, %v1775
    %v1777 = vpop.f32.mrb[0].mxu0
    %1778 = vdwg.mxu0
    %v1779 = vld [vmem:[#allocation9 + $0x18] sm:$0xff]
    %v1781 = vsel %vm183, %v1700, 0
    %v1784 = vsel %vm183, %v1776, 0
    %1786 = vmatprep.subr.mxu0 0.0
    %1787 = vmatpush1.msra.mxu0 %v1779
    %1788 = vmatprep.subr.mxu0 0.0
    %1789 = vmatpush1.msra.mxu0 0.0
    %1790 = vmatprep.subr.mxu0 0.0
    %1791 = vmatpush1.msra.mxu0 0.0
    %1792 = vmatprep.subr.mxu0 0.0
    %1793 = vmatpush1.msra.mxu0 0.0
    %1794 = vmatprep.subr.mxu0 0.0
    %1795 = vmatpush1.msra.mxu0 0.0
    %1796 = vmatprep.subr.mxu0 0.0
    %1797 = vmatpush1.msra.mxu0 0.0
    %1798 = vmatprep.subr.mxu0 0.0
    %1799 = vmatpush1.msra.mxu0 0.0
    %1800 = vmatprep.subr.mxu0 0.0
    %1801 = vmatpush1.msra.mxu0 0.0
    %1802 = vmatprep.subr.mxu0 0.0
    %1803 = vmatpush1.msra.mxu0 0.0
    %1804 = vmatprep.subr.mxu0 0.0
    %1805 = vmatpush1.msra.mxu0 0.0
    %1806 = vmatprep.subr.mxu0 0.0
    %1807 = vmatpush1.msra.mxu0 0.0
    %1808 = vmatprep.subr.mxu0 0.0
    %1809 = vmatpush1.msra.mxu0 0.0
    %1810 = vmatprep.subr.mxu0 0.0
    %1811 = vmatpush1.msra.mxu0 0.0
    %1812 = vmatprep.subr.mxu0 0.0
    %1813 = vmatpush1.msra.mxu0 0.0
    %1814 = vmatprep.subr.mxu0 0.0
    %1815 = vmatpush1.msra.mxu0 0.0
    %1816 = vmatprep.subr.mxu0 0.0
    %1817 = vmatpush1.msra.mxu0 0.0
    %1818 = vmatprep.subr.mxu0 0.0
    %1819 = vmatpush1.msra.mxu0 0.0
    %1820 = vmatprep.subr.mxu0 0.0
    %1821 = vmatpush1.msra.mxu0 0.0
    %1822 = vmatprep.subr.mxu0 0.0
    %1823 = vmatpush1.msra.mxu0 0.0
    %1824 = vmatprep.subr.mxu0 0.0
    %1825 = vmatpush1.msra.mxu0 0.0
    %1826 = vmatprep.subr.mxu0 0.0
    %1827 = vmatpush1.msra.mxu0 0.0
    %1828 = vmatprep.subr.mxu0 0.0
    %1829 = vmatpush1.msra.mxu0 0.0
    %1830 = vmatprep.subr.mxu0 0.0
    %1831 = vmatpush1.msra.mxu0 0.0
    %1832 = vmatprep.subr.mxu0 0.0
    %1833 = vmatpush1.msra.mxu0 0.0
    %1834 = vmatprep.subr.mxu0 0.0
    %1835 = vmatpush1.msra.mxu0 0.0
    %1836 = vmatprep.subr.mxu0 0.0
    %1837 = vmatpush1.msra.mxu0 0.0
    %1838 = vmatprep.subr.mxu0 0.0
    %1839 = vmatpush1.msra.mxu0 0.0
    %1840 = vmatprep.subr.mxu0 0.0
    %1841 = vmatpush1.msra.mxu0 0.0
    %1842 = vmatprep.subr.mxu0 0.0
    %1843 = vmatpush1.msra.mxu0 0.0
    %1844 = vmatprep.subr.mxu0 0.0
    %1845 = vmatpush1.msra.mxu0 0.0
    %1846 = vmatprep.subr.mxu0 0.0
    %1847 = vmatpush1.msra.mxu0 0.0
    %1848 = vmatprep.subr.mxu0 0.0
    %1849 = vmatpush1.msra.mxu0 0.0
    %1850 = vmatprep.mubr.f32.mxu0 0.0
    %1851 = vmatmul.mubr.f32.gmra.mrb[0].mxu0 %v1781
    %v1852 = vpop.f32.mrb[0].mxu0
    %v1853 = vadd.f32 0.0, %v1852
    %v1854 = vpop.f32.mrb[0].mxu0
    %1855 = vmatprep.mubr.f32.mxu0 0.0
    %1856 = vmatmul.mubr.f32.gmra.mrb[0].mxu0 %v1784
    %v1857 = vpop.f32.mrb[0].mxu0
    %v1858 = vadd.f32 0.0, %v1857
    %v1859 = vpop.f32.mrb[0].mxu0
    %1860 = vdwg.mxu0
    %v1861 = vld [vmem:[#allocation3] sm:$0xff]
    %v1862 = vld [vmem:[#allocation3 + $0x8] sm:$0xff]
    %v1863 = vadd.f32 %v1861, %v1853
    %v1864 = vadd.f32 %v1862, %v1858
    %1865 = vst.msk [vmem:[#allocation3] sm:$0xff] %vm93, %v1863
    %1866 = vst.msk [vmem:[#allocation3 + $0x8] sm:$0xff] %vm93, %v1864
    %v1867 = vld [vmem:[#allocation3] sm:$0xff]
    %v1868 = vld [vmem:[#allocation3 + $0x8] sm:$0xff]
    %v1869 = vadd.f32 %v80, %v1867
    %v1870 = vadd.f32 %v81, %v1868
    %v1871 = vld [vmem:[%s4] sm:$0x1]
    %v1873 = vlaneseq
    %v1874 = vshrl.u32 %v1873, 7
    %v1875 = vsub.s32 0, %v1874
    %v1876 = vrot.slane %v1871, %v1875
    %v1878 = vadd.f32 %v1869, %v1876
    %v1879 = vadd.f32 %v1870, %v1876
    %v1880 = vsel %vm93, %v1878, 0.0
    %1881 = vadd.xlane.f32.xlu0 %v1880
    %v1882 = vpop.xlane.xlu0 %1881
    %v1883 = vsel %vm93, %v1879, 0.0
    %1884 = vadd.xlane.f32.xlu0 %v1883
    %v1885 = vpop.xlane.xlu0 %1884
    %v1886 = vrcp.pop 32.0
    %v1887 = vmul.f32 %v1882, %v1886
    %v1888 = vmul.f32 %v1885, %v1886
    %v1889 = vsub.f32 %v1878, %v1887
    %v1890 = vsub.f32 %v1879, %v1888
    %v1891 = vmul.f32 %v1889, %v1889
    %v1892 = vmul.f32 %v1890, %v1890
    %v1893 = vsel %vm93, %v1891, 0.0
    %1894 = vadd.xlane.f32.xlu0 %v1893
    %v1895 = vpop.xlane.xlu0 %1894
    %v1896 = vsel %vm93, %v1892, 0.0
    %1897 = vadd.xlane.f32.xlu0 %v1896
    %v1898 = vpop.xlane.xlu0 %1897
    %v1899 = vmul.f32 %v1895, %v1886
    %v1900 = vmul.f32 %v1898, %v1886
    %v1901 = vadd.f32 %v1899, 1e-05
    %v1902 = vadd.f32 %v1900, 1e-05
    %v1903 = vrsqrt.pop %v1901
    %v1904 = vrsqrt.pop %v1902
    %v1905 = vmul.f32 %v1889, %v1903
    %v1906 = vmul.f32 %v1890, %v1904
    %v1907 = vld [vmem:[%s5] sm:$0x1]
    %v1909 = vlaneseq
    %v1910 = vshrl.u32 %v1909, 7
    %v1911 = vsub.s32 0, %v1910
    %v1912 = vrot.slane %v1907, %v1911
    %v1914 = vmul.f32 %v1905, %v1912
    %v1915 = vmul.f32 %v1906, %v1912
    %v1916 = vld [vmem:[#allocation10] sm:$0x1]
    %v1918 = vlaneseq
    %v1919 = vshrl.u32 %v1918, 7
    %v1920 = vsub.s32 0, %v1919
    %v1921 = vrot.slane %v1916, %v1920
    %v1923 = vadd.f32 %v1914, %v1921
    %v1924 = vadd.f32 %v1915, %v1921
    %1925 = vst.msk [vmem:[#allocation12] sm:$0xff] %vm93, %v1923
    %1926 = vst.msk [vmem:[#allocation12 + $0x8] sm:$0xff] %vm93, %v1924
    // Predicated region
    $region46: #{sa_forward.1} parent=1 // pred_check
      _
    $region47: #{sa_forward.1} parent=1 // pred_check_branch
      %1928 = sbr.rel (0) target = $region49
    $region48: #{sa_forward.1} parent=1 // pred_region
      %s1930 = ssub.s32 256, 256
      %1931 = vsyncadd [#allocation6], %s1930
      %s1932 = sshll.u32 [#allocation12], 4
      %s1933 = int_to_ptr.vmem [resolvable:$true] %s1932
      %1938 = dma.vmem_to_hbm [thread:$0]  %s1933, 256, %s7, [#allocation6], 128, 128, 8
    $region49: #{sa_forward.1} parent=1 // pred_fallthru
      _
    // Predicated region
    $region50: #{sa_forward.1} parent=1 // pred_check
      _
    $region51: #{sa_forward.1} parent=1 // pred_check_branch
      %1940 = sbr.rel (0) target = $region53
    $region52: #{sa_forward.1} parent=1 // pred_region
      %1941 = dma.done [#allocation6], 256
    $region53: #{sa_forward.1} parent=1 // pred_fallthru
      _
    %1942 = vsyncpa [#allocation5], 1
    %1943 = vsyncpa [#allocation8], 1
    %1944 = vsyncpa [#allocation11], 1
    %1945 = vsyncpa [#allocation6], 1

</llo_original>
